<compile_context>
chip_gen: v7x
topology: tpu7x:2x2x1
jax: 0.10.0
libtpu: 0.0.40
codegen_flags: <defaults>
</compile_context>

<pallas_src>
import functools

import numpy as np
import jax
import jax.numpy as jnp
from jax.experimental import pallas as pl
from jax.experimental.pallas import tpu as pltpu

LANES = 128


# ------------------------------------------------------------------ kernel ---

def bottomup_kernel(towers_ref, agg_ref,
                    w1s_ref, w1t_ref, b1_ref, w2_ref, b2_ref, w3_ref, b3_ref,
                    out_ref, *, K, H, shared, compute_dtype):
    tm = out_ref.shape[0]

    def params(kx):
        if shared:
            return (w1s_ref[...], w1t_ref[...], b1_ref[...],
                    w2_ref[...], b2_ref[...], w3_ref[...], b3_ref[...])
        return (w1s_ref[kx], w1t_ref[kx], b1_ref[kx],
                w2_ref[kx], b2_ref[kx], w3_ref[kx], b3_ref[kx])

    if shared:
        shared_params = params(0)   # hoist weight/bias loads out of the K loop

    # bottom_summary = aggregate.expand(N, n_hidden)
    summary = jnp.broadcast_to(agg_ref[...], (tm, H)).astype(jnp.float32)
    prod = jnp.ones((tm, 1), dtype=jnp.float32)

    for kx in range(K):   # sequential recurrence over K, statically unrolled
        w1s, w1t, b1, w2, b2, w3, b3 = shared_params if shared else params(kx)
        tower_k = towers_ref[kx].astype(compute_dtype)                # (tm, n_in)

        # fused layer 1: columns [O-half | M-half]; x@W1 == s@W1[:H] + t@W1[H:]
        x1 = jnp.dot(summary.astype(compute_dtype), w1s,
                     preferred_element_type=jnp.float32)
        x1 = x1 + jnp.dot(tower_k, w1t, preferred_element_type=jnp.float32)
        a1 = jnp.maximum(x1 + b1, 0.0)                                # (tm, 2H)

        # fused layer 2 (block-diagonal weights)
        x2 = jnp.dot(a1.astype(compute_dtype), w2,
                     preferred_element_type=jnp.float32)
        a2 = jnp.maximum(x2 + b2, 0.0)                                # (tm, 2H)

        # fused layer 3: cols [0:H] -> new summary (M path), col H -> logit (O path)
        x3 = jnp.dot(a2.astype(compute_dtype), w3,
                     preferred_element_type=jnp.float32) + b3         # (tm, H+1)

        summary = jnp.maximum(x3[:, :H], 0.0)
        pred = jax.nn.sigmoid(x3[:, H:H + 1])                         # (tm, 1)
        prod = prod * pred                                            # preds.prod(dim=1)

    # Lane-dense store (unmasked vst); column 0 holds the product.
    out_ref[...] = jnp.broadcast_to(prod, out_ref.shape)


# ---------------------------------------------------------------- wrapper ---

def _fuse_block(M_block, O_block, H):
    """Pack one block's M (summary) and O (prediction) MLPs into fused slabs."""
    (mw1, mb1), (mw2, mb2), (mw3, mb3) = M_block
    (ow1, ob1), (ow2, ob2), (ow3, ob3) = O_block
    two_h = 2 * H
    # layer 1: split into summary rows / tower rows; O-half then M-half columns
    w1s = jnp.concatenate([ow1[:H], mw1[:H]], axis=1)           # (H, 2H)
    w1t = jnp.concatenate([ow1[H:], mw1[H:]], axis=1)           # (n_in, 2H)
    b1 = jnp.concatenate([ob1, mb1])[None, :]                   # (1, 2H)
    # layer 2: block diagonal
    w2 = jnp.zeros((two_h, two_h), jnp.float32)
    w2 = w2.at[:H, :H].set(ow2).at[H:, H:].set(mw2)             # (2H, 2H)
    b2 = jnp.concatenate([ob2, mb2])[None, :]                   # (1, 2H)
    # layer 3: cols [0:H] = new summary (from M half), col H = logit (from O half)
    w3 = jnp.zeros((two_h, H + 1), jnp.float32)
    w3 = w3.at[H:, :H].set(mw3).at[:H, H:].set(ow3)             # (2H, H+1)
    b3 = jnp.concatenate([mb3, ob3])[None, :]                   # (1, H+1)
    return w1s, w1t, b1, w2, b2, w3, b3


def bottomup_forward(towers, aggregate, M_params, O_params, *,
                     tm=256, use_bf16=True):
    """towers: (N, K, n_in) f32; aggregate: (1, H) f32.
    M_params / O_params: length-K lists of [(W, b)]*3 with W stored as (in, out)."""
    N, K, n_in = towers.shape
    H = aggregate.shape[1]
    wdtype = jnp.bfloat16 if use_bf16 else jnp.float32

    # Shared weights (the PyTorch default) are passed once, un-stacked.
    shared = all((M_params[k] is M_params[0]) and (O_params[k] is O_params[0])
                 for k in range(K))
    if shared:
        w1s, w1t, b1, w2, b2, w3, b3 = _fuse_block(M_params[0], O_params[0], H)
    else:
        blocks = [_fuse_block(M_params[k], O_params[k], H) for k in range(K)]
        w1s, w1t, b1, w2, b2, w3, b3 = (jnp.stack(p) for p in zip(*blocks))
    w1s, w1t, w2, w3 = (w.astype(wdtype) for w in (w1s, w1t, w2, w3))

    # (K, N, n_in): per-block slice becomes a free leading-axis index.
    towers_t = jnp.transpose(towers, (1, 0, 2)).astype(wdtype)

    # Tile the batch dim; pad N to a multiple of the tile (padded rows are
    # independent garbage and get sliced off).
    n_pad = ((N + 7) // 8) * 8
    tm_eff = min(tm, n_pad)
    n_pad = pl.cdiv(n_pad, tm_eff) * tm_eff
    if n_pad != N:
        towers_t = jnp.pad(towers_t, ((0, 0), (0, n_pad - N), (0, 0)))

    weight_args = (w1s, w1t, b1, w2, b2, w3, b3)

    def const_spec(shape):
        # whole-array, VMEM-resident across all grid steps
        return pl.BlockSpec(shape, lambda i: (0,) * len(shape))

    kernel = functools.partial(bottomup_kernel, K=K, H=H, shared=shared,
                               compute_dtype=wdtype)

    out = pl.pallas_call(
        kernel,
        out_shape=jax.ShapeDtypeStruct((n_pad, LANES), jnp.float32),
        grid=(n_pad // tm_eff,),
        in_specs=[pl.BlockSpec((K, tm_eff, n_in), lambda i: (0, i, 0)),
                  const_spec(aggregate.shape)]
                 + [const_spec(a.shape) for a in weight_args],
        out_specs=pl.BlockSpec((tm_eff, LANES), lambda i: (i, 0)),
        compiler_params=pltpu.CompilerParams(
            dimension_semantics=("parallel",),
            vmem_limit_bytes=32 * 1024 * 1024),
    )(towers_t, aggregate.astype(jnp.float32), *weight_args)

    return out[:N, :1]


# -------------------------------------------------------- parameter setup ---

def init_linear(key, n_in, n_out):
    """Deterministic torch-nn.Linear-style init; W stored as (in, out)."""
    kw, kb = jax.random.split(key)
    bound = 1.0 / np.sqrt(n_in)
    W = jax.random.uniform(kw, (n_in, n_out), jnp.float32, -bound, bound)
    b = jax.random.uniform(kb, (n_out,), jnp.float32, -bound, bound)
    return W, b


def build_M(key, n_in, n_hidden):
    k1, k2, k3 = jax.random.split(key, 3)
    return [init_linear(k1, n_in + n_hidden, n_hidden),
            init_linear(k2, n_hidden, n_hidden),
            init_linear(k3, n_hidden, n_hidden)]


def build_O(key, n_in, n_hidden):
    k1, k2, k3 = jax.random.split(key, 3)
    return [init_linear(k1, n_in + n_hidden, n_hidden),
            init_linear(k2, n_hidden, n_hidden),
            init_linear(k3, n_hidden, 1)]


# -------------------------------------------------------- pure-JAX reference

def reference_forward(towers, aggregate, M_params, O_params):
    N, K, _ = towers.shape
    H = aggregate.shape[1]
    summary = jnp.broadcast_to(aggregate, (N, H))
    preds = []
    for kx in range(K):
        x = jnp.concatenate([summary, towers[:, kx, :]], axis=1)
        (w1, b1), (w2, b2), (w3, b3) = O_params[kx]
        h = jax.nn.relu(x @ w1 + b1)
        h = jax.nn.relu(h @ w2 + b2)
        preds.append(jax.nn.sigmoid(h @ w3 + b3))
        (w1, b1), (w2, b2), (w3, b3) = M_params[kx]
        m = jax.nn.relu(x @ w1 + b1)
        m = jax.nn.relu(m @ w2 + b2)
        summary = jax.nn.relu(m @ w3 + b3)
    preds = jnp.concatenate(preds, axis=1)
    return jnp.prod(preds, axis=1, keepdims=True)


# ----------------------------------------------------------------- driver ---

if __name__ == "__main__":
    n_in, n_hidden = 4, 32
    N, K = 256, 4
    max_blocks = 5

    key = jax.random.PRNGKey(0)
    k_tow, k_M, k_O = jax.random.split(key, 3)

    towers = jax.random.normal(k_tow, (N, K, n_in), jnp.float32)
    aggregate = jnp.zeros((1, n_hidden), jnp.float32)  # nn.Parameter(torch.zeros(1, H))

    # --- share_weights=True (PyTorch default): one weight set reused K times ---
    M_shared = build_M(k_M, n_in, n_hidden)
    O_shared = build_O(k_O, n_in, n_hidden)
    M_params = [M_shared] * K
    O_params = [O_shared] * K

    ref = reference_forward(towers, aggregate, M_params, O_params)

    # f32 matmul path: exact vs reference
    out_f32 = jax.block_until_ready(
        bottomup_forward(towers, aggregate, M_params, O_params,
                         tm=128, use_bf16=False))
    np.testing.assert_allclose(np.asarray(out_f32), np.asarray(ref),
                               rtol=1e-5, atol=1e-5)
    assert out_f32.shape == (N, 1)

    # bf16 matmul inputs, f32 accumulation: looser tolerance
    out_bf16 = jax.block_until_ready(
        bottomup_forward(towers, aggregate, M_params, O_params,
                         tm=128, use_bf16=True))
    np.testing.assert_allclose(np.asarray(out_bf16), np.asarray(ref),
                               rtol=5e-2, atol=5e-3)

    # --- share_weights=False: per-block weights, K-stacked path -----------------
    M_keys = jax.random.split(k_M, max_blocks)
    O_keys = jax.random.split(k_O, max_blocks)
    M_params_u = [build_M(M_keys[k], n_in, n_hidden) for k in range(K)]
    O_params_u = [build_O(O_keys[k], n_in, n_hidden) for k in range(K)]
    ref_u = reference_forward(towers, aggregate, M_params_u, O_params_u)
    out_u = jax.block_until_ready(
        bottomup_forward(towers, aggregate, M_params_u, O_params_u,
                         tm=128, use_bf16=False))
    np.testing.assert_allclose(np.asarray(out_u), np.asarray(ref_u),
                               rtol=1e-5, atol=1e-5)

    print("KERNEL_OK")
</pallas_src>

<mosaic_0001>
module attributes {stable_mosaic.version = 11 : i64} {
  func.func @bottomup_kernel(%arg0: i32, %arg1: memref<4x128x4xf32, #tpu.memory_space<vmem>>, %arg2: memref<1x32xf32, #tpu.memory_space<vmem>>, %arg3: memref<32x64xf32, #tpu.memory_space<vmem>>, %arg4: memref<4x64xf32, #tpu.memory_space<vmem>>, %arg5: memref<1x64xf32, #tpu.memory_space<vmem>>, %arg6: memref<64x64xf32, #tpu.memory_space<vmem>>, %arg7: memref<1x64xf32, #tpu.memory_space<vmem>>, %arg8: memref<64x33xf32, #tpu.memory_space<vmem>>, %arg9: memref<1x33xf32, #tpu.memory_space<vmem>>, %arg10: memref<128x128xf32, #tpu.memory_space<vmem>>) attributes {dimension_semantics = [#tpu.dimension_semantics<parallel>], iteration_bounds = array<i64: 2>, scalar_prefetch = 0 : i64, scratch_operands = 0 : i64, tpu.core_type = #tpu.core_type<tc>, window_params = [{transform_indices = @transform_0, window_bounds = array<i64: 4, 128, 4>}, {pipeline_mode = #tpu.pipeline_mode<synchronous>, transform_indices = @transform_1, window_bounds = array<i64: 1, 32>}, {pipeline_mode = #tpu.pipeline_mode<synchronous>, transform_indices = @transform_2, window_bounds = array<i64: 32, 64>}, {pipeline_mode = #tpu.pipeline_mode<synchronous>, transform_indices = @transform_3, window_bounds = array<i64: 4, 64>}, {pipeline_mode = #tpu.pipeline_mode<synchronous>, transform_indices = @transform_4, window_bounds = array<i64: 1, 64>}, {pipeline_mode = #tpu.pipeline_mode<synchronous>, transform_indices = @transform_5, window_bounds = array<i64: 64, 64>}, {pipeline_mode = #tpu.pipeline_mode<synchronous>, transform_indices = @transform_6, window_bounds = array<i64: 1, 64>}, {pipeline_mode = #tpu.pipeline_mode<synchronous>, transform_indices = @transform_7, window_bounds = array<i64: 64, 33>}, {pipeline_mode = #tpu.pipeline_mode<synchronous>, transform_indices = @transform_8, window_bounds = array<i64: 1, 33>}, {transform_indices = @transform_9, window_bounds = array<i64: 128, 128>}]} {
    %c0 = arith.constant 0 : index
    %c0_0 = arith.constant 0 : index
    %0 = vector.load %arg3[%c0, %c0_0] : memref<32x64xf32, #tpu.memory_space<vmem>>, vector<32x64xf32>
    %c0_1 = arith.constant 0 : index
    %c0_2 = arith.constant 0 : index
    %1 = vector.load %arg4[%c0_1, %c0_2] : memref<4x64xf32, #tpu.memory_space<vmem>>, vector<4x64xf32>
    %c0_3 = arith.constant 0 : index
    %c0_4 = arith.constant 0 : index
    %2 = vector.load %arg5[%c0_3, %c0_4] : memref<1x64xf32, #tpu.memory_space<vmem>>, vector<1x64xf32>
    %c0_5 = arith.constant 0 : index
    %c0_6 = arith.constant 0 : index
    %3 = vector.load %arg6[%c0_5, %c0_6] : memref<64x64xf32, #tpu.memory_space<vmem>>, vector<64x64xf32>
    %c0_7 = arith.constant 0 : index
    %c0_8 = arith.constant 0 : index
    %4 = vector.load %arg7[%c0_7, %c0_8] : memref<1x64xf32, #tpu.memory_space<vmem>>, vector<1x64xf32>
    %c0_9 = arith.constant 0 : index
    %c0_10 = arith.constant 0 : index
    %5 = vector.load %arg8[%c0_9, %c0_10] : memref<64x33xf32, #tpu.memory_space<vmem>>, vector<64x33xf32>
    %c0_11 = arith.constant 0 : index
    %c0_12 = arith.constant 0 : index
    %6 = vector.load %arg9[%c0_11, %c0_12] : memref<1x33xf32, #tpu.memory_space<vmem>>, vector<1x33xf32>
    %c0_13 = arith.constant 0 : index
    %c0_14 = arith.constant 0 : index
    %7 = vector.load %arg2[%c0_13, %c0_14] : memref<1x32xf32, #tpu.memory_space<vmem>>, vector<1x32xf32>
    %8 = vector.shape_cast %7 : vector<1x32xf32> to vector<1x32xf32>
    %9 = vector.broadcast %8 : vector<1x32xf32> to vector<128x32xf32>
    %cst = arith.constant 1.000000e+00 : f32
    %10 = vector.broadcast %cst : f32 to vector<128x1xf32>
    %c0_15 = arith.constant 0 : index
    %c0_16 = arith.constant 0 : index
    %c0_17 = arith.constant 0 : index
    %11 = vector.load %arg1[%c0_15, %c0_16, %c0_17] : memref<4x128x4xf32, #tpu.memory_space<vmem>>, vector<1x128x4xf32>
    %12 = vector.shape_cast %11 : vector<1x128x4xf32> to vector<128x4xf32>
    %cst_18 = arith.constant dense<0.000000e+00> : vector<128x64xf32>
    %13 = tpu.matmul %9, %0, %cst_18 {dimension_numbers = #tpu.dot_dimension_numbers<[1], [0], [0], [1], [0, 0, 1, 1], [], []>} : vector<128x32xf32>, vector<32x64xf32>, vector<128x64xf32> -> vector<128x64xf32>
    %cst_19 = arith.constant dense<0.000000e+00> : vector<128x64xf32>
    %14 = tpu.matmul %12, %1, %cst_19 {dimension_numbers = #tpu.dot_dimension_numbers<[1], [0], [0], [1], [0, 0, 1, 1], [], []>} : vector<128x4xf32>, vector<4x64xf32>, vector<128x64xf32> -> vector<128x64xf32>
    %15 = arith.addf %13, %14 : vector<128x64xf32>
    %16 = vector.broadcast %2 : vector<1x64xf32> to vector<128x64xf32>
    %17 = arith.addf %15, %16 : vector<128x64xf32>
    %cst_20 = arith.constant 0.000000e+00 : f32
    %18 = vector.broadcast %cst_20 : f32 to vector<128x64xf32>
    %19 = arith.maximumf %17, %18 : vector<128x64xf32>
    %cst_21 = arith.constant dense<0.000000e+00> : vector<128x64xf32>
    %20 = tpu.matmul %19, %3, %cst_21 {dimension_numbers = #tpu.dot_dimension_numbers<[1], [0], [0], [1], [0, 0, 1, 1], [], []>} : vector<128x64xf32>, vector<64x64xf32>, vector<128x64xf32> -> vector<128x64xf32>
    %21 = vector.broadcast %4 : vector<1x64xf32> to vector<128x64xf32>
    %22 = arith.addf %20, %21 : vector<128x64xf32>
    %cst_22 = arith.constant 0.000000e+00 : f32
    %23 = vector.broadcast %cst_22 : f32 to vector<128x64xf32>
    %24 = arith.maximumf %22, %23 : vector<128x64xf32>
    %cst_23 = arith.constant dense<0.000000e+00> : vector<128x33xf32>
    %25 = tpu.matmul %24, %5, %cst_23 {dimension_numbers = #tpu.dot_dimension_numbers<[1], [0], [0], [1], [0, 0, 1, 1], [], []>} : vector<128x64xf32>, vector<64x33xf32>, vector<128x33xf32> -> vector<128x33xf32>
    %26 = vector.broadcast %6 : vector<1x33xf32> to vector<128x33xf32>
    %27 = arith.addf %25, %26 : vector<128x33xf32>
    %28 = vector.extract_strided_slice %27 {offsets = [0, 0], sizes = [128, 32], strides = [1, 1]} : vector<128x33xf32> to vector<128x32xf32>
    %cst_24 = arith.constant 0.000000e+00 : f32
    %29 = vector.broadcast %cst_24 : f32 to vector<128x32xf32>
    %30 = arith.maximumf %28, %29 : vector<128x32xf32>
    %31 = vector.extract_strided_slice %27 {offsets = [0, 32], sizes = [128, 1], strides = [1, 1]} : vector<128x33xf32> to vector<128x1xf32>
    %32 = arith.negf %31 : vector<128x1xf32>
    %33 = math.exp %32 : vector<128x1xf32>
    %cst_25 = arith.constant 1.000000e+00 : f32
    %34 = vector.broadcast %cst_25 : f32 to vector<128x1xf32>
    %35 = arith.addf %34, %33 : vector<128x1xf32>
    %36 = arith.divf %34, %35 : vector<128x1xf32>
    %37 = arith.mulf %10, %36 : vector<128x1xf32>
    %c1 = arith.constant 1 : index
    %c0_26 = arith.constant 0 : index
    %c0_27 = arith.constant 0 : index
    %38 = vector.load %arg1[%c1, %c0_26, %c0_27] : memref<4x128x4xf32, #tpu.memory_space<vmem>>, vector<1x128x4xf32>
    %39 = vector.shape_cast %38 : vector<1x128x4xf32> to vector<128x4xf32>
    %cst_28 = arith.constant dense<0.000000e+00> : vector<128x64xf32>
    %40 = tpu.matmul %30, %0, %cst_28 {dimension_numbers = #tpu.dot_dimension_numbers<[1], [0], [0], [1], [0, 0, 1, 1], [], []>} : vector<128x32xf32>, vector<32x64xf32>, vector<128x64xf32> -> vector<128x64xf32>
    %cst_29 = arith.constant dense<0.000000e+00> : vector<128x64xf32>
    %41 = tpu.matmul %39, %1, %cst_29 {dimension_numbers = #tpu.dot_dimension_numbers<[1], [0], [0], [1], [0, 0, 1, 1], [], []>} : vector<128x4xf32>, vector<4x64xf32>, vector<128x64xf32> -> vector<128x64xf32>
    %42 = arith.addf %40, %41 : vector<128x64xf32>
    %43 = vector.broadcast %2 : vector<1x64xf32> to vector<128x64xf32>
    %44 = arith.addf %42, %43 : vector<128x64xf32>
    %cst_30 = arith.constant 0.000000e+00 : f32
    %45 = vector.broadcast %cst_30 : f32 to vector<128x64xf32>
    %46 = arith.maximumf %44, %45 : vector<128x64xf32>
    %cst_31 = arith.constant dense<0.000000e+00> : vector<128x64xf32>
    %47 = tpu.matmul %46, %3, %cst_31 {dimension_numbers = #tpu.dot_dimension_numbers<[1], [0], [0], [1], [0, 0, 1, 1], [], []>} : vector<128x64xf32>, vector<64x64xf32>, vector<128x64xf32> -> vector<128x64xf32>
    %48 = vector.broadcast %4 : vector<1x64xf32> to vector<128x64xf32>
    %49 = arith.addf %47, %48 : vector<128x64xf32>
    %cst_32 = arith.constant 0.000000e+00 : f32
    %50 = vector.broadcast %cst_32 : f32 to vector<128x64xf32>
    %51 = arith.maximumf %49, %50 : vector<128x64xf32>
    %cst_33 = arith.constant dense<0.000000e+00> : vector<128x33xf32>
    %52 = tpu.matmul %51, %5, %cst_33 {dimension_numbers = #tpu.dot_dimension_numbers<[1], [0], [0], [1], [0, 0, 1, 1], [], []>} : vector<128x64xf32>, vector<64x33xf32>, vector<128x33xf32> -> vector<128x33xf32>
    %53 = vector.broadcast %6 : vector<1x33xf32> to vector<128x33xf32>
    %54 = arith.addf %52, %53 : vector<128x33xf32>
    %55 = vector.extract_strided_slice %54 {offsets = [0, 0], sizes = [128, 32], strides = [1, 1]} : vector<128x33xf32> to vector<128x32xf32>
    %cst_34 = arith.constant 0.000000e+00 : f32
    %56 = vector.broadcast %cst_34 : f32 to vector<128x32xf32>
    %57 = arith.maximumf %55, %56 : vector<128x32xf32>
    %58 = vector.extract_strided_slice %54 {offsets = [0, 32], sizes = [128, 1], strides = [1, 1]} : vector<128x33xf32> to vector<128x1xf32>
    %59 = arith.negf %58 : vector<128x1xf32>
    %60 = math.exp %59 : vector<128x1xf32>
    %cst_35 = arith.constant 1.000000e+00 : f32
    %61 = vector.broadcast %cst_35 : f32 to vector<128x1xf32>
    %62 = arith.addf %61, %60 : vector<128x1xf32>
    %63 = arith.divf %61, %62 : vector<128x1xf32>
    %64 = arith.mulf %37, %63 : vector<128x1xf32>
    %c2 = arith.constant 2 : index
    %c0_36 = arith.constant 0 : index
    %c0_37 = arith.constant 0 : index
    %65 = vector.load %arg1[%c2, %c0_36, %c0_37] : memref<4x128x4xf32, #tpu.memory_space<vmem>>, vector<1x128x4xf32>
    %66 = vector.shape_cast %65 : vector<1x128x4xf32> to vector<128x4xf32>
    %cst_38 = arith.constant dense<0.000000e+00> : vector<128x64xf32>
    %67 = tpu.matmul %57, %0, %cst_38 {dimension_numbers = #tpu.dot_dimension_numbers<[1], [0], [0], [1], [0, 0, 1, 1], [], []>} : vector<128x32xf32>, vector<32x64xf32>, vector<128x64xf32> -> vector<128x64xf32>
    %cst_39 = arith.constant dense<0.000000e+00> : vector<128x64xf32>
    %68 = tpu.matmul %66, %1, %cst_39 {dimension_numbers = #tpu.dot_dimension_numbers<[1], [0], [0], [1], [0, 0, 1, 1], [], []>} : vector<128x4xf32>, vector<4x64xf32>, vector<128x64xf32> -> vector<128x64xf32>
    %69 = arith.addf %67, %68 : vector<128x64xf32>
    %70 = vector.broadcast %2 : vector<1x64xf32> to vector<128x64xf32>
    %71 = arith.addf %69, %70 : vector<128x64xf32>
    %cst_40 = arith.constant 0.000000e+00 : f32
    %72 = vector.broadcast %cst_40 : f32 to vector<128x64xf32>
    %73 = arith.maximumf %71, %72 : vector<128x64xf32>
    %cst_41 = arith.constant dense<0.000000e+00> : vector<128x64xf32>
    %74 = tpu.matmul %73, %3, %cst_41 {dimension_numbers = #tpu.dot_dimension_numbers<[1], [0], [0], [1], [0, 0, 1, 1], [], []>} : vector<128x64xf32>, vector<64x64xf32>, vector<128x64xf32> -> vector<128x64xf32>
    %75 = vector.broadcast %4 : vector<1x64xf32> to vector<128x64xf32>
    %76 = arith.addf %74, %75 : vector<128x64xf32>
    %cst_42 = arith.constant 0.000000e+00 : f32
    %77 = vector.broadcast %cst_42 : f32 to vector<128x64xf32>
    %78 = arith.maximumf %76, %77 : vector<128x64xf32>
    %cst_43 = arith.constant dense<0.000000e+00> : vector<128x33xf32>
    %79 = tpu.matmul %78, %5, %cst_43 {dimension_numbers = #tpu.dot_dimension_numbers<[1], [0], [0], [1], [0, 0, 1, 1], [], []>} : vector<128x64xf32>, vector<64x33xf32>, vector<128x33xf32> -> vector<128x33xf32>
    %80 = vector.broadcast %6 : vector<1x33xf32> to vector<128x33xf32>
    %81 = arith.addf %79, %80 : vector<128x33xf32>
    %82 = vector.extract_strided_slice %81 {offsets = [0, 0], sizes = [128, 32], strides = [1, 1]} : vector<128x33xf32> to vector<128x32xf32>
    %cst_44 = arith.constant 0.000000e+00 : f32
    %83 = vector.broadcast %cst_44 : f32 to vector<128x32xf32>
    %84 = arith.maximumf %82, %83 : vector<128x32xf32>
    %85 = vector.extract_strided_slice %81 {offsets = [0, 32], sizes = [128, 1], strides = [1, 1]} : vector<128x33xf32> to vector<128x1xf32>
    %86 = arith.negf %85 : vector<128x1xf32>
    %87 = math.exp %86 : vector<128x1xf32>
    %cst_45 = arith.constant 1.000000e+00 : f32
    %88 = vector.broadcast %cst_45 : f32 to vector<128x1xf32>
    %89 = arith.addf %88, %87 : vector<128x1xf32>
    %90 = arith.divf %88, %89 : vector<128x1xf32>
    %91 = arith.mulf %64, %90 : vector<128x1xf32>
    %c3 = arith.constant 3 : index
    %c0_46 = arith.constant 0 : index
    %c0_47 = arith.constant 0 : index
    %92 = vector.load %arg1[%c3, %c0_46, %c0_47] : memref<4x128x4xf32, #tpu.memory_space<vmem>>, vector<1x128x4xf32>
    %93 = vector.shape_cast %92 : vector<1x128x4xf32> to vector<128x4xf32>
    %cst_48 = arith.constant dense<0.000000e+00> : vector<128x64xf32>
    %94 = tpu.matmul %84, %0, %cst_48 {dimension_numbers = #tpu.dot_dimension_numbers<[1], [0], [0], [1], [0, 0, 1, 1], [], []>} : vector<128x32xf32>, vector<32x64xf32>, vector<128x64xf32> -> vector<128x64xf32>
    %cst_49 = arith.constant dense<0.000000e+00> : vector<128x64xf32>
    %95 = tpu.matmul %93, %1, %cst_49 {dimension_numbers = #tpu.dot_dimension_numbers<[1], [0], [0], [1], [0, 0, 1, 1], [], []>} : vector<128x4xf32>, vector<4x64xf32>, vector<128x64xf32> -> vector<128x64xf32>
    %96 = arith.addf %94, %95 : vector<128x64xf32>
    %97 = vector.broadcast %2 : vector<1x64xf32> to vector<128x64xf32>
    %98 = arith.addf %96, %97 : vector<128x64xf32>
    %cst_50 = arith.constant 0.000000e+00 : f32
    %99 = vector.broadcast %cst_50 : f32 to vector<128x64xf32>
    %100 = arith.maximumf %98, %99 : vector<128x64xf32>
    %cst_51 = arith.constant dense<0.000000e+00> : vector<128x64xf32>
    %101 = tpu.matmul %100, %3, %cst_51 {dimension_numbers = #tpu.dot_dimension_numbers<[1], [0], [0], [1], [0, 0, 1, 1], [], []>} : vector<128x64xf32>, vector<64x64xf32>, vector<128x64xf32> -> vector<128x64xf32>
    %102 = vector.broadcast %4 : vector<1x64xf32> to vector<128x64xf32>
    %103 = arith.addf %101, %102 : vector<128x64xf32>
    %cst_52 = arith.constant 0.000000e+00 : f32
    %104 = vector.broadcast %cst_52 : f32 to vector<128x64xf32>
    %105 = arith.maximumf %103, %104 : vector<128x64xf32>
    %cst_53 = arith.constant dense<0.000000e+00> : vector<128x33xf32>
    %106 = tpu.matmul %105, %5, %cst_53 {dimension_numbers = #tpu.dot_dimension_numbers<[1], [0], [0], [1], [0, 0, 1, 1], [], []>} : vector<128x64xf32>, vector<64x33xf32>, vector<128x33xf32> -> vector<128x33xf32>
    %107 = vector.broadcast %6 : vector<1x33xf32> to vector<128x33xf32>
    %108 = arith.addf %106, %107 : vector<128x33xf32>
    %109 = vector.extract_strided_slice %108 {offsets = [0, 32], sizes = [128, 1], strides = [1, 1]} : vector<128x33xf32> to vector<128x1xf32>
    %110 = arith.negf %109 : vector<128x1xf32>
    %111 = math.exp %110 : vector<128x1xf32>
    %cst_54 = arith.constant 1.000000e+00 : f32
    %112 = vector.broadcast %cst_54 : f32 to vector<128x1xf32>
    %113 = arith.addf %112, %111 : vector<128x1xf32>
    %114 = arith.divf %112, %113 : vector<128x1xf32>
    %115 = arith.mulf %91, %114 : vector<128x1xf32>
    %116 = vector.shape_cast %115 : vector<128x1xf32> to vector<128x1xf32>
    %117 = vector.broadcast %116 : vector<128x1xf32> to vector<128x128xf32>
    %c0_55 = arith.constant 0 : index
    %c0_56 = arith.constant 0 : index
    %118 = vector.load %arg10[%c0_55, %c0_56] : memref<128x128xf32, #tpu.memory_space<vmem>>, vector<128x128xf32>
    tpu.vector_store %arg10[%c0_55, %c0_56], %117 {strides = array<i32>} : memref<128x128xf32, #tpu.memory_space<vmem>>, vector<128x128xf32>,
    return
  }
  func.func @transform_0(%arg0: i32) -> (i32, i32, i32) {
    %c0_i32 = arith.constant 0 : i32
    %c0_i32_0 = arith.constant 0 : i32
    %c0_i32_1 = arith.constant 0 : i32
    return %c0_i32, %arg0, %c0_i32_0 : i32, i32, i32
  }
  func.func @transform_1(%arg0: i32) -> (i32, i32) {
    %c0_i32 = arith.constant 0 : i32
    %c0_i32_0 = arith.constant 0 : i32
    %c0_i32_1 = arith.constant 0 : i32
    return %c0_i32, %c0_i32_0 : i32, i32
  }
  func.func @transform_2(%arg0: i32) -> (i32, i32) {
    %c0_i32 = arith.constant 0 : i32
    %c0_i32_0 = arith.constant 0 : i32
    %c0_i32_1 = arith.constant 0 : i32
    return %c0_i32, %c0_i32_0 : i32, i32
  }
  func.func @transform_3(%arg0: i32) -> (i32, i32) {
    %c0_i32 = arith.constant 0 : i32
    %c0_i32_0 = arith.constant 0 : i32
    %c0_i32_1 = arith.constant 0 : i32
    return %c0_i32, %c0_i32_0 : i32, i32
  }
  func.func @transform_4(%arg0: i32) -> (i32, i32) {
    %c0_i32 = arith.constant 0 : i32
    %c0_i32_0 = arith.constant 0 : i32
    %c0_i32_1 = arith.constant 0 : i32
    return %c0_i32, %c0_i32_0 : i32, i32
  }
  func.func @transform_5(%arg0: i32) -> (i32, i32) {
    %c0_i32 = arith.constant 0 : i32
    %c0_i32_0 = arith.constant 0 : i32
    %c0_i32_1 = arith.constant 0 : i32
    return %c0_i32, %c0_i32_0 : i32, i32
  }
  func.func @transform_6(%arg0: i32) -> (i32, i32) {
    %c0_i32 = arith.constant 0 : i32
    %c0_i32_0 = arith.constant 0 : i32
    %c0_i32_1 = arith.constant 0 : i32
    return %c0_i32, %c0_i32_0 : i32, i32
  }
  func.func @transform_7(%arg0: i32) -> (i32, i32) {
    %c0_i32 = arith.constant 0 : i32
    %c0_i32_0 = arith.constant 0 : i32
    %c0_i32_1 = arith.constant 0 : i32
    return %c0_i32, %c0_i32_0 : i32, i32
  }
  func.func @transform_8(%arg0: i32) -> (i32, i32) {
    %c0_i32 = arith.constant 0 : i32
    %c0_i32_0 = arith.constant 0 : i32
    %c0_i32_1 = arith.constant 0 : i32
    return %c0_i32, %c0_i32_0 : i32, i32
  }
  func.func @transform_9(%arg0: i32) -> (i32, i32) {
    %c0_i32 = arith.constant 0 : i32
    %c0_i32_0 = arith.constant 0 : i32
    return %arg0, %c0_i32 : i32, i32
  }
}

</mosaic_0001>

<llo_original>
// kernel: tpu_custom_call.1
$region0: #{tpu_custom_call.1}
  #allocation0 [shape = 'u32[]', space=smem, size = 0x4, offset = 0x4, fixed_abs, tag = 'smem constant byte address 0x4 - core index']
  #allocation1 [shape = 'u32[144,128]{1,0:T(1,128)}', space=vmem, size = 0x12000, scoped, tag = 'internal scratch']
  %s0 = inlined_call_operand.vmem [shape: f32[4,256,4], index: 0, kind: input, shape index: {}]
  %s1 = inlined_call_operand.vmem [shape: f32[1,32], index: 1, kind: input, shape index: {}]
  %s2 = inlined_call_operand.vmem [shape: f32[32,64], index: 2, kind: input, shape index: {}]
  %s3 = inlined_call_operand.vmem [shape: f32[4,64], index: 3, kind: input, shape index: {}]
  %s4 = inlined_call_operand.vmem [shape: f32[1,64], index: 4, kind: input, shape index: {}]
  %s5 = inlined_call_operand.vmem [shape: f32[64,64], index: 5, kind: input, shape index: {}]
  %s6 = inlined_call_operand.vmem [shape: f32[1,64], index: 6, kind: input, shape index: {}]
  %s7 = inlined_call_operand.vmem [shape: f32[64,33], index: 7, kind: input, shape index: {}]
  %s8 = inlined_call_operand.vmem [shape: f32[1,33], index: 8, kind: input, shape index: {}]
  %s9 = inlined_call_operand.hbm [shape: f32[256,128], index: 9, kind: output, shape index: {}]
  %s10 = sld [smem:[#allocation0]]
  $region107: #{tpu_custom_call.1} parent=0
    _
  %s12 = ssub.s32 1, %s10
  %s13 = scalar_select 0, %s12, %s10
  $region1: #{tpu_custom_call.1} parent=0
    #allocation2 [shape = 'u8[524288]{0}', space=vmem, size = 0x80000, scoped, tag = 'input window, operand 0']
    #allocation3 [shape = 'u8[131072]{0}', space=vmem, size = 0x20000, scoped, tag = 'output window, operand 0']
    #allocation4 [shape = 's32[2]{0}', space=sflag, size = 0x8, scoped, tag = 'scoped memory for tpu_custom_call.1']
    %14 = vsyncpa [#allocation4], 0
    %s15 = scalar_lea.sflag [#allocation4], 1
    %16 = vsyncpa %s15, 0
    loop: start=0, step=1, limit=4
    $region2: #{tpu_custom_call.1} parent=1 // loop_pre_header
      _
    $region3: #{tpu_custom_call.1} parent=1 // loop_header
      %s18 = sphi 0, %s22
      %p19 = scmp.ge.s32.totalorder %s18, 4
      %s28 = sphi 0, %s30
      %s31 = sphi 0, %s28
      %s32 = sphi 0, %s31
      %s48 = sphi 0, %s32
      %s52 = sphi 0, %s52
      %s54 = sphi 0, %s52
      %s55 = sphi 0, %s54
      %s69 = sphi 0, %s55
      %s73 = sphi 0, %s73
      %s75 = sphi 0, %s73
      %s76 = sphi 0, %s75
      %s90 = sphi 0, %s76
      %s94 = sphi 0, %s94
      %s96 = sphi 0, %s94
      %s97 = sphi 0, %s96
      %s111 = sphi 0, %s97
      %s115 = sphi 0, %s115
      %s117 = sphi 0, %s115
      %s118 = sphi 0, %s117
      %s132 = sphi 0, %s118
      %s136 = sphi 0, %s136
      %s138 = sphi 0, %s136
      %s139 = sphi 0, %s138
      %s153 = sphi 0, %s139
      %s157 = sphi 0, %s157
      %s159 = sphi 0, %s157
      %s160 = sphi 0, %s159
      %s174 = sphi 0, %s160
      %s178 = sphi 0, %s178
      %s180 = sphi 0, %s178
      %s181 = sphi 0, %s180
      %s195 = sphi 0, %s181
      %s199 = sphi 0, %s199
      %s201 = sphi 0, %s199
      %s202 = sphi 0, %s201
      %s216 = sphi 0, %s202
      %s222 = sphi 0, %s224
      %s225 = sphi 0, %s222
      %s226 = sphi 0, %s225
      %s242 = sphi 0, %s226
    $region4: #{tpu_custom_call.1} parent=1 // loop_header_branch
      %21 = sbr.rel (%p19) target = $region8
    $region5: #{tpu_custom_call.1} parent=1 // loop_body
      %s23 = ssub.s32 %s18, 1
      %s24 = ssub.s32 %s18, 2
      %s25 = sadd.s32 %s18, 1
      %s26 = ssub.s32 %s18, %s25
      %p27 = scmp.eq.s32.totalorder %s26, 0
      %s29 = sadd.s32 %s28, 1
      %s30 = scalar_select %p27, %s28, %s29
      %p33 = pneg %p27
      %p34 = scmp.eq.s32.totalorder %s18, 1
      %p35 = por %p33, %p34
      %p36 = scmp.ne.s32.totalorder %s28, %s31
      %p37 = scmp.eq.s32.totalorder %s18, 0
      %p38 = por %p36, %p37
      %p39 = scmp.ne.s32.totalorder %s28, %s31
      %p40 = scmp.eq.s32.totalorder %s23, 1
      %p41 = por %p39, %p40
      %p42 = scmp.ne.s32.totalorder %s31, %s32
      %p43 = scmp.eq.s32.totalorder %s23, 0
      %p44 = por %p42, %p43
      %p45 = scmp.ne.s32.totalorder %s31, %s32
      %p46 = scmp.eq.s32.totalorder %s24, 1
      %p47 = por %p45, %p46
      %p49 = scmp.ne.s32.totalorder %s32, %s48
      %p50 = scmp.eq.s32.totalorder %s24, 0
      %p51 = por %p49, %p50
      %s53 = sadd.s32 %s52, 1
      %p56 = scmp.eq.s32.totalorder %s18, 1
      %p57 = scmp.ne.s32.totalorder %s52, %s54
      %p58 = scmp.eq.s32.totalorder %s18, 0
      %p59 = por %p57, %p58
      %p60 = scmp.ne.s32.totalorder %s52, %s54
      %p61 = scmp.eq.s32.totalorder %s23, 1
      %p62 = por %p60, %p61
      %p63 = scmp.ne.s32.totalorder %s54, %s55
      %p64 = scmp.eq.s32.totalorder %s23, 0
      %p65 = por %p63, %p64
      %p66 = scmp.ne.s32.totalorder %s54, %s55
      %p67 = scmp.eq.s32.totalorder %s24, 1
      %p68 = por %p66, %p67
      %p70 = scmp.ne.s32.totalorder %s55, %s69
      %p71 = scmp.eq.s32.totalorder %s24, 0
      %p72 = por %p70, %p71
      %s74 = sadd.s32 %s73, 1
      %p77 = scmp.eq.s32.totalorder %s18, 1
      %p78 = scmp.ne.s32.totalorder %s73, %s75
      %p79 = scmp.eq.s32.totalorder %s18, 0
      %p80 = por %p78, %p79
      %p81 = scmp.ne.s32.totalorder %s73, %s75
      %p82 = scmp.eq.s32.totalorder %s23, 1
      %p83 = por %p81, %p82
      %p84 = scmp.ne.s32.totalorder %s75, %s76
      %p85 = scmp.eq.s32.totalorder %s23, 0
      %p86 = por %p84, %p85
      %p87 = scmp.ne.s32.totalorder %s75, %s76
      %p88 = scmp.eq.s32.totalorder %s24, 1
      %p89 = por %p87, %p88
      %p91 = scmp.ne.s32.totalorder %s76, %s90
      %p92 = scmp.eq.s32.totalorder %s24, 0
      %p93 = por %p91, %p92
      %s95 = sadd.s32 %s94, 1
      %p98 = scmp.eq.s32.totalorder %s18, 1
      %p99 = scmp.ne.s32.totalorder %s94, %s96
      %p100 = scmp.eq.s32.totalorder %s18, 0
      %p101 = por %p99, %p100
      %p102 = scmp.ne.s32.totalorder %s94, %s96
      %p103 = scmp.eq.s32.totalorder %s23, 1
      %p104 = por %p102, %p103
      %p105 = scmp.ne.s32.totalorder %s96, %s97
      %p106 = scmp.eq.s32.totalorder %s23, 0
      %p107 = por %p105, %p106
      %p108 = scmp.ne.s32.totalorder %s96, %s97
      %p109 = scmp.eq.s32.totalorder %s24, 1
      %p110 = por %p108, %p109
      %p112 = scmp.ne.s32.totalorder %s97, %s111
      %p113 = scmp.eq.s32.totalorder %s24, 0
      %p114 = por %p112, %p113
      %s116 = sadd.s32 %s115, 1
      %p119 = scmp.eq.s32.totalorder %s18, 1
      %p120 = scmp.ne.s32.totalorder %s115, %s117
      %p121 = scmp.eq.s32.totalorder %s18, 0
      %p122 = por %p120, %p121
      %p123 = scmp.ne.s32.totalorder %s115, %s117
      %p124 = scmp.eq.s32.totalorder %s23, 1
      %p125 = por %p123, %p124
      %p126 = scmp.ne.s32.totalorder %s117, %s118
      %p127 = scmp.eq.s32.totalorder %s23, 0
      %p128 = por %p126, %p127
      %p129 = scmp.ne.s32.totalorder %s117, %s118
      %p130 = scmp.eq.s32.totalorder %s24, 1
      %p131 = por %p129, %p130
      %p133 = scmp.ne.s32.totalorder %s118, %s132
      %p134 = scmp.eq.s32.totalorder %s24, 0
      %p135 = por %p133, %p134
      %s137 = sadd.s32 %s136, 1
      %p140 = scmp.eq.s32.totalorder %s18, 1
      %p141 = scmp.ne.s32.totalorder %s136, %s138
      %p142 = scmp.eq.s32.totalorder %s18, 0
      %p143 = por %p141, %p142
      %p144 = scmp.ne.s32.totalorder %s136, %s138
      %p145 = scmp.eq.s32.totalorder %s23, 1
      %p146 = por %p144, %p145
      %p147 = scmp.ne.s32.totalorder %s138, %s139
      %p148 = scmp.eq.s32.totalorder %s23, 0
      %p149 = por %p147, %p148
      %p150 = scmp.ne.s32.totalorder %s138, %s139
      %p151 = scmp.eq.s32.totalorder %s24, 1
      %p152 = por %p150, %p151
      %p154 = scmp.ne.s32.totalorder %s139, %s153
      %p155 = scmp.eq.s32.totalorder %s24, 0
      %p156 = por %p154, %p155
      %s158 = sadd.s32 %s157, 1
      %p161 = scmp.eq.s32.totalorder %s18, 1
      %p162 = scmp.ne.s32.totalorder %s157, %s159
      %p163 = scmp.eq.s32.totalorder %s18, 0
      %p164 = por %p162, %p163
      %p165 = scmp.ne.s32.totalorder %s157, %s159
      %p166 = scmp.eq.s32.totalorder %s23, 1
      %p167 = por %p165, %p166
      %p168 = scmp.ne.s32.totalorder %s159, %s160
      %p169 = scmp.eq.s32.totalorder %s23, 0
      %p170 = por %p168, %p169
      %p171 = scmp.ne.s32.totalorder %s159, %s160
      %p172 = scmp.eq.s32.totalorder %s24, 1
      %p173 = por %p171, %p172
      %p175 = scmp.ne.s32.totalorder %s160, %s174
      %p176 = scmp.eq.s32.totalorder %s24, 0
      %p177 = por %p175, %p176
      %s179 = sadd.s32 %s178, 1
      %p182 = scmp.eq.s32.totalorder %s18, 1
      %p183 = scmp.ne.s32.totalorder %s178, %s180
      %p184 = scmp.eq.s32.totalorder %s18, 0
      %p185 = por %p183, %p184
      %p186 = scmp.ne.s32.totalorder %s178, %s180
      %p187 = scmp.eq.s32.totalorder %s23, 1
      %p188 = por %p186, %p187
      %p189 = scmp.ne.s32.totalorder %s180, %s181
      %p190 = scmp.eq.s32.totalorder %s23, 0
      %p191 = por %p189, %p190
      %p192 = scmp.ne.s32.totalorder %s180, %s181
      %p193 = scmp.eq.s32.totalorder %s24, 1
      %p194 = por %p192, %p193
      %p196 = scmp.ne.s32.totalorder %s181, %s195
      %p197 = scmp.eq.s32.totalorder %s24, 0
      %p198 = por %p196, %p197
      %s200 = sadd.s32 %s199, 1
      %p203 = scmp.eq.s32.totalorder %s18, 1
      %p204 = scmp.ne.s32.totalorder %s199, %s201
      %p205 = scmp.eq.s32.totalorder %s18, 0
      %p206 = por %p204, %p205
      %p207 = scmp.ne.s32.totalorder %s199, %s201
      %p208 = scmp.eq.s32.totalorder %s23, 1
      %p209 = por %p207, %p208
      %p210 = scmp.ne.s32.totalorder %s201, %s202
      %p211 = scmp.eq.s32.totalorder %s23, 0
      %p212 = por %p210, %p211
      %p213 = scmp.ne.s32.totalorder %s201, %s202
      %p214 = scmp.eq.s32.totalorder %s24, 1
      %p215 = por %p213, %p214
      %p217 = scmp.ne.s32.totalorder %s202, %s216
      %p218 = scmp.eq.s32.totalorder %s24, 0
      %p219 = por %p217, %p218
      %s220 = ssub.s32 %s18, %s25
      %p221 = scmp.eq.s32.totalorder %s220, 0
      %s223 = sadd.s32 %s222, 1
      %s224 = scalar_select %p221, %s222, %s223
      %p227 = pneg %p221
      %p228 = scmp.eq.s32.totalorder %s18, 1
      %p229 = por %p227, %p228
      %p230 = scmp.ne.s32.totalorder %s222, %s225
      %p231 = scmp.eq.s32.totalorder %s18, 0
      %p232 = por %p230, %p231
      %p233 = scmp.ne.s32.totalorder %s222, %s225
      %p234 = scmp.eq.s32.totalorder %s23, 1
      %p235 = por %p233, %p234
      %p236 = scmp.ne.s32.totalorder %s225, %s226
      %p237 = scmp.eq.s32.totalorder %s23, 0
      %p238 = por %p236, %p237
      %p239 = scmp.ne.s32.totalorder %s225, %s226
      %p240 = scmp.eq.s32.totalorder %s24, 1
      %p241 = por %p239, %p240
      %p243 = scmp.ne.s32.totalorder %s226, %s242
      %p244 = scmp.eq.s32.totalorder %s24, 0
      %p245 = por %p243, %p244
      %p246 = scmp.le.s32.totalorder 1, %s18
      %p247 = scmp.lt.s32.totalorder %s18, 3
      %p248 = pnand %p246, %p247
      %p249 = pneg %p248
      // Predicated region
      $region9: #{tpu_custom_call.1} parent=5 // pred_check
        _
      $region10: #{tpu_custom_call.1} parent=5 // pred_check_branch
        %251 = sbr.rel (%p248) target = $region12
      $region11: #{tpu_custom_call.1} parent=5 // pred_region
        %s252 = ssub.s32 %s18, 1
        // Predicated region
        $region13: #{tpu_custom_call.1} parent=11 // pred_check
          %p253 = pneg %p65
        $region14: #{tpu_custom_call.1} parent=11 // pred_check_branch
          %255 = sbr.rel (%p253) target = $region16
        $region15: #{tpu_custom_call.1} parent=11 // pred_region
          _
        $region16: #{tpu_custom_call.1} parent=11 // pred_fallthru
          _
        // Predicated region
        $region17: #{tpu_custom_call.1} parent=11 // pred_check
          %p256 = pneg %p86
        $region18: #{tpu_custom_call.1} parent=11 // pred_check_branch
          %258 = sbr.rel (%p256) target = $region20
        $region19: #{tpu_custom_call.1} parent=11 // pred_region
          _
        $region20: #{tpu_custom_call.1} parent=11 // pred_fallthru
          _
        // Predicated region
        $region21: #{tpu_custom_call.1} parent=11 // pred_check
          %p259 = pneg %p107
        $region22: #{tpu_custom_call.1} parent=11 // pred_check_branch
          %261 = sbr.rel (%p259) target = $region24
        $region23: #{tpu_custom_call.1} parent=11 // pred_region
          _
        $region24: #{tpu_custom_call.1} parent=11 // pred_fallthru
          _
        // Predicated region
        $region25: #{tpu_custom_call.1} parent=11 // pred_check
          %p262 = pneg %p128
        $region26: #{tpu_custom_call.1} parent=11 // pred_check_branch
          %264 = sbr.rel (%p262) target = $region28
        $region27: #{tpu_custom_call.1} parent=11 // pred_region
          _
        $region28: #{tpu_custom_call.1} parent=11 // pred_fallthru
          _
        // Predicated region
        $region29: #{tpu_custom_call.1} parent=11 // pred_check
          %p265 = pneg %p149
        $region30: #{tpu_custom_call.1} parent=11 // pred_check_branch
          %267 = sbr.rel (%p265) target = $region32
        $region31: #{tpu_custom_call.1} parent=11 // pred_region
          _
        $region32: #{tpu_custom_call.1} parent=11 // pred_fallthru
          _
        // Predicated region
        $region33: #{tpu_custom_call.1} parent=11 // pred_check
          %p268 = pneg %p170
        $region34: #{tpu_custom_call.1} parent=11 // pred_check_branch
          %270 = sbr.rel (%p268) target = $region36
        $region35: #{tpu_custom_call.1} parent=11 // pred_region
          _
        $region36: #{tpu_custom_call.1} parent=11 // pred_fallthru
          _
        // Predicated region
        $region37: #{tpu_custom_call.1} parent=11 // pred_check
          %p271 = pneg %p191
        $region38: #{tpu_custom_call.1} parent=11 // pred_check_branch
          %273 = sbr.rel (%p271) target = $region40
        $region39: #{tpu_custom_call.1} parent=11 // pred_region
          _
        $region40: #{tpu_custom_call.1} parent=11 // pred_fallthru
          _
        // Predicated region
        $region41: #{tpu_custom_call.1} parent=11 // pred_check
          %p274 = pneg %p212
        $region42: #{tpu_custom_call.1} parent=11 // pred_check_branch
          %276 = sbr.rel (%p274) target = $region44
        $region43: #{tpu_custom_call.1} parent=11 // pred_region
          _
        $region44: #{tpu_custom_call.1} parent=11 // pred_fallthru
          _
      $region12: #{tpu_custom_call.1} parent=5 // pred_fallthru
        _
      %p277 = scmp.lt.s32.totalorder %s18, 2
      // Predicated region
      $region45: #{tpu_custom_call.1} parent=5 // pred_check
        %p278 = pneg %p277
      $region46: #{tpu_custom_call.1} parent=5 // pred_check_branch
        %280 = sbr.rel (%p278) target = $region48
      $region47: #{tpu_custom_call.1} parent=5 // pred_region
        // Predicated region
        $region49: #{tpu_custom_call.1} parent=47 // pred_check
          %p281 = pneg %p38
        $region50: #{tpu_custom_call.1} parent=47 // pred_check_branch
          %283 = sbr.rel (%p281) target = $region52
        $region51: #{tpu_custom_call.1} parent=47 // pred_region
          %s284 = sand.u32 %s28, 1
          %s285 = sand.u32 %s28, 1
          %s286 = smul.addr %s285, 512
          %s287 = scalar_lea.vmem [#allocation2], %s286
          %s288 = smul.u32 16, %s18
          %s289 = smul.addr %s288, 8
          %s290 = scalar_lea.vmem %s0, %s289
          // Predicated region
          $region53: #{tpu_custom_call.1} parent=51 // pred_check
            _
          $region54: #{tpu_custom_call.1} parent=51 // pred_check_branch
            %292 = sbr.rel (0) target = $region56
          $region55: #{tpu_custom_call.1} parent=51 // pred_region
            // Predicated region
            $region57: #{tpu_custom_call.1} parent=55 // pred_check
              _
            $region58: #{tpu_custom_call.1} parent=55 // pred_check_branch
              %294 = sbr.rel (0) target = $region60
            $region59: #{tpu_custom_call.1} parent=55 // pred_region
              // Predicated region
              $region72: #{tpu_custom_call.1} parent=59 // pred_check
                _
              $region73: #{tpu_custom_call.1} parent=59 // pred_check_branch
                %435 = sbr.rel (0) target = $region75
              $region74: #{tpu_custom_call.1} parent=59 // pred_region
                loop: start=0, step=1, limit=1
                $region76: #{tpu_custom_call.1} parent=74 // loop_pre_header
                  _
                $region77: #{tpu_custom_call.1} parent=74 // loop_header
                  %s437 = sphi 0, %s441
                  %p438 = scmp.ge.s32.totalorder %s437, 1
                  %s442 = sphi %s290, %s290
                  %s443 = sphi %s287, %s287
                $region78: #{tpu_custom_call.1} parent=74 // loop_header_branch
                  %440 = sbr.rel (%p438) target = $region82
                $region79: #{tpu_custom_call.1} parent=74 // loop_body
                  %v444 = vld [vmem:[%s442] sm:$0xff]
                  %445 = vst [vmem:[%s443] sm:$0xff] %v444
                  %v446 = vld [vmem:[%s442 + $0x8] sm:$0xff]
                  %447 = vst [vmem:[%s443 + $0x8] sm:$0xff] %v446
                  %v448 = vld [vmem:[%s442 + $0x10] sm:$0xff]
                  %449 = vst [vmem:[%s443 + $0x10] sm:$0xff] %v448
                  %v450 = vld [vmem:[%s442 + $0x18] sm:$0xff]
                  %451 = vst [vmem:[%s443 + $0x18] sm:$0xff] %v450
                  %v452 = vld [vmem:[%s442 + $0x20] sm:$0xff]
                  %453 = vst [vmem:[%s443 + $0x20] sm:$0xff] %v452
                  %v454 = vld [vmem:[%s442 + $0x28] sm:$0xff]
                  %455 = vst [vmem:[%s443 + $0x28] sm:$0xff] %v454
                  %v456 = vld [vmem:[%s442 + $0x30] sm:$0xff]
                  %457 = vst [vmem:[%s443 + $0x30] sm:$0xff] %v456
                  %v458 = vld [vmem:[%s442 + $0x38] sm:$0xff]
                  %459 = vst [vmem:[%s443 + $0x38] sm:$0xff] %v458
                  %v460 = vld [vmem:[%s442 + $0x40] sm:$0xff]
                  %461 = vst [vmem:[%s443 + $0x40] sm:$0xff] %v460
                  %v462 = vld [vmem:[%s442 + $0x48] sm:$0xff]
                  %463 = vst [vmem:[%s443 + $0x48] sm:$0xff] %v462
                  %v464 = vld [vmem:[%s442 + $0x50] sm:$0xff]
                  %465 = vst [vmem:[%s443 + $0x50] sm:$0xff] %v464
                  %v466 = vld [vmem:[%s442 + $0x58] sm:$0xff]
                  %467 = vst [vmem:[%s443 + $0x58] sm:$0xff] %v466
                  %v468 = vld [vmem:[%s442 + $0x60] sm:$0xff]
                  %469 = vst [vmem:[%s443 + $0x60] sm:$0xff] %v468
                  %v470 = vld [vmem:[%s442 + $0x68] sm:$0xff]
                  %471 = vst [vmem:[%s443 + $0x68] sm:$0xff] %v470
                  %v472 = vld [vmem:[%s442 + $0x70] sm:$0xff]
                  %473 = vst [vmem:[%s443 + $0x70] sm:$0xff] %v472
                  %v474 = vld [vmem:[%s442 + $0x78] sm:$0xff]
                  %475 = vst [vmem:[%s443 + $0x78] sm:$0xff] %v474
                  %v476 = vld [vmem:[%s442 + $0x100] sm:$0xff]
                  %477 = vst [vmem:[%s443 + $0x80] sm:$0xff] %v476
                  %v478 = vld [vmem:[%s442 + $0x108] sm:$0xff]
                  %479 = vst [vmem:[%s443 + $0x88] sm:$0xff] %v478
                  %v480 = vld [vmem:[%s442 + $0x110] sm:$0xff]
                  %481 = vst [vmem:[%s443 + $0x90] sm:$0xff] %v480
                  %v482 = vld [vmem:[%s442 + $0x118] sm:$0xff]
                  %483 = vst [vmem:[%s443 + $0x98] sm:$0xff] %v482
                  %v484 = vld [vmem:[%s442 + $0x120] sm:$0xff]
                  %485 = vst [vmem:[%s443 + $0xa0] sm:$0xff] %v484
                  %v486 = vld [vmem:[%s442 + $0x128] sm:$0xff]
                  %487 = vst [vmem:[%s443 + $0xa8] sm:$0xff] %v486
                  %v488 = vld [vmem:[%s442 + $0x130] sm:$0xff]
                  %489 = vst [vmem:[%s443 + $0xb0] sm:$0xff] %v488
                  %v490 = vld [vmem:[%s442 + $0x138] sm:$0xff]
                  %491 = vst [vmem:[%s443 + $0xb8] sm:$0xff] %v490
                  %v492 = vld [vmem:[%s442 + $0x140] sm:$0xff]
                  %493 = vst [vmem:[%s443 + $0xc0] sm:$0xff] %v492
                  %v494 = vld [vmem:[%s442 + $0x148] sm:$0xff]
                  %495 = vst [vmem:[%s443 + $0xc8] sm:$0xff] %v494
                  %v496 = vld [vmem:[%s442 + $0x150] sm:$0xff]
                  %497 = vst [vmem:[%s443 + $0xd0] sm:$0xff] %v496
                  %v498 = vld [vmem:[%s442 + $0x158] sm:$0xff]
                  %499 = vst [vmem:[%s443 + $0xd8] sm:$0xff] %v498
                  %v500 = vld [vmem:[%s442 + $0x160] sm:$0xff]
                  %501 = vst [vmem:[%s443 + $0xe0] sm:$0xff] %v500
                  %v502 = vld [vmem:[%s442 + $0x168] sm:$0xff]
                  %503 = vst [vmem:[%s443 + $0xe8] sm:$0xff] %v502
                  %v504 = vld [vmem:[%s442 + $0x170] sm:$0xff]
                  %505 = vst [vmem:[%s443 + $0xf0] sm:$0xff] %v504
                  %v506 = vld [vmem:[%s442 + $0x178] sm:$0xff]
                  %507 = vst [vmem:[%s443 + $0xf8] sm:$0xff] %v506
                  %v508 = vld [vmem:[%s442 + $0x200] sm:$0xff]
                  %509 = vst [vmem:[%s443 + $0x100] sm:$0xff] %v508
                  %v510 = vld [vmem:[%s442 + $0x208] sm:$0xff]
                  %511 = vst [vmem:[%s443 + $0x108] sm:$0xff] %v510
                  %v512 = vld [vmem:[%s442 + $0x210] sm:$0xff]
                  %513 = vst [vmem:[%s443 + $0x110] sm:$0xff] %v512
                  %v514 = vld [vmem:[%s442 + $0x218] sm:$0xff]
                  %515 = vst [vmem:[%s443 + $0x118] sm:$0xff] %v514
                  %v516 = vld [vmem:[%s442 + $0x220] sm:$0xff]
                  %517 = vst [vmem:[%s443 + $0x120] sm:$0xff] %v516
                  %v518 = vld [vmem:[%s442 + $0x228] sm:$0xff]
                  %519 = vst [vmem:[%s443 + $0x128] sm:$0xff] %v518
                  %v520 = vld [vmem:[%s442 + $0x230] sm:$0xff]
                  %521 = vst [vmem:[%s443 + $0x130] sm:$0xff] %v520
                  %v522 = vld [vmem:[%s442 + $0x238] sm:$0xff]
                  %523 = vst [vmem:[%s443 + $0x138] sm:$0xff] %v522
                  %v524 = vld [vmem:[%s442 + $0x240] sm:$0xff]
                  %525 = vst [vmem:[%s443 + $0x140] sm:$0xff] %v524
                  %v526 = vld [vmem:[%s442 + $0x248] sm:$0xff]
                  %527 = vst [vmem:[%s443 + $0x148] sm:$0xff] %v526
                  %v528 = vld [vmem:[%s442 + $0x250] sm:$0xff]
                  %529 = vst [vmem:[%s443 + $0x150] sm:$0xff] %v528
                  %v530 = vld [vmem:[%s442 + $0x258] sm:$0xff]
                  %531 = vst [vmem:[%s443 + $0x158] sm:$0xff] %v530
                  %v532 = vld [vmem:[%s442 + $0x260] sm:$0xff]
                  %533 = vst [vmem:[%s443 + $0x160] sm:$0xff] %v532
                  %v534 = vld [vmem:[%s442 + $0x268] sm:$0xff]
                  %535 = vst [vmem:[%s443 + $0x168] sm:$0xff] %v534
                  %v536 = vld [vmem:[%s442 + $0x270] sm:$0xff]
                  %537 = vst [vmem:[%s443 + $0x170] sm:$0xff] %v536
                  %v538 = vld [vmem:[%s442 + $0x278] sm:$0xff]
                  %539 = vst [vmem:[%s443 + $0x178] sm:$0xff] %v538
                  %v540 = vld [vmem:[%s442 + $0x300] sm:$0xff]
                  %541 = vst [vmem:[%s443 + $0x180] sm:$0xff] %v540
                  %v542 = vld [vmem:[%s442 + $0x308] sm:$0xff]
                  %543 = vst [vmem:[%s443 + $0x188] sm:$0xff] %v542
                  %v544 = vld [vmem:[%s442 + $0x310] sm:$0xff]
                  %545 = vst [vmem:[%s443 + $0x190] sm:$0xff] %v544
                  %v546 = vld [vmem:[%s442 + $0x318] sm:$0xff]
                  %547 = vst [vmem:[%s443 + $0x198] sm:$0xff] %v546
                  %v548 = vld [vmem:[%s442 + $0x320] sm:$0xff]
                  %549 = vst [vmem:[%s443 + $0x1a0] sm:$0xff] %v548
                  %v550 = vld [vmem:[%s442 + $0x328] sm:$0xff]
                  %551 = vst [vmem:[%s443 + $0x1a8] sm:$0xff] %v550
                  %v552 = vld [vmem:[%s442 + $0x330] sm:$0xff]
                  %553 = vst [vmem:[%s443 + $0x1b0] sm:$0xff] %v552
                  %v554 = vld [vmem:[%s442 + $0x338] sm:$0xff]
                  %555 = vst [vmem:[%s443 + $0x1b8] sm:$0xff] %v554
                  %v556 = vld [vmem:[%s442 + $0x340] sm:$0xff]
                  %557 = vst [vmem:[%s443 + $0x1c0] sm:$0xff] %v556
                  %v558 = vld [vmem:[%s442 + $0x348] sm:$0xff]
                  %559 = vst [vmem:[%s443 + $0x1c8] sm:$0xff] %v558
                  %v560 = vld [vmem:[%s442 + $0x350] sm:$0xff]
                  %561 = vst [vmem:[%s443 + $0x1d0] sm:$0xff] %v560
                  %v562 = vld [vmem:[%s442 + $0x358] sm:$0xff]
                  %563 = vst [vmem:[%s443 + $0x1d8] sm:$0xff] %v562
                  %v564 = vld [vmem:[%s442 + $0x360] sm:$0xff]
                  %565 = vst [vmem:[%s443 + $0x1e0] sm:$0xff] %v564
                  %v566 = vld [vmem:[%s442 + $0x368] sm:$0xff]
                  %567 = vst [vmem:[%s443 + $0x1e8] sm:$0xff] %v566
                  %v568 = vld [vmem:[%s442 + $0x370] sm:$0xff]
                  %569 = vst [vmem:[%s443 + $0x1f0] sm:$0xff] %v568
                  %v570 = vld [vmem:[%s442 + $0x378] sm:$0xff]
                  %571 = vst [vmem:[%s443 + $0x1f8] sm:$0xff] %v570
                $region80: #{tpu_custom_call.1} parent=74 // loop_footer
                  %s441 = sadd.s32 1, %s437
                $region81: #{tpu_custom_call.1} parent=74 // loop_footer_branch
                  %436 = sbr.rel target = $region77
                $region82: #{tpu_custom_call.1} parent=74 // loop_exit
                  _
              $region75: #{tpu_custom_call.1} parent=59 // pred_fallthru
                _
              // Predicated region
              $region83: #{tpu_custom_call.1} parent=59 // pred_check
                _
              $region84: #{tpu_custom_call.1} parent=59 // pred_check_branch
                %573 = sbr.rel target = $region86
              $region85: #{tpu_custom_call.1} parent=59 // pred_region
                _
              $region86: #{tpu_custom_call.1} parent=59 // pred_fallthru
                _
            $region60: #{tpu_custom_call.1} parent=55 // pred_fallthru
              _
            // Predicated region
            $region61: #{tpu_custom_call.1} parent=55 // pred_check
              _
            $region62: #{tpu_custom_call.1} parent=55 // pred_check_branch
              %296 = sbr.rel target = $region64
            $region63: #{tpu_custom_call.1} parent=55 // pred_region
              loop: start=0, step=1, limit=1
              $region65: #{tpu_custom_call.1} parent=63 // loop_pre_header
                _
              $region66: #{tpu_custom_call.1} parent=63 // loop_header
                %s299 = sphi 0, %s303
                %p300 = scmp.ge.s32.totalorder %s299, 1
                %s304 = sphi %s290, %s290
                %s305 = sphi %s287, %s287
              $region67: #{tpu_custom_call.1} parent=63 // loop_header_branch
                %302 = sbr.rel (%p300) target = $region71
              $region68: #{tpu_custom_call.1} parent=63 // loop_body
                %v306 = vld [vmem:[%s304] sm:$0xff]
                %307 = vst [vmem:[%s305] sm:$0xff] %v306
                %v308 = vld [vmem:[%s304 + $0x8] sm:$0xff]
                %309 = vst [vmem:[%s305 + $0x8] sm:$0xff] %v308
                %v310 = vld [vmem:[%s304 + $0x10] sm:$0xff]
                %311 = vst [vmem:[%s305 + $0x10] sm:$0xff] %v310
                %v312 = vld [vmem:[%s304 + $0x18] sm:$0xff]
                %313 = vst [vmem:[%s305 + $0x18] sm:$0xff] %v312
                %v314 = vld [vmem:[%s304 + $0x20] sm:$0xff]
                %315 = vst [vmem:[%s305 + $0x20] sm:$0xff] %v314
                %v316 = vld [vmem:[%s304 + $0x28] sm:$0xff]
                %317 = vst [vmem:[%s305 + $0x28] sm:$0xff] %v316
                %v318 = vld [vmem:[%s304 + $0x30] sm:$0xff]
                %319 = vst [vmem:[%s305 + $0x30] sm:$0xff] %v318
                %v320 = vld [vmem:[%s304 + $0x38] sm:$0xff]
                %321 = vst [vmem:[%s305 + $0x38] sm:$0xff] %v320
                %v322 = vld [vmem:[%s304 + $0x40] sm:$0xff]
                %323 = vst [vmem:[%s305 + $0x40] sm:$0xff] %v322
                %v324 = vld [vmem:[%s304 + $0x48] sm:$0xff]
                %325 = vst [vmem:[%s305 + $0x48] sm:$0xff] %v324
                %v326 = vld [vmem:[%s304 + $0x50] sm:$0xff]
                %327 = vst [vmem:[%s305 + $0x50] sm:$0xff] %v326
                %v328 = vld [vmem:[%s304 + $0x58] sm:$0xff]
                %329 = vst [vmem:[%s305 + $0x58] sm:$0xff] %v328
                %v330 = vld [vmem:[%s304 + $0x60] sm:$0xff]
                %331 = vst [vmem:[%s305 + $0x60] sm:$0xff] %v330
                %v332 = vld [vmem:[%s304 + $0x68] sm:$0xff]
                %333 = vst [vmem:[%s305 + $0x68] sm:$0xff] %v332
                %v334 = vld [vmem:[%s304 + $0x70] sm:$0xff]
                %335 = vst [vmem:[%s305 + $0x70] sm:$0xff] %v334
                %v336 = vld [vmem:[%s304 + $0x78] sm:$0xff]
                %337 = vst [vmem:[%s305 + $0x78] sm:$0xff] %v336
                %v338 = vld [vmem:[%s304 + $0x100] sm:$0xff]
                %339 = vst [vmem:[%s305 + $0x80] sm:$0xff] %v338
                %v340 = vld [vmem:[%s304 + $0x108] sm:$0xff]
                %341 = vst [vmem:[%s305 + $0x88] sm:$0xff] %v340
                %v342 = vld [vmem:[%s304 + $0x110] sm:$0xff]
                %343 = vst [vmem:[%s305 + $0x90] sm:$0xff] %v342
                %v344 = vld [vmem:[%s304 + $0x118] sm:$0xff]
                %345 = vst [vmem:[%s305 + $0x98] sm:$0xff] %v344
                %v346 = vld [vmem:[%s304 + $0x120] sm:$0xff]
                %347 = vst [vmem:[%s305 + $0xa0] sm:$0xff] %v346
                %v348 = vld [vmem:[%s304 + $0x128] sm:$0xff]
                %349 = vst [vmem:[%s305 + $0xa8] sm:$0xff] %v348
                %v350 = vld [vmem:[%s304 + $0x130] sm:$0xff]
                %351 = vst [vmem:[%s305 + $0xb0] sm:$0xff] %v350
                %v352 = vld [vmem:[%s304 + $0x138] sm:$0xff]
                %353 = vst [vmem:[%s305 + $0xb8] sm:$0xff] %v352
                %v354 = vld [vmem:[%s304 + $0x140] sm:$0xff]
                %355 = vst [vmem:[%s305 + $0xc0] sm:$0xff] %v354
                %v356 = vld [vmem:[%s304 + $0x148] sm:$0xff]
                %357 = vst [vmem:[%s305 + $0xc8] sm:$0xff] %v356
                %v358 = vld [vmem:[%s304 + $0x150] sm:$0xff]
                %359 = vst [vmem:[%s305 + $0xd0] sm:$0xff] %v358
                %v360 = vld [vmem:[%s304 + $0x158] sm:$0xff]
                %361 = vst [vmem:[%s305 + $0xd8] sm:$0xff] %v360
                %v362 = vld [vmem:[%s304 + $0x160] sm:$0xff]
                %363 = vst [vmem:[%s305 + $0xe0] sm:$0xff] %v362
                %v364 = vld [vmem:[%s304 + $0x168] sm:$0xff]
                %365 = vst [vmem:[%s305 + $0xe8] sm:$0xff] %v364
                %v366 = vld [vmem:[%s304 + $0x170] sm:$0xff]
                %367 = vst [vmem:[%s305 + $0xf0] sm:$0xff] %v366
                %v368 = vld [vmem:[%s304 + $0x178] sm:$0xff]
                %369 = vst [vmem:[%s305 + $0xf8] sm:$0xff] %v368
                %v370 = vld [vmem:[%s304 + $0x200] sm:$0xff]
                %371 = vst [vmem:[%s305 + $0x100] sm:$0xff] %v370
                %v372 = vld [vmem:[%s304 + $0x208] sm:$0xff]
                %373 = vst [vmem:[%s305 + $0x108] sm:$0xff] %v372
                %v374 = vld [vmem:[%s304 + $0x210] sm:$0xff]
                %375 = vst [vmem:[%s305 + $0x110] sm:$0xff] %v374
                %v376 = vld [vmem:[%s304 + $0x218] sm:$0xff]
                %377 = vst [vmem:[%s305 + $0x118] sm:$0xff] %v376
                %v378 = vld [vmem:[%s304 + $0x220] sm:$0xff]
                %379 = vst [vmem:[%s305 + $0x120] sm:$0xff] %v378
                %v380 = vld [vmem:[%s304 + $0x228] sm:$0xff]
                %381 = vst [vmem:[%s305 + $0x128] sm:$0xff] %v380
                %v382 = vld [vmem:[%s304 + $0x230] sm:$0xff]
                %383 = vst [vmem:[%s305 + $0x130] sm:$0xff] %v382
                %v384 = vld [vmem:[%s304 + $0x238] sm:$0xff]
                %385 = vst [vmem:[%s305 + $0x138] sm:$0xff] %v384
                %v386 = vld [vmem:[%s304 + $0x240] sm:$0xff]
                %387 = vst [vmem:[%s305 + $0x140] sm:$0xff] %v386
                %v388 = vld [vmem:[%s304 + $0x248] sm:$0xff]
                %389 = vst [vmem:[%s305 + $0x148] sm:$0xff] %v388
                %v390 = vld [vmem:[%s304 + $0x250] sm:$0xff]
                %391 = vst [vmem:[%s305 + $0x150] sm:$0xff] %v390
                %v392 = vld [vmem:[%s304 + $0x258] sm:$0xff]
                %393 = vst [vmem:[%s305 + $0x158] sm:$0xff] %v392
                %v394 = vld [vmem:[%s304 + $0x260] sm:$0xff]
                %395 = vst [vmem:[%s305 + $0x160] sm:$0xff] %v394
                %v396 = vld [vmem:[%s304 + $0x268] sm:$0xff]
                %397 = vst [vmem:[%s305 + $0x168] sm:$0xff] %v396
                %v398 = vld [vmem:[%s304 + $0x270] sm:$0xff]
                %399 = vst [vmem:[%s305 + $0x170] sm:$0xff] %v398
                %v400 = vld [vmem:[%s304 + $0x278] sm:$0xff]
                %401 = vst [vmem:[%s305 + $0x178] sm:$0xff] %v400
                %v402 = vld [vmem:[%s304 + $0x300] sm:$0xff]
                %403 = vst [vmem:[%s305 + $0x180] sm:$0xff] %v402
                %v404 = vld [vmem:[%s304 + $0x308] sm:$0xff]
                %405 = vst [vmem:[%s305 + $0x188] sm:$0xff] %v404
                %v406 = vld [vmem:[%s304 + $0x310] sm:$0xff]
                %407 = vst [vmem:[%s305 + $0x190] sm:$0xff] %v406
                %v408 = vld [vmem:[%s304 + $0x318] sm:$0xff]
                %409 = vst [vmem:[%s305 + $0x198] sm:$0xff] %v408
                %v410 = vld [vmem:[%s304 + $0x320] sm:$0xff]
                %411 = vst [vmem:[%s305 + $0x1a0] sm:$0xff] %v410
                %v412 = vld [vmem:[%s304 + $0x328] sm:$0xff]
                %413 = vst [vmem:[%s305 + $0x1a8] sm:$0xff] %v412
                %v414 = vld [vmem:[%s304 + $0x330] sm:$0xff]
                %415 = vst [vmem:[%s305 + $0x1b0] sm:$0xff] %v414
                %v416 = vld [vmem:[%s304 + $0x338] sm:$0xff]
                %417 = vst [vmem:[%s305 + $0x1b8] sm:$0xff] %v416
                %v418 = vld [vmem:[%s304 + $0x340] sm:$0xff]
                %419 = vst [vmem:[%s305 + $0x1c0] sm:$0xff] %v418
                %v420 = vld [vmem:[%s304 + $0x348] sm:$0xff]
                %421 = vst [vmem:[%s305 + $0x1c8] sm:$0xff] %v420
                %v422 = vld [vmem:[%s304 + $0x350] sm:$0xff]
                %423 = vst [vmem:[%s305 + $0x1d0] sm:$0xff] %v422
                %v424 = vld [vmem:[%s304 + $0x358] sm:$0xff]
                %425 = vst [vmem:[%s305 + $0x1d8] sm:$0xff] %v424
                %v426 = vld [vmem:[%s304 + $0x360] sm:$0xff]
                %427 = vst [vmem:[%s305 + $0x1e0] sm:$0xff] %v426
                %v428 = vld [vmem:[%s304 + $0x368] sm:$0xff]
                %429 = vst [vmem:[%s305 + $0x1e8] sm:$0xff] %v428
                %v430 = vld [vmem:[%s304 + $0x370] sm:$0xff]
                %431 = vst [vmem:[%s305 + $0x1f0] sm:$0xff] %v430
                %v432 = vld [vmem:[%s304 + $0x378] sm:$0xff]
                %433 = vst [vmem:[%s305 + $0x1f8] sm:$0xff] %v432
              $region69: #{tpu_custom_call.1} parent=63 // loop_footer
                %s303 = sadd.s32 1, %s299
              $region70: #{tpu_custom_call.1} parent=63 // loop_footer_branch
                %298 = sbr.rel target = $region66
              $region71: #{tpu_custom_call.1} parent=63 // loop_exit
                _
            $region64: #{tpu_custom_call.1} parent=55 // pred_fallthru
              _
          $region56: #{tpu_custom_call.1} parent=51 // pred_fallthru
            _
          %574 = vnop
        $region52: #{tpu_custom_call.1} parent=47 // pred_fallthru
          _
      $region48: #{tpu_custom_call.1} parent=5 // pred_fallthru
        _
      %p575 = scmp.le.s32.totalorder 1, %s18
      %p576 = scmp.lt.s32.totalorder %s18, 3
      %p577 = pnand %p575, %p576
      %p578 = pneg %p577
      // Predicated region
      $region87: #{tpu_custom_call.1} parent=5 // pred_check
        _
      $region88: #{tpu_custom_call.1} parent=5 // pred_check_branch
        %580 = sbr.rel (%p577) target = $region90
      $region89: #{tpu_custom_call.1} parent=5 // pred_region
        %s581 = ssub.s32 %s18, 1
        %s582 = sand.u32 %s31, 1
        %s583 = sand.u32 %s31, 1
        %s584 = smul.addr %s583, 512
        %s585 = scalar_lea.vmem [#allocation2], %s584
        // Predicated region
        $region91: #{tpu_custom_call.1} parent=89 // pred_check
          %p586 = pneg %p44
        $region92: #{tpu_custom_call.1} parent=89 // pred_check_branch
          %588 = sbr.rel (%p586) target = $region94
        $region93: #{tpu_custom_call.1} parent=89 // pred_region
          _
        $region94: #{tpu_custom_call.1} parent=89 // pred_fallthru
          _
        %s589 = sand.u32 %s31, 1
        %s590 = sand.u32 %s31, 1
        %s591 = smul.addr %s590, 512
        %s592 = scalar_lea.vmem [#allocation2], %s591
        %p593 = pneg %p44
        %p594 = pneg %p41
        %p595 = pneg %p65
        %p596 = pneg %p62
        %p597 = pneg %p86
        %p598 = pneg %p83
        %p599 = pneg %p107
        %p600 = pneg %p104
        %p601 = pneg %p128
        %p602 = pneg %p125
        %p603 = pneg %p149
        %p604 = pneg %p146
        %p605 = pneg %p170
        %p606 = pneg %p167
        %p607 = pneg %p191
        %p608 = pneg %p188
        %p609 = pneg %p212
        %p610 = pneg %p209
        %p611 = pneg %p238
        %p612 = pneg %p235
        %s613 = sand.u32 %s225, 1
        %s614 = scalar_lea.sflag [#allocation4], %s613
        %s615 = sand.u32 %s225, 1
        %s616 = smul.addr %s615, 128
        %s617 = scalar_lea.vmem [#allocation3], %s616
        %s618 = smul.u32 16, %s23
        %s619 = smul.u32 16, %s23
        %v620 = vld [vmem:[%s2] sm:$0xff]
        %v621 = vld [vmem:[%s2 + $0x8] sm:$0xff]
        %v622 = vld [vmem:[%s2 + $0x10] sm:$0xff]
        %v623 = vld [vmem:[%s2 + $0x18] sm:$0xff]
        %v624 = vld [vmem:[%s3] sm:$0xf]
        %v625 = vld [vmem:[%s4] sm:$0x1]
        %v626 = vld [vmem:[%s5] sm:$0xff]
        %v627 = vld [vmem:[%s5 + $0x8] sm:$0xff]
        %v628 = vld [vmem:[%s5 + $0x10] sm:$0xff]
        %v629 = vld [vmem:[%s5 + $0x18] sm:$0xff]
        %v630 = vld [vmem:[%s5 + $0x20] sm:$0xff]
        %v631 = vld [vmem:[%s5 + $0x28] sm:$0xff]
        %v632 = vld [vmem:[%s5 + $0x30] sm:$0xff]
        %v633 = vld [vmem:[%s5 + $0x38] sm:$0xff]
        %v634 = vld [vmem:[%s6] sm:$0x1]
        %v635 = vld [vmem:[%s7] sm:$0xff]
        %v636 = vld [vmem:[%s7 + $0x8] sm:$0xff]
        %v637 = vld [vmem:[%s7 + $0x10] sm:$0xff]
        %v638 = vld [vmem:[%s7 + $0x18] sm:$0xff]
        %v639 = vld [vmem:[%s7 + $0x20] sm:$0xff]
        %v640 = vld [vmem:[%s7 + $0x28] sm:$0xff]
        %v641 = vld [vmem:[%s7 + $0x30] sm:$0xff]
        %v642 = vld [vmem:[%s7 + $0x38] sm:$0xff]
        %v643 = vld [vmem:[%s8] sm:$0x1]
        %v644 = vld [vmem:[%s1] sm:$0x1]
        %v646 = vlaneseq
        %v647 = vshrl.u32 %v646, 7
        %v648 = vsub.s32 0, %v647
        %v649 = vrot.slane %v644, %v648
        %v650 = vld [vmem:[%s585] sm:$0xff]
        %v651 = vld [vmem:[%s585 + $0x8] sm:$0xff]
        %v652 = vld [vmem:[%s585 + $0x10] sm:$0xff]
        %v653 = vld [vmem:[%s585 + $0x18] sm:$0xff]
        %v654 = vld [vmem:[%s585 + $0x20] sm:$0xff]
        %v655 = vld [vmem:[%s585 + $0x28] sm:$0xff]
        %v656 = vld [vmem:[%s585 + $0x30] sm:$0xff]
        %v657 = vld [vmem:[%s585 + $0x38] sm:$0xff]
        %v658 = vld [vmem:[%s585 + $0x40] sm:$0xff]
        %v659 = vld [vmem:[%s585 + $0x48] sm:$0xff]
        %v660 = vld [vmem:[%s585 + $0x50] sm:$0xff]
        %v661 = vld [vmem:[%s585 + $0x58] sm:$0xff]
        %v662 = vld [vmem:[%s585 + $0x60] sm:$0xff]
        %v663 = vld [vmem:[%s585 + $0x68] sm:$0xff]
        %v664 = vld [vmem:[%s585 + $0x70] sm:$0xff]
        %v665 = vld [vmem:[%s585 + $0x78] sm:$0xff]
        %vm666 = vcmask 31744
        %v668 = vsel %vm666, %v650, 0
        %v671 = vsel %vm666, %v651, 0
        %v674 = vsel %vm666, %v652, 0
        %v677 = vsel %vm666, %v653, 0
        %v680 = vsel %vm666, %v654, 0
        %v683 = vsel %vm666, %v655, 0
        %v686 = vsel %vm666, %v656, 0
        %v689 = vsel %vm666, %v657, 0
        %v692 = vsel %vm666, %v658, 0
        %v695 = vsel %vm666, %v659, 0
        %v698 = vsel %vm666, %v660, 0
        %v701 = vsel %vm666, %v661, 0
        %v704 = vsel %vm666, %v662, 0
        %v707 = vsel %vm666, %v663, 0
        %v710 = vsel %vm666, %v664, 0
        %v713 = vsel %vm666, %v665, 0
        %vm715 = vcmask 1043456
        %v717 = vsel %vm715, %v624, 0
        %719 = vmatprep.subr.mxu0 0.0
        %720 = vmatpush1.msra.mxu0 %v717
        %721 = vmatprep.subr.mxu0 0.0
        %722 = vmatpush1.msra.mxu0 0.0
        %723 = vmatprep.subr.mxu0 0.0
        %724 = vmatpush1.msra.mxu0 0.0
        %725 = vmatprep.subr.mxu0 0.0
        %726 = vmatpush1.msra.mxu0 0.0
        %727 = vmatprep.subr.mxu0 0.0
        %728 = vmatpush1.msra.mxu0 0.0
        %729 = vmatprep.subr.mxu0 0.0
        %730 = vmatpush1.msra.mxu0 0.0
        %731 = vmatprep.subr.mxu0 0.0
        %732 = vmatpush1.msra.mxu0 0.0
        %733 = vmatprep.subr.mxu0 0.0
        %734 = vmatpush1.msra.mxu0 0.0
        %735 = vmatprep.subr.mxu0 0.0
        %736 = vmatpush1.msra.mxu0 0.0
        %737 = vmatprep.subr.mxu0 0.0
        %738 = vmatpush1.msra.mxu0 0.0
        %739 = vmatprep.subr.mxu0 0.0
        %740 = vmatpush1.msra.mxu0 0.0
        %741 = vmatprep.subr.mxu0 0.0
        %742 = vmatpush1.msra.mxu0 0.0
        %743 = vmatprep.subr.mxu0 0.0
        %744 = vmatpush1.msra.mxu0 0.0
        %745 = vmatprep.subr.mxu0 0.0
        %746 = vmatpush1.msra.mxu0 0.0
        %747 = vmatprep.subr.mxu0 0.0
        %748 = vmatpush1.msra.mxu0 0.0
        %749 = vmatprep.subr.mxu0 0.0
        %750 = vmatpush1.msra.mxu0 0.0
        %751 = vmatprep.subr.mxu0 0.0
        %752 = vmatpush1.msra.mxu0 0.0
        %753 = vmatprep.subr.mxu0 0.0
        %754 = vmatpush1.msra.mxu0 0.0
        %755 = vmatprep.subr.mxu0 0.0
        %756 = vmatpush1.msra.mxu0 0.0
        %757 = vmatprep.subr.mxu0 0.0
        %758 = vmatpush1.msra.mxu0 0.0
        %759 = vmatprep.subr.mxu0 0.0
        %760 = vmatpush1.msra.mxu0 0.0
        %761 = vmatprep.subr.mxu0 0.0
        %762 = vmatpush1.msra.mxu0 0.0
        %763 = vmatprep.subr.mxu0 0.0
        %764 = vmatpush1.msra.mxu0 0.0
        %765 = vmatprep.subr.mxu0 0.0
        %766 = vmatpush1.msra.mxu0 0.0
        %767 = vmatprep.subr.mxu0 0.0
        %768 = vmatpush1.msra.mxu0 0.0
        %769 = vmatprep.subr.mxu0 0.0
        %770 = vmatpush1.msra.mxu0 0.0
        %771 = vmatprep.subr.mxu0 0.0
        %772 = vmatpush1.msra.mxu0 0.0
        %773 = vmatprep.subr.mxu0 0.0
        %774 = vmatpush1.msra.mxu0 0.0
        %775 = vmatprep.subr.mxu0 0.0
        %776 = vmatpush1.msra.mxu0 0.0
        %777 = vmatprep.subr.mxu0 0.0
        %778 = vmatpush1.msra.mxu0 0.0
        %779 = vmatprep.subr.mxu0 0.0
        %780 = vmatpush1.msra.mxu0 0.0
        %781 = vmatprep.subr.mxu0 0.0
        %782 = vmatpush1.msra.mxu0 0.0
        %783 = vmatprep.mubr.f32.mxu0 0.0
        %784 = vmatmul.mubr.f32.gmra.mrb[0].mxu0 %v668
        %v785 = vpop.f32.mrb[0].mxu0
        %v786 = vadd.f32 0.0, %v785
        %v787 = vpop.f32.mrb[0].mxu0
        %788 = vmatprep.mubr.f32.mxu0 0.0
        %789 = vmatmul.mubr.f32.gmra.mrb[0].mxu0 %v671
        %v790 = vpop.f32.mrb[0].mxu0
        %v791 = vadd.f32 0.0, %v790
        %v792 = vpop.f32.mrb[0].mxu0
        %793 = vmatprep.mubr.f32.mxu0 0.0
        %794 = vmatmul.mubr.f32.gmra.mrb[0].mxu0 %v674
        %v795 = vpop.f32.mrb[0].mxu0
        %v796 = vadd.f32 0.0, %v795
        %v797 = vpop.f32.mrb[0].mxu0
        %798 = vmatprep.mubr.f32.mxu0 0.0
        %799 = vmatmul.mubr.f32.gmra.mrb[0].mxu0 %v677
        %v800 = vpop.f32.mrb[0].mxu0
        %v801 = vadd.f32 0.0, %v800
        %v802 = vpop.f32.mrb[0].mxu0
        %803 = vmatprep.mubr.f32.mxu0 0.0
        %804 = vmatmul.mubr.f32.gmra.mrb[0].mxu0 %v680
        %v805 = vpop.f32.mrb[0].mxu0
        %v806 = vadd.f32 0.0, %v805
        %v807 = vpop.f32.mrb[0].mxu0
        %808 = vmatprep.mubr.f32.mxu0 0.0
        %809 = vmatmul.mubr.f32.gmra.mrb[0].mxu0 %v683
        %v810 = vpop.f32.mrb[0].mxu0
        %v811 = vadd.f32 0.0, %v810
        %v812 = vpop.f32.mrb[0].mxu0
        %813 = vmatprep.mubr.f32.mxu0 0.0
        %814 = vmatmul.mubr.f32.gmra.mrb[0].mxu0 %v686
        %v815 = vpop.f32.mrb[0].mxu0
        %v816 = vadd.f32 0.0, %v815
        %v817 = vpop.f32.mrb[0].mxu0
        %818 = vmatprep.mubr.f32.mxu0 0.0
        %819 = vmatmul.mubr.f32.gmra.mrb[0].mxu0 %v689
        %v820 = vpop.f32.mrb[0].mxu0
        %v821 = vadd.f32 0.0, %v820
        %v822 = vpop.f32.mrb[0].mxu0
        %823 = vmatprep.mubr.f32.mxu0 0.0
        %824 = vmatmul.mubr.f32.gmra.mrb[0].mxu0 %v692
        %v825 = vpop.f32.mrb[0].mxu0
        %v826 = vadd.f32 0.0, %v825
        %v827 = vpop.f32.mrb[0].mxu0
        %828 = vmatprep.mubr.f32.mxu0 0.0
        %829 = vmatmul.mubr.f32.gmra.mrb[0].mxu0 %v695
        %v830 = vpop.f32.mrb[0].mxu0
        %v831 = vadd.f32 0.0, %v830
        %v832 = vpop.f32.mrb[0].mxu0
        %833 = vmatprep.mubr.f32.mxu0 0.0
        %834 = vmatmul.mubr.f32.gmra.mrb[0].mxu0 %v698
        %v835 = vpop.f32.mrb[0].mxu0
        %v836 = vadd.f32 0.0, %v835
        %v837 = vpop.f32.mrb[0].mxu0
        %838 = vmatprep.mubr.f32.mxu0 0.0
        %839 = vmatmul.mubr.f32.gmra.mrb[0].mxu0 %v701
        %v840 = vpop.f32.mrb[0].mxu0
        %v841 = vadd.f32 0.0, %v840
        %v842 = vpop.f32.mrb[0].mxu0
        %843 = vmatprep.mubr.f32.mxu0 0.0
        %844 = vmatmul.mubr.f32.gmra.mrb[0].mxu0 %v704
        %v845 = vpop.f32.mrb[0].mxu0
        %v846 = vadd.f32 0.0, %v845
        %v847 = vpop.f32.mrb[0].mxu0
        %848 = vmatprep.mubr.f32.mxu0 0.0
        %849 = vmatmul.mubr.f32.gmra.mrb[0].mxu0 %v707
        %v850 = vpop.f32.mrb[0].mxu0
        %v851 = vadd.f32 0.0, %v850
        %v852 = vpop.f32.mrb[0].mxu0
        %853 = vmatprep.mubr.f32.mxu0 0.0
        %854 = vmatmul.mubr.f32.gmra.mrb[0].mxu0 %v710
        %v855 = vpop.f32.mrb[0].mxu0
        %v856 = vadd.f32 0.0, %v855
        %v857 = vpop.f32.mrb[0].mxu0
        %858 = vmatprep.mubr.f32.mxu0 0.0
        %859 = vmatmul.mubr.f32.gmra.mrb[0].mxu0 %v713
        %v860 = vpop.f32.mrb[0].mxu0
        %v861 = vadd.f32 0.0, %v860
        %v862 = vpop.f32.mrb[0].mxu0
        %863 = vdwg.mxu0
        %vm864 = vcmask 261120
        %v865 = vsel %vm864, %v649, 0
        %867 = vmatprep.subr.mxu0 0.0
        %868 = vmatpush1.msra.mxu0 %v620
        %869 = vmatprep.subr.mxu0 0.0
        %870 = vmatpush1.msra.mxu0 %v621
        %871 = vmatprep.subr.mxu0 0.0
        %872 = vmatpush1.msra.mxu0 %v622
        %873 = vmatprep.subr.mxu0 0.0
        %874 = vmatpush1.msra.mxu0 %v623
        %875 = vmatprep.subr.mxu0 0.0
        %876 = vmatpush1.msra.mxu0 0.0
        %877 = vmatprep.subr.mxu0 0.0
        %878 = vmatpush1.msra.mxu0 0.0
        %879 = vmatprep.subr.mxu0 0.0
        %880 = vmatpush1.msra.mxu0 0.0
        %881 = vmatprep.subr.mxu0 0.0
        %882 = vmatpush1.msra.mxu0 0.0
        %883 = vmatprep.subr.mxu0 0.0
        %884 = vmatpush1.msra.mxu0 0.0
        %885 = vmatprep.subr.mxu0 0.0
        %886 = vmatpush1.msra.mxu0 0.0
        %887 = vmatprep.subr.mxu0 0.0
        %888 = vmatpush1.msra.mxu0 0.0
        %889 = vmatprep.subr.mxu0 0.0
        %890 = vmatpush1.msra.mxu0 0.0
        %891 = vmatprep.subr.mxu0 0.0
        %892 = vmatpush1.msra.mxu0 0.0
        %893 = vmatprep.subr.mxu0 0.0
        %894 = vmatpush1.msra.mxu0 0.0
        %895 = vmatprep.subr.mxu0 0.0
        %896 = vmatpush1.msra.mxu0 0.0
        %897 = vmatprep.subr.mxu0 0.0
        %898 = vmatpush1.msra.mxu0 0.0
        %899 = vmatprep.subr.mxu0 0.0
        %900 = vmatpush1.msra.mxu0 0.0
        %901 = vmatprep.subr.mxu0 0.0
        %902 = vmatpush1.msra.mxu0 0.0
        %903 = vmatprep.subr.mxu0 0.0
        %904 = vmatpush1.msra.mxu0 0.0
        %905 = vmatprep.subr.mxu0 0.0
        %906 = vmatpush1.msra.mxu0 0.0
        %907 = vmatprep.subr.mxu0 0.0
        %908 = vmatpush1.msra.mxu0 0.0
        %909 = vmatprep.subr.mxu0 0.0
        %910 = vmatpush1.msra.mxu0 0.0
        %911 = vmatprep.subr.mxu0 0.0
        %912 = vmatpush1.msra.mxu0 0.0
        %913 = vmatprep.subr.mxu0 0.0
        %914 = vmatpush1.msra.mxu0 0.0
        %915 = vmatprep.subr.mxu0 0.0
        %916 = vmatpush1.msra.mxu0 0.0
        %917 = vmatprep.subr.mxu0 0.0
        %918 = vmatpush1.msra.mxu0 0.0
        %919 = vmatprep.subr.mxu0 0.0
        %920 = vmatpush1.msra.mxu0 0.0
        %921 = vmatprep.subr.mxu0 0.0
        %922 = vmatpush1.msra.mxu0 0.0
        %923 = vmatprep.subr.mxu0 0.0
        %924 = vmatpush1.msra.mxu0 0.0
        %925 = vmatprep.subr.mxu0 0.0
        %926 = vmatpush1.msra.mxu0 0.0
        %927 = vmatprep.subr.mxu0 0.0
        %928 = vmatpush1.msra.mxu0 0.0
        %929 = vmatprep.subr.mxu0 0.0
        %930 = vmatpush1.msra.mxu0 0.0
        %931 = vmatprep.mubr.f32.mxu0 0.0
        %932 = vmatmul.mubr.f32.gmra.mrb[0].mxu0 %v865
        %v933 = vpop.f32.mrb[0].mxu0
        %v934 = vadd.f32 %v786, %v933
        %v935 = vpop.f32.mrb[0].mxu0
        %936 = vmatprep.mubr.f32.mxu0 0.0
        %937 = vmatmul.mubr.f32.gmra.mrb[0].mxu0 %v865
        %v938 = vpop.f32.mrb[0].mxu0
        %v939 = vadd.f32 %v791, %v938
        %v940 = vpop.f32.mrb[0].mxu0
        %941 = vmatprep.mubr.f32.mxu0 0.0
        %942 = vmatmul.mubr.f32.gmra.mrb[0].mxu0 %v865
        %v943 = vpop.f32.mrb[0].mxu0
        %v944 = vadd.f32 %v796, %v943
        %v945 = vpop.f32.mrb[0].mxu0
        %946 = vmatprep.mubr.f32.mxu0 0.0
        %947 = vmatmul.mubr.f32.gmra.mrb[0].mxu0 %v865
        %v948 = vpop.f32.mrb[0].mxu0
        %v949 = vadd.f32 %v801, %v948
        %v950 = vpop.f32.mrb[0].mxu0
        %951 = vmatprep.mubr.f32.mxu0 0.0
        %952 = vmatmul.mubr.f32.gmra.mrb[0].mxu0 %v865
        %v953 = vpop.f32.mrb[0].mxu0
        %v954 = vadd.f32 %v806, %v953
        %v955 = vpop.f32.mrb[0].mxu0
        %956 = vmatprep.mubr.f32.mxu0 0.0
        %957 = vmatmul.mubr.f32.gmra.mrb[0].mxu0 %v865
        %v958 = vpop.f32.mrb[0].mxu0
        %v959 = vadd.f32 %v811, %v958
        %v960 = vpop.f32.mrb[0].mxu0
        %961 = vmatprep.mubr.f32.mxu0 0.0
        %962 = vmatmul.mubr.f32.gmra.mrb[0].mxu0 %v865
        %v963 = vpop.f32.mrb[0].mxu0
        %v964 = vadd.f32 %v816, %v963
        %v965 = vpop.f32.mrb[0].mxu0
        %966 = vmatprep.mubr.f32.mxu0 0.0
        %967 = vmatmul.mubr.f32.gmra.mrb[0].mxu0 %v865
        %v968 = vpop.f32.mrb[0].mxu0
        %v969 = vadd.f32 %v821, %v968
        %v970 = vpop.f32.mrb[0].mxu0
        %971 = vmatprep.mubr.f32.mxu0 0.0
        %972 = vmatmul.mubr.f32.gmra.mrb[0].mxu0 %v865
        %v973 = vpop.f32.mrb[0].mxu0
        %v974 = vadd.f32 %v826, %v973
        %v975 = vpop.f32.mrb[0].mxu0
        %976 = vmatprep.mubr.f32.mxu0 0.0
        %977 = vmatmul.mubr.f32.gmra.mrb[0].mxu0 %v865
        %v978 = vpop.f32.mrb[0].mxu0
        %v979 = vadd.f32 %v831, %v978
        %v980 = vpop.f32.mrb[0].mxu0
        %981 = vmatprep.mubr.f32.mxu0 0.0
        %982 = vmatmul.mubr.f32.gmra.mrb[0].mxu0 %v865
        %v983 = vpop.f32.mrb[0].mxu0
        %v984 = vadd.f32 %v836, %v983
        %v985 = vpop.f32.mrb[0].mxu0
        %986 = vmatprep.mubr.f32.mxu0 0.0
        %987 = vmatmul.mubr.f32.gmra.mrb[0].mxu0 %v865
        %v988 = vpop.f32.mrb[0].mxu0
        %v989 = vadd.f32 %v841, %v988
        %v990 = vpop.f32.mrb[0].mxu0
        %991 = vmatprep.mubr.f32.mxu0 0.0
        %992 = vmatmul.mubr.f32.gmra.mrb[0].mxu0 %v865
        %v993 = vpop.f32.mrb[0].mxu0
        %v994 = vadd.f32 %v846, %v993
        %v995 = vpop.f32.mrb[0].mxu0
        %996 = vmatprep.mubr.f32.mxu0 0.0
        %997 = vmatmul.mubr.f32.gmra.mrb[0].mxu0 %v865
        %v998 = vpop.f32.mrb[0].mxu0
        %v999 = vadd.f32 %v851, %v998
        %v1000 = vpop.f32.mrb[0].mxu0
        %1001 = vmatprep.mubr.f32.mxu0 0.0
        %1002 = vmatmul.mubr.f32.gmra.mrb[0].mxu0 %v865
        %v1003 = vpop.f32.mrb[0].mxu0
        %v1004 = vadd.f32 %v856, %v1003
        %v1005 = vpop.f32.mrb[0].mxu0
        %1006 = vmatprep.mubr.f32.mxu0 0.0
        %1007 = vmatmul.mubr.f32.gmra.mrb[0].mxu0 %v865
        %v1008 = vpop.f32.mrb[0].mxu0
        %v1009 = vadd.f32 %v861, %v1008
        %v1010 = vpop.f32.mrb[0].mxu0
        %1011 = vdwg.mxu0
        %v1013 = vlaneseq
        %v1014 = vshrl.u32 %v1013, 7
        %v1015 = vsub.s32 0, %v1014
        %v1016 = vrot.slane %v625, %v1015
        %v1018 = vadd.f32 %v934, %v1016
        %v1019 = vadd.f32 %v939, %v1016
        %v1020 = vadd.f32 %v944, %v1016
        %v1021 = vadd.f32 %v949, %v1016
        %v1022 = vadd.f32 %v954, %v1016
        %v1023 = vadd.f32 %v959, %v1016
        %v1024 = vadd.f32 %v964, %v1016
        %v1025 = vadd.f32 %v969, %v1016
        %v1026 = vadd.f32 %v974, %v1016
        %v1027 = vadd.f32 %v979, %v1016
        %v1028 = vadd.f32 %v984, %v1016
        %v1029 = vadd.f32 %v989, %v1016
        %v1030 = vadd.f32 %v994, %v1016
        %v1031 = vadd.f32 %v999, %v1016
        %v1032 = vadd.f32 %v1004, %v1016
        %v1033 = vadd.f32 %v1009, %v1016
        %v1034 = vmax.f32 %v1018, 0.0
        %v1035 = vmax.f32 %v1019, 0.0
        %v1036 = vmax.f32 %v1020, 0.0
        %v1037 = vmax.f32 %v1021, 0.0
        %v1038 = vmax.f32 %v1022, 0.0
        %v1039 = vmax.f32 %v1023, 0.0
        %v1040 = vmax.f32 %v1024, 0.0
        %v1041 = vmax.f32 %v1025, 0.0
        %v1042 = vmax.f32 %v1026, 0.0
        %v1043 = vmax.f32 %v1027, 0.0
        %v1044 = vmax.f32 %v1028, 0.0
        %v1045 = vmax.f32 %v1029, 0.0
        %v1046 = vmax.f32 %v1030, 0.0
        %v1047 = vmax.f32 %v1031, 0.0
        %v1048 = vmax.f32 %v1032, 0.0
        %v1049 = vmax.f32 %v1033, 0.0
        %v1051 = vlaneseq
        %v1052 = vshrl.u32 %v1051, 7
        %v1053 = vsub.s32 0, %v1052
        %v1054 = vrot.slane %v634, %v1053
        %vm1056 = vcmask 523264
        %v1058 = vsel %vm1056, %v1034, 0
        %v1061 = vsel %vm1056, %v1035, 0
        %v1064 = vsel %vm1056, %v1036, 0
        %v1067 = vsel %vm1056, %v1037, 0
        %v1070 = vsel %vm1056, %v1038, 0
        %v1073 = vsel %vm1056, %v1039, 0
        %v1076 = vsel %vm1056, %v1040, 0
        %v1079 = vsel %vm1056, %v1041, 0
        %v1082 = vsel %vm1056, %v1042, 0
        %v1085 = vsel %vm1056, %v1043, 0
        %v1088 = vsel %vm1056, %v1044, 0
        %v1091 = vsel %vm1056, %v1045, 0
        %v1094 = vsel %vm1056, %v1046, 0
        %v1097 = vsel %vm1056, %v1047, 0
        %v1100 = vsel %vm1056, %v1048, 0
        %v1103 = vsel %vm1056, %v1049, 0
        %1105 = vmatprep.subr.mxu0 0.0
        %1106 = vmatpush1.msra.mxu0 %v626
        %1107 = vmatprep.subr.mxu0 0.0
        %1108 = vmatpush1.msra.mxu0 %v627
        %1109 = vmatprep.subr.mxu0 0.0
        %1110 = vmatpush1.msra.mxu0 %v628
        %1111 = vmatprep.subr.mxu0 0.0
        %1112 = vmatpush1.msra.mxu0 %v629
        %1113 = vmatprep.subr.mxu0 0.0
        %1114 = vmatpush1.msra.mxu0 %v630
        %1115 = vmatprep.subr.mxu0 0.0
        %1116 = vmatpush1.msra.mxu0 %v631
        %1117 = vmatprep.subr.mxu0 0.0
        %1118 = vmatpush1.msra.mxu0 %v632
        %1119 = vmatprep.subr.mxu0 0.0
        %1120 = vmatpush1.msra.mxu0 %v633
        %1121 = vmatprep.subr.mxu0 0.0
        %1122 = vmatpush1.msra.mxu0 0.0
        %1123 = vmatprep.subr.mxu0 0.0
        %1124 = vmatpush1.msra.mxu0 0.0
        %1125 = vmatprep.subr.mxu0 0.0
        %1126 = vmatpush1.msra.mxu0 0.0
        %1127 = vmatprep.subr.mxu0 0.0
        %1128 = vmatpush1.msra.mxu0 0.0
        %1129 = vmatprep.subr.mxu0 0.0
        %1130 = vmatpush1.msra.mxu0 0.0
        %1131 = vmatprep.subr.mxu0 0.0
        %1132 = vmatpush1.msra.mxu0 0.0
        %1133 = vmatprep.subr.mxu0 0.0
        %1134 = vmatpush1.msra.mxu0 0.0
        %1135 = vmatprep.subr.mxu0 0.0
        %1136 = vmatpush1.msra.mxu0 0.0
        %1137 = vmatprep.subr.mxu0 0.0
        %1138 = vmatpush1.msra.mxu0 0.0
        %1139 = vmatprep.subr.mxu0 0.0
        %1140 = vmatpush1.msra.mxu0 0.0
        %1141 = vmatprep.subr.mxu0 0.0
        %1142 = vmatpush1.msra.mxu0 0.0
        %1143 = vmatprep.subr.mxu0 0.0
        %1144 = vmatpush1.msra.mxu0 0.0
        %1145 = vmatprep.subr.mxu0 0.0
        %1146 = vmatpush1.msra.mxu0 0.0
        %1147 = vmatprep.subr.mxu0 0.0
        %1148 = vmatpush1.msra.mxu0 0.0
        %1149 = vmatprep.subr.mxu0 0.0
        %1150 = vmatpush1.msra.mxu0 0.0
        %1151 = vmatprep.subr.mxu0 0.0
        %1152 = vmatpush1.msra.mxu0 0.0
        %1153 = vmatprep.subr.mxu0 0.0
        %1154 = vmatpush1.msra.mxu0 0.0
        %1155 = vmatprep.subr.mxu0 0.0
        %1156 = vmatpush1.msra.mxu0 0.0
        %1157 = vmatprep.subr.mxu0 0.0
        %1158 = vmatpush1.msra.mxu0 0.0
        %1159 = vmatprep.subr.mxu0 0.0
        %1160 = vmatpush1.msra.mxu0 0.0
        %1161 = vmatprep.subr.mxu0 0.0
        %1162 = vmatpush1.msra.mxu0 0.0
        %1163 = vmatprep.subr.mxu0 0.0
        %1164 = vmatpush1.msra.mxu0 0.0
        %1165 = vmatprep.subr.mxu0 0.0
        %1166 = vmatpush1.msra.mxu0 0.0
        %1167 = vmatprep.subr.mxu0 0.0
        %1168 = vmatpush1.msra.mxu0 0.0
        %1169 = vmatprep.mubr.f32.mxu0 0.0
        %1170 = vmatmul.mubr.f32.gmra.mrb[0].mxu0 %v1058
        %v1171 = vpop.f32.mrb[0].mxu0
        %v1172 = vadd.f32 %v1054, %v1171
        %v1173 = vpop.f32.mrb[0].mxu0
        %1174 = vmatprep.mubr.f32.mxu0 0.0
        %1175 = vmatmul.mubr.f32.gmra.mrb[0].mxu0 %v1061
        %v1176 = vpop.f32.mrb[0].mxu0
        %v1177 = vadd.f32 %v1054, %v1176
        %v1178 = vpop.f32.mrb[0].mxu0
        %1179 = vmatprep.mubr.f32.mxu0 0.0
        %1180 = vmatmul.mubr.f32.gmra.mrb[0].mxu0 %v1064
        %v1181 = vpop.f32.mrb[0].mxu0
        %v1182 = vadd.f32 %v1054, %v1181
        %v1183 = vpop.f32.mrb[0].mxu0
        %1184 = vmatprep.mubr.f32.mxu0 0.0
        %1185 = vmatmul.mubr.f32.gmra.mrb[0].mxu0 %v1067
        %v1186 = vpop.f32.mrb[0].mxu0
        %v1187 = vadd.f32 %v1054, %v1186
        %v1188 = vpop.f32.mrb[0].mxu0
        %1189 = vmatprep.mubr.f32.mxu0 0.0
        %1190 = vmatmul.mubr.f32.gmra.mrb[0].mxu0 %v1070
        %v1191 = vpop.f32.mrb[0].mxu0
        %v1192 = vadd.f32 %v1054, %v1191
        %v1193 = vpop.f32.mrb[0].mxu0
        %1194 = vmatprep.mubr.f32.mxu0 0.0
        %1195 = vmatmul.mubr.f32.gmra.mrb[0].mxu0 %v1073
        %v1196 = vpop.f32.mrb[0].mxu0
        %v1197 = vadd.f32 %v1054, %v1196
        %v1198 = vpop.f32.mrb[0].mxu0
        %1199 = vmatprep.mubr.f32.mxu0 0.0
        %1200 = vmatmul.mubr.f32.gmra.mrb[0].mxu0 %v1076
        %v1201 = vpop.f32.mrb[0].mxu0
        %v1202 = vadd.f32 %v1054, %v1201
        %v1203 = vpop.f32.mrb[0].mxu0
        %1204 = vmatprep.mubr.f32.mxu0 0.0
        %1205 = vmatmul.mubr.f32.gmra.mrb[0].mxu0 %v1079
        %v1206 = vpop.f32.mrb[0].mxu0
        %v1207 = vadd.f32 %v1054, %v1206
        %v1208 = vpop.f32.mrb[0].mxu0
        %1209 = vmatprep.mubr.f32.mxu0 0.0
        %1210 = vmatmul.mubr.f32.gmra.mrb[0].mxu0 %v1082
        %v1211 = vpop.f32.mrb[0].mxu0
        %v1212 = vadd.f32 %v1054, %v1211
        %v1213 = vpop.f32.mrb[0].mxu0
        %1214 = vmatprep.mubr.f32.mxu0 0.0
        %1215 = vmatmul.mubr.f32.gmra.mrb[0].mxu0 %v1085
        %v1216 = vpop.f32.mrb[0].mxu0
        %v1217 = vadd.f32 %v1054, %v1216
        %v1218 = vpop.f32.mrb[0].mxu0
        %1219 = vmatprep.mubr.f32.mxu0 0.0
        %1220 = vmatmul.mubr.f32.gmra.mrb[0].mxu0 %v1088
        %v1221 = vpop.f32.mrb[0].mxu0
        %v1222 = vadd.f32 %v1054, %v1221
        %v1223 = vpop.f32.mrb[0].mxu0
        %1224 = vmatprep.mubr.f32.mxu0 0.0
        %1225 = vmatmul.mubr.f32.gmra.mrb[0].mxu0 %v1091
        %v1226 = vpop.f32.mrb[0].mxu0
        %v1227 = vadd.f32 %v1054, %v1226
        %v1228 = vpop.f32.mrb[0].mxu0
        %1229 = vmatprep.mubr.f32.mxu0 0.0
        %1230 = vmatmul.mubr.f32.gmra.mrb[0].mxu0 %v1094
        %v1231 = vpop.f32.mrb[0].mxu0
        %v1232 = vadd.f32 %v1054, %v1231
        %v1233 = vpop.f32.mrb[0].mxu0
        %1234 = vmatprep.mubr.f32.mxu0 0.0
        %1235 = vmatmul.mubr.f32.gmra.mrb[0].mxu0 %v1097
        %v1236 = vpop.f32.mrb[0].mxu0
        %v1237 = vadd.f32 %v1054, %v1236
        %v1238 = vpop.f32.mrb[0].mxu0
        %1239 = vmatprep.mubr.f32.mxu0 0.0
        %1240 = vmatmul.mubr.f32.gmra.mrb[0].mxu0 %v1100
        %v1241 = vpop.f32.mrb[0].mxu0
        %v1242 = vadd.f32 %v1054, %v1241
        %v1243 = vpop.f32.mrb[0].mxu0
        %1244 = vmatprep.mubr.f32.mxu0 0.0
        %1245 = vmatmul.mubr.f32.gmra.mrb[0].mxu0 %v1103
        %v1246 = vpop.f32.mrb[0].mxu0
        %v1247 = vadd.f32 %v1054, %v1246
        %v1248 = vpop.f32.mrb[0].mxu0
        %1249 = vdwg.mxu0
        %v1250 = vmax.f32 %v1172, 0.0
        %v1251 = vmax.f32 %v1177, 0.0
        %v1252 = vmax.f32 %v1182, 0.0
        %v1253 = vmax.f32 %v1187, 0.0
        %v1254 = vmax.f32 %v1192, 0.0
        %v1255 = vmax.f32 %v1197, 0.0
        %v1256 = vmax.f32 %v1202, 0.0
        %v1257 = vmax.f32 %v1207, 0.0
        %v1258 = vmax.f32 %v1212, 0.0
        %v1259 = vmax.f32 %v1217, 0.0
        %v1260 = vmax.f32 %v1222, 0.0
        %v1261 = vmax.f32 %v1227, 0.0
        %v1262 = vmax.f32 %v1232, 0.0
        %v1263 = vmax.f32 %v1237, 0.0
        %v1264 = vmax.f32 %v1242, 0.0
        %v1265 = vmax.f32 %v1247, 0.0
        %v1267 = vlaneseq
        %v1268 = vshrl.u32 %v1267, 7
        %v1269 = vsub.s32 0, %v1268
        %v1270 = vrot.slane %v643, %v1269
        %v1273 = vsel %vm1056, %v1250, 0
        %v1276 = vsel %vm1056, %v1251, 0
        %v1279 = vsel %vm1056, %v1252, 0
        %v1282 = vsel %vm1056, %v1253, 0
        %v1285 = vsel %vm1056, %v1254, 0
        %v1288 = vsel %vm1056, %v1255, 0
        %v1291 = vsel %vm1056, %v1256, 0
        %v1294 = vsel %vm1056, %v1257, 0
        %v1297 = vsel %vm1056, %v1258, 0
        %v1300 = vsel %vm1056, %v1259, 0
        %v1303 = vsel %vm1056, %v1260, 0
        %v1306 = vsel %vm1056, %v1261, 0
        %v1309 = vsel %vm1056, %v1262, 0
        %v1312 = vsel %vm1056, %v1263, 0
        %v1315 = vsel %vm1056, %v1264, 0
        %v1318 = vsel %vm1056, %v1265, 0
        %1320 = vmatprep.subr.mxu0 0.0
        %1321 = vmatpush1.msra.mxu0 %v635
        %1322 = vmatprep.subr.mxu0 0.0
        %1323 = vmatpush1.msra.mxu0 %v636
        %1324 = vmatprep.subr.mxu0 0.0
        %1325 = vmatpush1.msra.mxu0 %v637
        %1326 = vmatprep.subr.mxu0 0.0
        %1327 = vmatpush1.msra.mxu0 %v638
        %1328 = vmatprep.subr.mxu0 0.0
        %1329 = vmatpush1.msra.mxu0 %v639
        %1330 = vmatprep.subr.mxu0 0.0
        %1331 = vmatpush1.msra.mxu0 %v640
        %1332 = vmatprep.subr.mxu0 0.0
        %1333 = vmatpush1.msra.mxu0 %v641
        %1334 = vmatprep.subr.mxu0 0.0
        %1335 = vmatpush1.msra.mxu0 %v642
        %1336 = vmatprep.subr.mxu0 0.0
        %1337 = vmatpush1.msra.mxu0 0.0
        %1338 = vmatprep.subr.mxu0 0.0
        %1339 = vmatpush1.msra.mxu0 0.0
        %1340 = vmatprep.subr.mxu0 0.0
        %1341 = vmatpush1.msra.mxu0 0.0
        %1342 = vmatprep.subr.mxu0 0.0
        %1343 = vmatpush1.msra.mxu0 0.0
        %1344 = vmatprep.subr.mxu0 0.0
        %1345 = vmatpush1.msra.mxu0 0.0
        %1346 = vmatprep.subr.mxu0 0.0
        %1347 = vmatpush1.msra.mxu0 0.0
        %1348 = vmatprep.subr.mxu0 0.0
        %1349 = vmatpush1.msra.mxu0 0.0
        %1350 = vmatprep.subr.mxu0 0.0
        %1351 = vmatpush1.msra.mxu0 0.0
        %1352 = vmatprep.subr.mxu0 0.0
        %1353 = vmatpush1.msra.mxu0 0.0
        %1354 = vmatprep.subr.mxu0 0.0
        %1355 = vmatpush1.msra.mxu0 0.0
        %1356 = vmatprep.subr.mxu0 0.0
        %1357 = vmatpush1.msra.mxu0 0.0
        %1358 = vmatprep.subr.mxu0 0.0
        %1359 = vmatpush1.msra.mxu0 0.0
        %1360 = vmatprep.subr.mxu0 0.0
        %1361 = vmatpush1.msra.mxu0 0.0
        %1362 = vmatprep.subr.mxu0 0.0
        %1363 = vmatpush1.msra.mxu0 0.0
        %1364 = vmatprep.subr.mxu0 0.0
        %1365 = vmatpush1.msra.mxu0 0.0
        %1366 = vmatprep.subr.mxu0 0.0
        %1367 = vmatpush1.msra.mxu0 0.0
        %1368 = vmatprep.subr.mxu0 0.0
        %1369 = vmatpush1.msra.mxu0 0.0
        %1370 = vmatprep.subr.mxu0 0.0
        %1371 = vmatpush1.msra.mxu0 0.0
        %1372 = vmatprep.subr.mxu0 0.0
        %1373 = vmatpush1.msra.mxu0 0.0
        %1374 = vmatprep.subr.mxu0 0.0
        %1375 = vmatpush1.msra.mxu0 0.0
        %1376 = vmatprep.subr.mxu0 0.0
        %1377 = vmatpush1.msra.mxu0 0.0
        %1378 = vmatprep.subr.mxu0 0.0
        %1379 = vmatpush1.msra.mxu0 0.0
        %1380 = vmatprep.subr.mxu0 0.0
        %1381 = vmatpush1.msra.mxu0 0.0
        %1382 = vmatprep.subr.mxu0 0.0
        %1383 = vmatpush1.msra.mxu0 0.0
        %1384 = vmatprep.mubr.f32.mxu0 0.0
        %1385 = vmatmul.mubr.f32.gmra.mrb[0].mxu0 %v1273
        %v1386 = vpop.f32.mrb[0].mxu0
        %v1387 = vadd.f32 %v1270, %v1386
        %v1388 = vpop.f32.mrb[0].mxu0
        %1389 = vmatprep.mubr.f32.mxu0 0.0
        %1390 = vmatmul.mubr.f32.gmra.mrb[0].mxu0 %v1276
        %v1391 = vpop.f32.mrb[0].mxu0
        %v1392 = vadd.f32 %v1270, %v1391
        %v1393 = vpop.f32.mrb[0].mxu0
        %1394 = vmatprep.mubr.f32.mxu0 0.0
        %1395 = vmatmul.mubr.f32.gmra.mrb[0].mxu0 %v1279
        %v1396 = vpop.f32.mrb[0].mxu0
        %v1397 = vadd.f32 %v1270, %v1396
        %v1398 = vpop.f32.mrb[0].mxu0
        %1399 = vmatprep.mubr.f32.mxu0 0.0
        %1400 = vmatmul.mubr.f32.gmra.mrb[0].mxu0 %v1282
        %v1401 = vpop.f32.mrb[0].mxu0
        %v1402 = vadd.f32 %v1270, %v1401
        %v1403 = vpop.f32.mrb[0].mxu0
        %1404 = vmatprep.mubr.f32.mxu0 0.0
        %1405 = vmatmul.mubr.f32.gmra.mrb[0].mxu0 %v1285
        %v1406 = vpop.f32.mrb[0].mxu0
        %v1407 = vadd.f32 %v1270, %v1406
        %v1408 = vpop.f32.mrb[0].mxu0
        %1409 = vmatprep.mubr.f32.mxu0 0.0
        %1410 = vmatmul.mubr.f32.gmra.mrb[0].mxu0 %v1288
        %v1411 = vpop.f32.mrb[0].mxu0
        %v1412 = vadd.f32 %v1270, %v1411
        %v1413 = vpop.f32.mrb[0].mxu0
        %1414 = vmatprep.mubr.f32.mxu0 0.0
        %1415 = vmatmul.mubr.f32.gmra.mrb[0].mxu0 %v1291
        %v1416 = vpop.f32.mrb[0].mxu0
        %v1417 = vadd.f32 %v1270, %v1416
        %v1418 = vpop.f32.mrb[0].mxu0
        %1419 = vmatprep.mubr.f32.mxu0 0.0
        %1420 = vmatmul.mubr.f32.gmra.mrb[0].mxu0 %v1294
        %v1421 = vpop.f32.mrb[0].mxu0
        %v1422 = vadd.f32 %v1270, %v1421
        %v1423 = vpop.f32.mrb[0].mxu0
        %1424 = vmatprep.mubr.f32.mxu0 0.0
        %1425 = vmatmul.mubr.f32.gmra.mrb[0].mxu0 %v1297
        %v1426 = vpop.f32.mrb[0].mxu0
        %v1427 = vadd.f32 %v1270, %v1426
        %v1428 = vpop.f32.mrb[0].mxu0
        %1429 = vmatprep.mubr.f32.mxu0 0.0
        %1430 = vmatmul.mubr.f32.gmra.mrb[0].mxu0 %v1300
        %v1431 = vpop.f32.mrb[0].mxu0
        %v1432 = vadd.f32 %v1270, %v1431
        %v1433 = vpop.f32.mrb[0].mxu0
        %1434 = vmatprep.mubr.f32.mxu0 0.0
        %1435 = vmatmul.mubr.f32.gmra.mrb[0].mxu0 %v1303
        %v1436 = vpop.f32.mrb[0].mxu0
        %v1437 = vadd.f32 %v1270, %v1436
        %v1438 = vpop.f32.mrb[0].mxu0
        %1439 = vmatprep.mubr.f32.mxu0 0.0
        %1440 = vmatmul.mubr.f32.gmra.mrb[0].mxu0 %v1306
        %v1441 = vpop.f32.mrb[0].mxu0
        %v1442 = vadd.f32 %v1270, %v1441
        %v1443 = vpop.f32.mrb[0].mxu0
        %1444 = vmatprep.mubr.f32.mxu0 0.0
        %1445 = vmatmul.mubr.f32.gmra.mrb[0].mxu0 %v1309
        %v1446 = vpop.f32.mrb[0].mxu0
        %v1447 = vadd.f32 %v1270, %v1446
        %v1448 = vpop.f32.mrb[0].mxu0
        %1449 = vmatprep.mubr.f32.mxu0 0.0
        %1450 = vmatmul.mubr.f32.gmra.mrb[0].mxu0 %v1312
        %v1451 = vpop.f32.mrb[0].mxu0
        %v1452 = vadd.f32 %v1270, %v1451
        %v1453 = vpop.f32.mrb[0].mxu0
        %1454 = vmatprep.mubr.f32.mxu0 0.0
        %1455 = vmatmul.mubr.f32.gmra.mrb[0].mxu0 %v1315
        %v1456 = vpop.f32.mrb[0].mxu0
        %v1457 = vadd.f32 %v1270, %v1456
        %v1458 = vpop.f32.mrb[0].mxu0
        %1459 = vmatprep.mubr.f32.mxu0 0.0
        %1460 = vmatmul.mubr.f32.gmra.mrb[0].mxu0 %v1318
        %v1461 = vpop.f32.mrb[0].mxu0
        %v1462 = vadd.f32 %v1270, %v1461
        %v1463 = vpop.f32.mrb[0].mxu0
        %1464 = vdwg.mxu0
        %v1465 = vmax.f32 %v1387, 0.0
        %v1466 = vmax.f32 %v1392, 0.0
        %v1467 = vmax.f32 %v1397, 0.0
        %v1468 = vmax.f32 %v1402, 0.0
        %v1469 = vmax.f32 %v1407, 0.0
        %v1470 = vmax.f32 %v1412, 0.0
        %v1471 = vmax.f32 %v1417, 0.0
        %v1472 = vmax.f32 %v1422, 0.0
        %v1473 = vmax.f32 %v1427, 0.0
        %v1474 = vmax.f32 %v1432, 0.0
        %v1475 = vmax.f32 %v1437, 0.0
        %v1476 = vmax.f32 %v1442, 0.0
        %v1477 = vmax.f32 %v1447, 0.0
        %v1478 = vmax.f32 %v1452, 0.0
        %v1479 = vmax.f32 %v1457, 0.0
        %v1480 = vmax.f32 %v1462, 0.0
        %v1481 = vxor.u32 %v1387, 2147483648
        %v1482 = vxor.u32 %v1392, 2147483648
        %v1483 = vxor.u32 %v1397, 2147483648
        %v1484 = vxor.u32 %v1402, 2147483648
        %v1485 = vxor.u32 %v1407, 2147483648
        %v1486 = vxor.u32 %v1412, 2147483648
        %v1487 = vxor.u32 %v1417, 2147483648
        %v1488 = vxor.u32 %v1422, 2147483648
        %v1489 = vxor.u32 %v1427, 2147483648
        %v1490 = vxor.u32 %v1432, 2147483648
        %v1491 = vxor.u32 %v1437, 2147483648
        %v1492 = vxor.u32 %v1442, 2147483648
        %v1493 = vxor.u32 %v1447, 2147483648
        %v1494 = vxor.u32 %v1452, 2147483648
        %v1495 = vxor.u32 %v1457, 2147483648
        %v1496 = vxor.u32 %v1462, 2147483648
        %v1497 = vmul.f32 %v1481, 1.442695
        %v1498 = vpow.pop %v1497
        %v1499 = vmul.f32 %v1482, 1.442695
        %v1500 = vpow.pop %v1499
        %v1501 = vmul.f32 %v1483, 1.442695
        %v1502 = vpow.pop %v1501
        %v1503 = vmul.f32 %v1484, 1.442695
        %v1504 = vpow.pop %v1503
        %v1505 = vmul.f32 %v1485, 1.442695
        %v1506 = vpow.pop %v1505
        %v1507 = vmul.f32 %v1486, 1.442695
        %v1508 = vpow.pop %v1507
        %v1509 = vmul.f32 %v1487, 1.442695
        %v1510 = vpow.pop %v1509
        %v1511 = vmul.f32 %v1488, 1.442695
        %v1512 = vpow.pop %v1511
        %v1513 = vmul.f32 %v1489, 1.442695
        %v1514 = vpow.pop %v1513
        %v1515 = vmul.f32 %v1490, 1.442695
        %v1516 = vpow.pop %v1515
        %v1517 = vmul.f32 %v1491, 1.442695
        %v1518 = vpow.pop %v1517
        %v1519 = vmul.f32 %v1492, 1.442695
        %v1520 = vpow.pop %v1519
        %v1521 = vmul.f32 %v1493, 1.442695
        %v1522 = vpow.pop %v1521
        %v1523 = vmul.f32 %v1494, 1.442695
        %v1524 = vpow.pop %v1523
        %v1525 = vmul.f32 %v1495, 1.442695
        %v1526 = vpow.pop %v1525
        %v1527 = vmul.f32 %v1496, 1.442695
        %v1528 = vpow.pop %v1527
        %v1529 = vadd.f32 %v1498, 1.0
        %v1530 = vadd.f32 %v1500, 1.0
        %v1531 = vadd.f32 %v1502, 1.0
        %v1532 = vadd.f32 %v1504, 1.0
        %v1533 = vadd.f32 %v1506, 1.0
        %v1534 = vadd.f32 %v1508, 1.0
        %v1535 = vadd.f32 %v1510, 1.0
        %v1536 = vadd.f32 %v1512, 1.0
        %v1537 = vadd.f32 %v1514, 1.0
        %v1538 = vadd.f32 %v1516, 1.0
        %v1539 = vadd.f32 %v1518, 1.0
        %v1540 = vadd.f32 %v1520, 1.0
        %v1541 = vadd.f32 %v1522, 1.0
        %v1542 = vadd.f32 %v1524, 1.0
        %v1543 = vadd.f32 %v1526, 1.0
        %v1544 = vadd.f32 %v1528, 1.0
        %v1545 = vrcp.pop %v1529
        %v1546 = vmul.f32 1.0, %v1545
        %v1547 = vrcp.pop %v1530
        %v1548 = vmul.f32 1.0, %v1547
        %v1549 = vrcp.pop %v1531
        %v1550 = vmul.f32 1.0, %v1549
        %v1551 = vrcp.pop %v1532
        %v1552 = vmul.f32 1.0, %v1551
        %v1553 = vrcp.pop %v1533
        %v1554 = vmul.f32 1.0, %v1553
        %v1555 = vrcp.pop %v1534
        %v1556 = vmul.f32 1.0, %v1555
        %v1557 = vrcp.pop %v1535
        %v1558 = vmul.f32 1.0, %v1557
        %v1559 = vrcp.pop %v1536
        %v1560 = vmul.f32 1.0, %v1559
        %v1561 = vrcp.pop %v1537
        %v1562 = vmul.f32 1.0, %v1561
        %v1563 = vrcp.pop %v1538
        %v1564 = vmul.f32 1.0, %v1563
        %v1565 = vrcp.pop %v1539
        %v1566 = vmul.f32 1.0, %v1565
        %v1567 = vrcp.pop %v1540
        %v1568 = vmul.f32 1.0, %v1567
        %v1569 = vrcp.pop %v1541
        %v1570 = vmul.f32 1.0, %v1569
        %v1571 = vrcp.pop %v1542
        %v1572 = vmul.f32 1.0, %v1571
        %v1573 = vrcp.pop %v1543
        %v1574 = vmul.f32 1.0, %v1573
        %v1575 = vrcp.pop %v1544
        %v1576 = vmul.f32 1.0, %v1575
        %s1577 = scalar_lea.vmem %s585, 128 [#allocation2]
        %v1578 = vld [vmem:[%s1577] sm:$0xff]
        %v1579 = vld [vmem:[%s1577 + $0x8] sm:$0xff]
        %v1580 = vld [vmem:[%s1577 + $0x10] sm:$0xff]
        %v1581 = vld [vmem:[%s1577 + $0x18] sm:$0xff]
        %v1582 = vld [vmem:[%s1577 + $0x20] sm:$0xff]
        %v1583 = vld [vmem:[%s1577 + $0x28] sm:$0xff]
        %v1584 = vld [vmem:[%s1577 + $0x30] sm:$0xff]
        %v1585 = vld [vmem:[%s1577 + $0x38] sm:$0xff]
        %v1586 = vld [vmem:[%s1577 + $0x40] sm:$0xff]
        %v1587 = vld [vmem:[%s1577 + $0x48] sm:$0xff]
        %v1588 = vld [vmem:[%s1577 + $0x50] sm:$0xff]
        %v1589 = vld [vmem:[%s1577 + $0x58] sm:$0xff]
        %v1590 = vld [vmem:[%s1577 + $0x60] sm:$0xff]
        %v1591 = vld [vmem:[%s1577 + $0x68] sm:$0xff]
        %v1592 = vld [vmem:[%s1577 + $0x70] sm:$0xff]
        %v1593 = vld [vmem:[%s1577 + $0x78] sm:$0xff]
        %v1595 = vsel %vm666, %v1578, 0
        %v1598 = vsel %vm666, %v1579, 0
        %v1601 = vsel %vm666, %v1580, 0
        %v1604 = vsel %vm666, %v1581, 0
        %v1607 = vsel %vm666, %v1582, 0
        %v1610 = vsel %vm666, %v1583, 0
        %v1613 = vsel %vm666, %v1584, 0
        %v1616 = vsel %vm666, %v1585, 0
        %v1619 = vsel %vm666, %v1586, 0
        %v1622 = vsel %vm666, %v1587, 0
        %v1625 = vsel %vm666, %v1588, 0
        %v1628 = vsel %vm666, %v1589, 0
        %v1631 = vsel %vm666, %v1590, 0
        %v1634 = vsel %vm666, %v1591, 0
        %v1637 = vsel %vm666, %v1592, 0
        %v1640 = vsel %vm666, %v1593, 0
        %1642 = vmatprep.subr.mxu0 0.0
        %1643 = vmatpush1.msra.mxu0 %v717
        %1644 = vmatprep.subr.mxu0 0.0
        %1645 = vmatpush1.msra.mxu0 0.0
        %1646 = vmatprep.subr.mxu0 0.0
        %1647 = vmatpush1.msra.mxu0 0.0
        %1648 = vmatprep.subr.mxu0 0.0
        %1649 = vmatpush1.msra.mxu0 0.0
        %1650 = vmatprep.subr.mxu0 0.0
        %1651 = vmatpush1.msra.mxu0 0.0
        %1652 = vmatprep.subr.mxu0 0.0
        %1653 = vmatpush1.msra.mxu0 0.0
        %1654 = vmatprep.subr.mxu0 0.0
        %1655 = vmatpush1.msra.mxu0 0.0
        %1656 = vmatprep.subr.mxu0 0.0
        %1657 = vmatpush1.msra.mxu0 0.0
        %1658 = vmatprep.subr.mxu0 0.0
        %1659 = vmatpush1.msra.mxu0 0.0
        %1660 = vmatprep.subr.mxu0 0.0
        %1661 = vmatpush1.msra.mxu0 0.0
        %1662 = vmatprep.subr.mxu0 0.0
        %1663 = vmatpush1.msra.mxu0 0.0
        %1664 = vmatprep.subr.mxu0 0.0
        %1665 = vmatpush1.msra.mxu0 0.0
        %1666 = vmatprep.subr.mxu0 0.0
        %1667 = vmatpush1.msra.mxu0 0.0
        %1668 = vmatprep.subr.mxu0 0.0
        %1669 = vmatpush1.msra.mxu0 0.0
        %1670 = vmatprep.subr.mxu0 0.0
        %1671 = vmatpush1.msra.mxu0 0.0
        %1672 = vmatprep.subr.mxu0 0.0
        %1673 = vmatpush1.msra.mxu0 0.0
        %1674 = vmatprep.subr.mxu0 0.0
        %1675 = vmatpush1.msra.mxu0 0.0
        %1676 = vmatprep.subr.mxu0 0.0
        %1677 = vmatpush1.msra.mxu0 0.0
        %1678 = vmatprep.subr.mxu0 0.0
        %1679 = vmatpush1.msra.mxu0 0.0
        %1680 = vmatprep.subr.mxu0 0.0
        %1681 = vmatpush1.msra.mxu0 0.0
        %1682 = vmatprep.subr.mxu0 0.0
        %1683 = vmatpush1.msra.mxu0 0.0
        %1684 = vmatprep.subr.mxu0 0.0
        %1685 = vmatpush1.msra.mxu0 0.0
        %1686 = vmatprep.subr.mxu0 0.0
        %1687 = vmatpush1.msra.mxu0 0.0
        %1688 = vmatprep.subr.mxu0 0.0
        %1689 = vmatpush1.msra.mxu0 0.0
        %1690 = vmatprep.subr.mxu0 0.0
        %1691 = vmatpush1.msra.mxu0 0.0
        %1692 = vmatprep.subr.mxu0 0.0
        %1693 = vmatpush1.msra.mxu0 0.0
        %1694 = vmatprep.subr.mxu0 0.0
        %1695 = vmatpush1.msra.mxu0 0.0
        %1696 = vmatprep.subr.mxu0 0.0
        %1697 = vmatpush1.msra.mxu0 0.0
        %1698 = vmatprep.subr.mxu0 0.0
        %1699 = vmatpush1.msra.mxu0 0.0
        %1700 = vmatprep.subr.mxu0 0.0
        %1701 = vmatpush1.msra.mxu0 0.0
        %1702 = vmatprep.subr.mxu0 0.0
        %1703 = vmatpush1.msra.mxu0 0.0
        %1704 = vmatprep.subr.mxu0 0.0
        %1705 = vmatpush1.msra.mxu0 0.0
        %1706 = vmatprep.mubr.f32.mxu0 0.0
        %1707 = vmatmul.mubr.f32.gmra.mrb[0].mxu0 %v1595
        %v1708 = vpop.f32.mrb[0].mxu0
        %v1709 = vadd.f32 0.0, %v1708
        %v1710 = vpop.f32.mrb[0].mxu0
        %1711 = vmatprep.mubr.f32.mxu0 0.0
        %1712 = vmatmul.mubr.f32.gmra.mrb[0].mxu0 %v1598
        %v1713 = vpop.f32.mrb[0].mxu0
        %v1714 = vadd.f32 0.0, %v1713
        %v1715 = vpop.f32.mrb[0].mxu0
        %1716 = vmatprep.mubr.f32.mxu0 0.0
        %1717 = vmatmul.mubr.f32.gmra.mrb[0].mxu0 %v1601
        %v1718 = vpop.f32.mrb[0].mxu0
        %v1719 = vadd.f32 0.0, %v1718
        %v1720 = vpop.f32.mrb[0].mxu0
        %1721 = vmatprep.mubr.f32.mxu0 0.0
        %1722 = vmatmul.mubr.f32.gmra.mrb[0].mxu0 %v1604
        %v1723 = vpop.f32.mrb[0].mxu0
        %v1724 = vadd.f32 0.0, %v1723
        %v1725 = vpop.f32.mrb[0].mxu0
        %1726 = vmatprep.mubr.f32.mxu0 0.0
        %1727 = vmatmul.mubr.f32.gmra.mrb[0].mxu0 %v1607
        %v1728 = vpop.f32.mrb[0].mxu0
        %v1729 = vadd.f32 0.0, %v1728
        %v1730 = vpop.f32.mrb[0].mxu0
        %1731 = vmatprep.mubr.f32.mxu0 0.0
        %1732 = vmatmul.mubr.f32.gmra.mrb[0].mxu0 %v1610
        %v1733 = vpop.f32.mrb[0].mxu0
        %v1734 = vadd.f32 0.0, %v1733
        %v1735 = vpop.f32.mrb[0].mxu0
        %1736 = vmatprep.mubr.f32.mxu0 0.0
        %1737 = vmatmul.mubr.f32.gmra.mrb[0].mxu0 %v1613
        %v1738 = vpop.f32.mrb[0].mxu0
        %v1739 = vadd.f32 0.0, %v1738
        %v1740 = vpop.f32.mrb[0].mxu0
        %1741 = vmatprep.mubr.f32.mxu0 0.0
        %1742 = vmatmul.mubr.f32.gmra.mrb[0].mxu0 %v1616
        %v1743 = vpop.f32.mrb[0].mxu0
        %v1744 = vadd.f32 0.0, %v1743
        %v1745 = vpop.f32.mrb[0].mxu0
        %1746 = vmatprep.mubr.f32.mxu0 0.0
        %1747 = vmatmul.mubr.f32.gmra.mrb[0].mxu0 %v1619
        %v1748 = vpop.f32.mrb[0].mxu0
        %v1749 = vadd.f32 0.0, %v1748
        %v1750 = vpop.f32.mrb[0].mxu0
        %1751 = vmatprep.mubr.f32.mxu0 0.0
        %1752 = vmatmul.mubr.f32.gmra.mrb[0].mxu0 %v1622
        %v1753 = vpop.f32.mrb[0].mxu0
        %v1754 = vadd.f32 0.0, %v1753
        %v1755 = vpop.f32.mrb[0].mxu0
        %1756 = vmatprep.mubr.f32.mxu0 0.0
        %1757 = vmatmul.mubr.f32.gmra.mrb[0].mxu0 %v1625
        %v1758 = vpop.f32.mrb[0].mxu0
        %v1759 = vadd.f32 0.0, %v1758
        %v1760 = vpop.f32.mrb[0].mxu0
        %1761 = vmatprep.mubr.f32.mxu0 0.0
        %1762 = vmatmul.mubr.f32.gmra.mrb[0].mxu0 %v1628
        %v1763 = vpop.f32.mrb[0].mxu0
        %v1764 = vadd.f32 0.0, %v1763
        %v1765 = vpop.f32.mrb[0].mxu0
        %1766 = vmatprep.mubr.f32.mxu0 0.0
        %1767 = vmatmul.mubr.f32.gmra.mrb[0].mxu0 %v1631
        %v1768 = vpop.f32.mrb[0].mxu0
        %v1769 = vadd.f32 0.0, %v1768
        %v1770 = vpop.f32.mrb[0].mxu0
        %1771 = vmatprep.mubr.f32.mxu0 0.0
        %1772 = vmatmul.mubr.f32.gmra.mrb[0].mxu0 %v1634
        %v1773 = vpop.f32.mrb[0].mxu0
        %v1774 = vadd.f32 0.0, %v1773
        %v1775 = vpop.f32.mrb[0].mxu0
        %1776 = vmatprep.mubr.f32.mxu0 0.0
        %1777 = vmatmul.mubr.f32.gmra.mrb[0].mxu0 %v1637
        %v1778 = vpop.f32.mrb[0].mxu0
        %v1779 = vadd.f32 0.0, %v1778
        %v1780 = vpop.f32.mrb[0].mxu0
        %1781 = vmatprep.mubr.f32.mxu0 0.0
        %1782 = vmatmul.mubr.f32.gmra.mrb[0].mxu0 %v1640
        %v1783 = vpop.f32.mrb[0].mxu0
        %v1784 = vadd.f32 0.0, %v1783
        %v1785 = vpop.f32.mrb[0].mxu0
        %1786 = vdwg.mxu0
        %v1788 = vsel %vm864, %v1465, 0
        %v1791 = vsel %vm864, %v1466, 0
        %v1794 = vsel %vm864, %v1467, 0
        %v1797 = vsel %vm864, %v1468, 0
        %v1800 = vsel %vm864, %v1469, 0
        %v1803 = vsel %vm864, %v1470, 0
        %v1806 = vsel %vm864, %v1471, 0
        %v1809 = vsel %vm864, %v1472, 0
        %v1812 = vsel %vm864, %v1473, 0
        %v1815 = vsel %vm864, %v1474, 0
        %v1818 = vsel %vm864, %v1475, 0
        %v1821 = vsel %vm864, %v1476, 0
        %v1824 = vsel %vm864, %v1477, 0
        %v1827 = vsel %vm864, %v1478, 0
        %v1830 = vsel %vm864, %v1479, 0
        %v1833 = vsel %vm864, %v1480, 0
        %1835 = vmatprep.subr.mxu0 0.0
        %1836 = vmatpush1.msra.mxu0 %v620
        %1837 = vmatprep.subr.mxu0 0.0
        %1838 = vmatpush1.msra.mxu0 %v621
        %1839 = vmatprep.subr.mxu0 0.0
        %1840 = vmatpush1.msra.mxu0 %v622
        %1841 = vmatprep.subr.mxu0 0.0
        %1842 = vmatpush1.msra.mxu0 %v623
        %1843 = vmatprep.subr.mxu0 0.0
        %1844 = vmatpush1.msra.mxu0 0.0
        %1845 = vmatprep.subr.mxu0 0.0
        %1846 = vmatpush1.msra.mxu0 0.0
        %1847 = vmatprep.subr.mxu0 0.0
        %1848 = vmatpush1.msra.mxu0 0.0
        %1849 = vmatprep.subr.mxu0 0.0
        %1850 = vmatpush1.msra.mxu0 0.0
        %1851 = vmatprep.subr.mxu0 0.0
        %1852 = vmatpush1.msra.mxu0 0.0
        %1853 = vmatprep.subr.mxu0 0.0
        %1854 = vmatpush1.msra.mxu0 0.0
        %1855 = vmatprep.subr.mxu0 0.0
        %1856 = vmatpush1.msra.mxu0 0.0
        %1857 = vmatprep.subr.mxu0 0.0
        %1858 = vmatpush1.msra.mxu0 0.0
        %1859 = vmatprep.subr.mxu0 0.0
        %1860 = vmatpush1.msra.mxu0 0.0
        %1861 = vmatprep.subr.mxu0 0.0
        %1862 = vmatpush1.msra.mxu0 0.0
        %1863 = vmatprep.subr.mxu0 0.0
        %1864 = vmatpush1.msra.mxu0 0.0
        %1865 = vmatprep.subr.mxu0 0.0
        %1866 = vmatpush1.msra.mxu0 0.0
        %1867 = vmatprep.subr.mxu0 0.0
        %1868 = vmatpush1.msra.mxu0 0.0
        %1869 = vmatprep.subr.mxu0 0.0
        %1870 = vmatpush1.msra.mxu0 0.0
        %1871 = vmatprep.subr.mxu0 0.0
        %1872 = vmatpush1.msra.mxu0 0.0
        %1873 = vmatprep.subr.mxu0 0.0
        %1874 = vmatpush1.msra.mxu0 0.0
        %1875 = vmatprep.subr.mxu0 0.0
        %1876 = vmatpush1.msra.mxu0 0.0
        %1877 = vmatprep.subr.mxu0 0.0
        %1878 = vmatpush1.msra.mxu0 0.0
        %1879 = vmatprep.subr.mxu0 0.0
        %1880 = vmatpush1.msra.mxu0 0.0
        %1881 = vmatprep.subr.mxu0 0.0
        %1882 = vmatpush1.msra.mxu0 0.0
        %1883 = vmatprep.subr.mxu0 0.0
        %1884 = vmatpush1.msra.mxu0 0.0
        %1885 = vmatprep.subr.mxu0 0.0
        %1886 = vmatpush1.msra.mxu0 0.0
        %1887 = vmatprep.subr.mxu0 0.0
        %1888 = vmatpush1.msra.mxu0 0.0
        %1889 = vmatprep.subr.mxu0 0.0
        %1890 = vmatpush1.msra.mxu0 0.0
        %1891 = vmatprep.subr.mxu0 0.0
        %1892 = vmatpush1.msra.mxu0 0.0
        %1893 = vmatprep.subr.mxu0 0.0
        %1894 = vmatpush1.msra.mxu0 0.0
        %1895 = vmatprep.subr.mxu0 0.0
        %1896 = vmatpush1.msra.mxu0 0.0
        %1897 = vmatprep.subr.mxu0 0.0
        %1898 = vmatpush1.msra.mxu0 0.0
        %1899 = vmatprep.mubr.f32.mxu0 0.0
        %1900 = vmatmul.mubr.f32.gmra.mrb[0].mxu0 %v1788
        %v1901 = vpop.f32.mrb[0].mxu0
        %v1902 = vadd.f32 %v1709, %v1901
        %v1903 = vpop.f32.mrb[0].mxu0
        %1904 = vmatprep.mubr.f32.mxu0 0.0
        %1905 = vmatmul.mubr.f32.gmra.mrb[0].mxu0 %v1791
        %v1906 = vpop.f32.mrb[0].mxu0
        %v1907 = vadd.f32 %v1714, %v1906
        %v1908 = vpop.f32.mrb[0].mxu0
        %1909 = vmatprep.mubr.f32.mxu0 0.0
        %1910 = vmatmul.mubr.f32.gmra.mrb[0].mxu0 %v1794
        %v1911 = vpop.f32.mrb[0].mxu0
        %v1912 = vadd.f32 %v1719, %v1911
        %v1913 = vpop.f32.mrb[0].mxu0
        %1914 = vmatprep.mubr.f32.mxu0 0.0
        %1915 = vmatmul.mubr.f32.gmra.mrb[0].mxu0 %v1797
        %v1916 = vpop.f32.mrb[0].mxu0
        %v1917 = vadd.f32 %v1724, %v1916
        %v1918 = vpop.f32.mrb[0].mxu0
        %1919 = vmatprep.mubr.f32.mxu0 0.0
        %1920 = vmatmul.mubr.f32.gmra.mrb[0].mxu0 %v1800
        %v1921 = vpop.f32.mrb[0].mxu0
        %v1922 = vadd.f32 %v1729, %v1921
        %v1923 = vpop.f32.mrb[0].mxu0
        %1924 = vmatprep.mubr.f32.mxu0 0.0
        %1925 = vmatmul.mubr.f32.gmra.mrb[0].mxu0 %v1803
        %v1926 = vpop.f32.mrb[0].mxu0
        %v1927 = vadd.f32 %v1734, %v1926
        %v1928 = vpop.f32.mrb[0].mxu0
        %1929 = vmatprep.mubr.f32.mxu0 0.0
        %1930 = vmatmul.mubr.f32.gmra.mrb[0].mxu0 %v1806
        %v1931 = vpop.f32.mrb[0].mxu0
        %v1932 = vadd.f32 %v1739, %v1931
        %v1933 = vpop.f32.mrb[0].mxu0
        %1934 = vmatprep.mubr.f32.mxu0 0.0
        %1935 = vmatmul.mubr.f32.gmra.mrb[0].mxu0 %v1809
        %v1936 = vpop.f32.mrb[0].mxu0
        %v1937 = vadd.f32 %v1744, %v1936
        %v1938 = vpop.f32.mrb[0].mxu0
        %1939 = vmatprep.mubr.f32.mxu0 0.0
        %1940 = vmatmul.mubr.f32.gmra.mrb[0].mxu0 %v1812
        %v1941 = vpop.f32.mrb[0].mxu0
        %v1942 = vadd.f32 %v1749, %v1941
        %v1943 = vpop.f32.mrb[0].mxu0
        %1944 = vmatprep.mubr.f32.mxu0 0.0
        %1945 = vmatmul.mubr.f32.gmra.mrb[0].mxu0 %v1815
        %v1946 = vpop.f32.mrb[0].mxu0
        %v1947 = vadd.f32 %v1754, %v1946
        %v1948 = vpop.f32.mrb[0].mxu0
        %1949 = vmatprep.mubr.f32.mxu0 0.0
        %1950 = vmatmul.mubr.f32.gmra.mrb[0].mxu0 %v1818
        %v1951 = vpop.f32.mrb[0].mxu0
        %v1952 = vadd.f32 %v1759, %v1951
        %v1953 = vpop.f32.mrb[0].mxu0
        %1954 = vmatprep.mubr.f32.mxu0 0.0
        %1955 = vmatmul.mubr.f32.gmra.mrb[0].mxu0 %v1821
        %v1956 = vpop.f32.mrb[0].mxu0
        %v1957 = vadd.f32 %v1764, %v1956
        %v1958 = vpop.f32.mrb[0].mxu0
        %1959 = vmatprep.mubr.f32.mxu0 0.0
        %1960 = vmatmul.mubr.f32.gmra.mrb[0].mxu0 %v1824
        %v1961 = vpop.f32.mrb[0].mxu0
        %v1962 = vadd.f32 %v1769, %v1961
        %v1963 = vpop.f32.mrb[0].mxu0
        %1964 = vmatprep.mubr.f32.mxu0 0.0
        %1965 = vmatmul.mubr.f32.gmra.mrb[0].mxu0 %v1827
        %v1966 = vpop.f32.mrb[0].mxu0
        %v1967 = vadd.f32 %v1774, %v1966
        %v1968 = vpop.f32.mrb[0].mxu0
        %1969 = vmatprep.mubr.f32.mxu0 0.0
        %1970 = vmatmul.mubr.f32.gmra.mrb[0].mxu0 %v1830
        %v1971 = vpop.f32.mrb[0].mxu0
        %v1972 = vadd.f32 %v1779, %v1971
        %v1973 = vpop.f32.mrb[0].mxu0
        %1974 = vmatprep.mubr.f32.mxu0 0.0
        %1975 = vmatmul.mubr.f32.gmra.mrb[0].mxu0 %v1833
        %v1976 = vpop.f32.mrb[0].mxu0
        %v1977 = vadd.f32 %v1784, %v1976
        %v1978 = vpop.f32.mrb[0].mxu0
        %1979 = vdwg.mxu0
        %v1980 = vadd.f32 %v1902, %v1016
        %v1981 = vadd.f32 %v1907, %v1016
        %v1982 = vadd.f32 %v1912, %v1016
        %v1983 = vadd.f32 %v1917, %v1016
        %v1984 = vadd.f32 %v1922, %v1016
        %v1985 = vadd.f32 %v1927, %v1016
        %v1986 = vadd.f32 %v1932, %v1016
        %v1987 = vadd.f32 %v1937, %v1016
        %v1988 = vadd.f32 %v1942, %v1016
        %v1989 = vadd.f32 %v1947, %v1016
        %v1990 = vadd.f32 %v1952, %v1016
        %v1991 = vadd.f32 %v1957, %v1016
        %v1992 = vadd.f32 %v1962, %v1016
        %v1993 = vadd.f32 %v1967, %v1016
        %v1994 = vadd.f32 %v1972, %v1016
        %v1995 = vadd.f32 %v1977, %v1016
        %v1996 = vmax.f32 %v1980, 0.0
        %v1997 = vmax.f32 %v1981, 0.0
        %v1998 = vmax.f32 %v1982, 0.0
        %v1999 = vmax.f32 %v1983, 0.0
        %v2000 = vmax.f32 %v1984, 0.0
        %v2001 = vmax.f32 %v1985, 0.0
        %v2002 = vmax.f32 %v1986, 0.0
        %v2003 = vmax.f32 %v1987, 0.0
        %v2004 = vmax.f32 %v1988, 0.0
        %v2005 = vmax.f32 %v1989, 0.0
        %v2006 = vmax.f32 %v1990, 0.0
        %v2007 = vmax.f32 %v1991, 0.0
        %v2008 = vmax.f32 %v1992, 0.0
        %v2009 = vmax.f32 %v1993, 0.0
        %v2010 = vmax.f32 %v1994, 0.0
        %v2011 = vmax.f32 %v1995, 0.0
        %v2013 = vsel %vm1056, %v1996, 0
        %v2016 = vsel %vm1056, %v1997, 0
        %v2019 = vsel %vm1056, %v1998, 0
        %v2022 = vsel %vm1056, %v1999, 0
        %v2025 = vsel %vm1056, %v2000, 0
        %v2028 = vsel %vm1056, %v2001, 0
        %v2031 = vsel %vm1056, %v2002, 0
        %v2034 = vsel %vm1056, %v2003, 0
        %v2037 = vsel %vm1056, %v2004, 0
        %v2040 = vsel %vm1056, %v2005, 0
        %v2043 = vsel %vm1056, %v2006, 0
        %v2046 = vsel %vm1056, %v2007, 0
        %v2049 = vsel %vm1056, %v2008, 0
        %v2052 = vsel %vm1056, %v2009, 0
        %v2055 = vsel %vm1056, %v2010, 0
        %v2058 = vsel %vm1056, %v2011, 0
        %2060 = vmatprep.subr.mxu0 0.0
        %2061 = vmatpush1.msra.mxu0 %v626
        %2062 = vmatprep.subr.mxu0 0.0
        %2063 = vmatpush1.msra.mxu0 %v627
        %2064 = vmatprep.subr.mxu0 0.0
        %2065 = vmatpush1.msra.mxu0 %v628
        %2066 = vmatprep.subr.mxu0 0.0
        %2067 = vmatpush1.msra.mxu0 %v629
        %2068 = vmatprep.subr.mxu0 0.0
        %2069 = vmatpush1.msra.mxu0 %v630
        %2070 = vmatprep.subr.mxu0 0.0
        %2071 = vmatpush1.msra.mxu0 %v631
        %2072 = vmatprep.subr.mxu0 0.0
        %2073 = vmatpush1.msra.mxu0 %v632
        %2074 = vmatprep.subr.mxu0 0.0
        %2075 = vmatpush1.msra.mxu0 %v633
        %2076 = vmatprep.subr.mxu0 0.0
        %2077 = vmatpush1.msra.mxu0 0.0
        %2078 = vmatprep.subr.mxu0 0.0
        %2079 = vmatpush1.msra.mxu0 0.0
        %2080 = vmatprep.subr.mxu0 0.0
        %2081 = vmatpush1.msra.mxu0 0.0
        %2082 = vmatprep.subr.mxu0 0.0
        %2083 = vmatpush1.msra.mxu0 0.0
        %2084 = vmatprep.subr.mxu0 0.0
        %2085 = vmatpush1.msra.mxu0 0.0
        %2086 = vmatprep.subr.mxu0 0.0
        %2087 = vmatpush1.msra.mxu0 0.0
        %2088 = vmatprep.subr.mxu0 0.0
        %2089 = vmatpush1.msra.mxu0 0.0
        %2090 = vmatprep.subr.mxu0 0.0
        %2091 = vmatpush1.msra.mxu0 0.0
        %2092 = vmatprep.subr.mxu0 0.0
        %2093 = vmatpush1.msra.mxu0 0.0
        %2094 = vmatprep.subr.mxu0 0.0
        %2095 = vmatpush1.msra.mxu0 0.0
        %2096 = vmatprep.subr.mxu0 0.0
        %2097 = vmatpush1.msra.mxu0 0.0
        %2098 = vmatprep.subr.mxu0 0.0
        %2099 = vmatpush1.msra.mxu0 0.0
        %2100 = vmatprep.subr.mxu0 0.0
        %2101 = vmatpush1.msra.mxu0 0.0
        %2102 = vmatprep.subr.mxu0 0.0
        %2103 = vmatpush1.msra.mxu0 0.0
        %2104 = vmatprep.subr.mxu0 0.0
        %2105 = vmatpush1.msra.mxu0 0.0
        %2106 = vmatprep.subr.mxu0 0.0
        %2107 = vmatpush1.msra.mxu0 0.0
        %2108 = vmatprep.subr.mxu0 0.0
        %2109 = vmatpush1.msra.mxu0 0.0
        %2110 = vmatprep.subr.mxu0 0.0
        %2111 = vmatpush1.msra.mxu0 0.0
        %2112 = vmatprep.subr.mxu0 0.0
        %2113 = vmatpush1.msra.mxu0 0.0
        %2114 = vmatprep.subr.mxu0 0.0
        %2115 = vmatpush1.msra.mxu0 0.0
        %2116 = vmatprep.subr.mxu0 0.0
        %2117 = vmatpush1.msra.mxu0 0.0
        %2118 = vmatprep.subr.mxu0 0.0
        %2119 = vmatpush1.msra.mxu0 0.0
        %2120 = vmatprep.subr.mxu0 0.0
        %2121 = vmatpush1.msra.mxu0 0.0
        %2122 = vmatprep.subr.mxu0 0.0
        %2123 = vmatpush1.msra.mxu0 0.0
        %2124 = vmatprep.mubr.f32.mxu0 0.0
        %2125 = vmatmul.mubr.f32.gmra.mrb[0].mxu0 %v2013
        %v2126 = vpop.f32.mrb[0].mxu0
        %v2127 = vadd.f32 %v1054, %v2126
        %v2128 = vpop.f32.mrb[0].mxu0
        %2129 = vmatprep.mubr.f32.mxu0 0.0
        %2130 = vmatmul.mubr.f32.gmra.mrb[0].mxu0 %v2016
        %v2131 = vpop.f32.mrb[0].mxu0
        %v2132 = vadd.f32 %v1054, %v2131
        %v2133 = vpop.f32.mrb[0].mxu0
        %2134 = vmatprep.mubr.f32.mxu0 0.0
        %2135 = vmatmul.mubr.f32.gmra.mrb[0].mxu0 %v2019
        %v2136 = vpop.f32.mrb[0].mxu0
        %v2137 = vadd.f32 %v1054, %v2136
        %v2138 = vpop.f32.mrb[0].mxu0
        %2139 = vmatprep.mubr.f32.mxu0 0.0
        %2140 = vmatmul.mubr.f32.gmra.mrb[0].mxu0 %v2022
        %v2141 = vpop.f32.mrb[0].mxu0
        %v2142 = vadd.f32 %v1054, %v2141
        %v2143 = vpop.f32.mrb[0].mxu0
        %2144 = vmatprep.mubr.f32.mxu0 0.0
        %2145 = vmatmul.mubr.f32.gmra.mrb[0].mxu0 %v2025
        %v2146 = vpop.f32.mrb[0].mxu0
        %v2147 = vadd.f32 %v1054, %v2146
        %v2148 = vpop.f32.mrb[0].mxu0
        %2149 = vmatprep.mubr.f32.mxu0 0.0
        %2150 = vmatmul.mubr.f32.gmra.mrb[0].mxu0 %v2028
        %v2151 = vpop.f32.mrb[0].mxu0
        %v2152 = vadd.f32 %v1054, %v2151
        %v2153 = vpop.f32.mrb[0].mxu0
        %2154 = vmatprep.mubr.f32.mxu0 0.0
        %2155 = vmatmul.mubr.f32.gmra.mrb[0].mxu0 %v2031
        %v2156 = vpop.f32.mrb[0].mxu0
        %v2157 = vadd.f32 %v1054, %v2156
        %v2158 = vpop.f32.mrb[0].mxu0
        %2159 = vmatprep.mubr.f32.mxu0 0.0
        %2160 = vmatmul.mubr.f32.gmra.mrb[0].mxu0 %v2034
        %v2161 = vpop.f32.mrb[0].mxu0
        %v2162 = vadd.f32 %v1054, %v2161
        %v2163 = vpop.f32.mrb[0].mxu0
        %2164 = vmatprep.mubr.f32.mxu0 0.0
        %2165 = vmatmul.mubr.f32.gmra.mrb[0].mxu0 %v2037
        %v2166 = vpop.f32.mrb[0].mxu0
        %v2167 = vadd.f32 %v1054, %v2166
        %v2168 = vpop.f32.mrb[0].mxu0
        %2169 = vmatprep.mubr.f32.mxu0 0.0
        %2170 = vmatmul.mubr.f32.gmra.mrb[0].mxu0 %v2040
        %v2171 = vpop.f32.mrb[0].mxu0
        %v2172 = vadd.f32 %v1054, %v2171
        %v2173 = vpop.f32.mrb[0].mxu0
        %2174 = vmatprep.mubr.f32.mxu0 0.0
        %2175 = vmatmul.mubr.f32.gmra.mrb[0].mxu0 %v2043
        %v2176 = vpop.f32.mrb[0].mxu0
        %v2177 = vadd.f32 %v1054, %v2176
        %v2178 = vpop.f32.mrb[0].mxu0
        %2179 = vmatprep.mubr.f32.mxu0 0.0
        %2180 = vmatmul.mubr.f32.gmra.mrb[0].mxu0 %v2046
        %v2181 = vpop.f32.mrb[0].mxu0
        %v2182 = vadd.f32 %v1054, %v2181
        %v2183 = vpop.f32.mrb[0].mxu0
        %2184 = vmatprep.mubr.f32.mxu0 0.0
        %2185 = vmatmul.mubr.f32.gmra.mrb[0].mxu0 %v2049
        %v2186 = vpop.f32.mrb[0].mxu0
        %v2187 = vadd.f32 %v1054, %v2186
        %v2188 = vpop.f32.mrb[0].mxu0
        %2189 = vmatprep.mubr.f32.mxu0 0.0
        %2190 = vmatmul.mubr.f32.gmra.mrb[0].mxu0 %v2052
        %v2191 = vpop.f32.mrb[0].mxu0
        %v2192 = vadd.f32 %v1054, %v2191
        %v2193 = vpop.f32.mrb[0].mxu0
        %2194 = vmatprep.mubr.f32.mxu0 0.0
        %2195 = vmatmul.mubr.f32.gmra.mrb[0].mxu0 %v2055
        %v2196 = vpop.f32.mrb[0].mxu0
        %v2197 = vadd.f32 %v1054, %v2196
        %v2198 = vpop.f32.mrb[0].mxu0
        %2199 = vmatprep.mubr.f32.mxu0 0.0
        %2200 = vmatmul.mubr.f32.gmra.mrb[0].mxu0 %v2058
        %v2201 = vpop.f32.mrb[0].mxu0
        %v2202 = vadd.f32 %v1054, %v2201
        %v2203 = vpop.f32.mrb[0].mxu0
        %2204 = vdwg.mxu0
        %v2205 = vmax.f32 %v2127, 0.0
        %v2206 = vmax.f32 %v2132, 0.0
        %v2207 = vmax.f32 %v2137, 0.0
        %v2208 = vmax.f32 %v2142, 0.0
        %v2209 = vmax.f32 %v2147, 0.0
        %v2210 = vmax.f32 %v2152, 0.0
        %v2211 = vmax.f32 %v2157, 0.0
        %v2212 = vmax.f32 %v2162, 0.0
        %v2213 = vmax.f32 %v2167, 0.0
        %v2214 = vmax.f32 %v2172, 0.0
        %v2215 = vmax.f32 %v2177, 0.0
        %v2216 = vmax.f32 %v2182, 0.0
        %v2217 = vmax.f32 %v2187, 0.0
        %v2218 = vmax.f32 %v2192, 0.0
        %v2219 = vmax.f32 %v2197, 0.0
        %v2220 = vmax.f32 %v2202, 0.0
        %v2222 = vsel %vm1056, %v2205, 0
        %v2225 = vsel %vm1056, %v2206, 0
        %v2228 = vsel %vm1056, %v2207, 0
        %v2231 = vsel %vm1056, %v2208, 0
        %v2234 = vsel %vm1056, %v2209, 0
        %v2237 = vsel %vm1056, %v2210, 0
        %v2240 = vsel %vm1056, %v2211, 0
        %v2243 = vsel %vm1056, %v2212, 0
        %v2246 = vsel %vm1056, %v2213, 0
        %v2249 = vsel %vm1056, %v2214, 0
        %v2252 = vsel %vm1056, %v2215, 0
        %v2255 = vsel %vm1056, %v2216, 0
        %v2258 = vsel %vm1056, %v2217, 0
        %v2261 = vsel %vm1056, %v2218, 0
        %v2264 = vsel %vm1056, %v2219, 0
        %v2267 = vsel %vm1056, %v2220, 0
        %2269 = vmatprep.subr.mxu0 0.0
        %2270 = vmatpush1.msra.mxu0 %v635
        %2271 = vmatprep.subr.mxu0 0.0
        %2272 = vmatpush1.msra.mxu0 %v636
        %2273 = vmatprep.subr.mxu0 0.0
        %2274 = vmatpush1.msra.mxu0 %v637
        %2275 = vmatprep.subr.mxu0 0.0
        %2276 = vmatpush1.msra.mxu0 %v638
        %2277 = vmatprep.subr.mxu0 0.0
        %2278 = vmatpush1.msra.mxu0 %v639
        %2279 = vmatprep.subr.mxu0 0.0
        %2280 = vmatpush1.msra.mxu0 %v640
        %2281 = vmatprep.subr.mxu0 0.0
        %2282 = vmatpush1.msra.mxu0 %v641
        %2283 = vmatprep.subr.mxu0 0.0
        %2284 = vmatpush1.msra.mxu0 %v642
        %2285 = vmatprep.subr.mxu0 0.0
        %2286 = vmatpush1.msra.mxu0 0.0
        %2287 = vmatprep.subr.mxu0 0.0
        %2288 = vmatpush1.msra.mxu0 0.0
        %2289 = vmatprep.subr.mxu0 0.0
        %2290 = vmatpush1.msra.mxu0 0.0
        %2291 = vmatprep.subr.mxu0 0.0
        %2292 = vmatpush1.msra.mxu0 0.0
        %2293 = vmatprep.subr.mxu0 0.0
        %2294 = vmatpush1.msra.mxu0 0.0
        %2295 = vmatprep.subr.mxu0 0.0
        %2296 = vmatpush1.msra.mxu0 0.0
        %2297 = vmatprep.subr.mxu0 0.0
        %2298 = vmatpush1.msra.mxu0 0.0
        %2299 = vmatprep.subr.mxu0 0.0
        %2300 = vmatpush1.msra.mxu0 0.0
        %2301 = vmatprep.subr.mxu0 0.0
        %2302 = vmatpush1.msra.mxu0 0.0
        %2303 = vmatprep.subr.mxu0 0.0
        %2304 = vmatpush1.msra.mxu0 0.0
        %2305 = vmatprep.subr.mxu0 0.0
        %2306 = vmatpush1.msra.mxu0 0.0
        %2307 = vmatprep.subr.mxu0 0.0
        %2308 = vmatpush1.msra.mxu0 0.0
        %2309 = vmatprep.subr.mxu0 0.0
        %2310 = vmatpush1.msra.mxu0 0.0
        %2311 = vmatprep.subr.mxu0 0.0
        %2312 = vmatpush1.msra.mxu0 0.0
        %2313 = vmatprep.subr.mxu0 0.0
        %2314 = vmatpush1.msra.mxu0 0.0
        %2315 = vmatprep.subr.mxu0 0.0
        %2316 = vmatpush1.msra.mxu0 0.0
        %2317 = vmatprep.subr.mxu0 0.0
        %2318 = vmatpush1.msra.mxu0 0.0
        %2319 = vmatprep.subr.mxu0 0.0
        %2320 = vmatpush1.msra.mxu0 0.0
        %2321 = vmatprep.subr.mxu0 0.0
        %2322 = vmatpush1.msra.mxu0 0.0
        %2323 = vmatprep.subr.mxu0 0.0
        %2324 = vmatpush1.msra.mxu0 0.0
        %2325 = vmatprep.subr.mxu0 0.0
        %2326 = vmatpush1.msra.mxu0 0.0
        %2327 = vmatprep.subr.mxu0 0.0
        %2328 = vmatpush1.msra.mxu0 0.0
        %2329 = vmatprep.subr.mxu0 0.0
        %2330 = vmatpush1.msra.mxu0 0.0
        %2331 = vmatprep.subr.mxu0 0.0
        %2332 = vmatpush1.msra.mxu0 0.0
        %2333 = vmatprep.mubr.f32.mxu0 0.0
        %2334 = vmatmul.mubr.f32.gmra.mrb[0].mxu0 %v2222
        %v2335 = vpop.f32.mrb[0].mxu0
        %v2336 = vadd.f32 %v1270, %v2335
        %v2337 = vpop.f32.mrb[0].mxu0
        %2338 = vmatprep.mubr.f32.mxu0 0.0
        %2339 = vmatmul.mubr.f32.gmra.mrb[0].mxu0 %v2225
        %v2340 = vpop.f32.mrb[0].mxu0
        %v2341 = vadd.f32 %v1270, %v2340
        %v2342 = vpop.f32.mrb[0].mxu0
        %2343 = vmatprep.mubr.f32.mxu0 0.0
        %2344 = vmatmul.mubr.f32.gmra.mrb[0].mxu0 %v2228
        %v2345 = vpop.f32.mrb[0].mxu0
        %v2346 = vadd.f32 %v1270, %v2345
        %v2347 = vpop.f32.mrb[0].mxu0
        %2348 = vmatprep.mubr.f32.mxu0 0.0
        %2349 = vmatmul.mubr.f32.gmra.mrb[0].mxu0 %v2231
        %v2350 = vpop.f32.mrb[0].mxu0
        %v2351 = vadd.f32 %v1270, %v2350
        %v2352 = vpop.f32.mrb[0].mxu0
        %2353 = vmatprep.mubr.f32.mxu0 0.0
        %2354 = vmatmul.mubr.f32.gmra.mrb[0].mxu0 %v2234
        %v2355 = vpop.f32.mrb[0].mxu0
        %v2356 = vadd.f32 %v1270, %v2355
        %v2357 = vpop.f32.mrb[0].mxu0
        %2358 = vmatprep.mubr.f32.mxu0 0.0
        %2359 = vmatmul.mubr.f32.gmra.mrb[0].mxu0 %v2237
        %v2360 = vpop.f32.mrb[0].mxu0
        %v2361 = vadd.f32 %v1270, %v2360
        %v2362 = vpop.f32.mrb[0].mxu0
        %2363 = vmatprep.mubr.f32.mxu0 0.0
        %2364 = vmatmul.mubr.f32.gmra.mrb[0].mxu0 %v2240
        %v2365 = vpop.f32.mrb[0].mxu0
        %v2366 = vadd.f32 %v1270, %v2365
        %v2367 = vpop.f32.mrb[0].mxu0
        %2368 = vmatprep.mubr.f32.mxu0 0.0
        %2369 = vmatmul.mubr.f32.gmra.mrb[0].mxu0 %v2243
        %v2370 = vpop.f32.mrb[0].mxu0
        %v2371 = vadd.f32 %v1270, %v2370
        %v2372 = vpop.f32.mrb[0].mxu0
        %2373 = vmatprep.mubr.f32.mxu0 0.0
        %2374 = vmatmul.mubr.f32.gmra.mrb[0].mxu0 %v2246
        %v2375 = vpop.f32.mrb[0].mxu0
        %v2376 = vadd.f32 %v1270, %v2375
        %v2377 = vpop.f32.mrb[0].mxu0
        %2378 = vmatprep.mubr.f32.mxu0 0.0
        %2379 = vmatmul.mubr.f32.gmra.mrb[0].mxu0 %v2249
        %v2380 = vpop.f32.mrb[0].mxu0
        %v2381 = vadd.f32 %v1270, %v2380
        %v2382 = vpop.f32.mrb[0].mxu0
        %2383 = vmatprep.mubr.f32.mxu0 0.0
        %2384 = vmatmul.mubr.f32.gmra.mrb[0].mxu0 %v2252
        %v2385 = vpop.f32.mrb[0].mxu0
        %v2386 = vadd.f32 %v1270, %v2385
        %v2387 = vpop.f32.mrb[0].mxu0
        %2388 = vmatprep.mubr.f32.mxu0 0.0
        %2389 = vmatmul.mubr.f32.gmra.mrb[0].mxu0 %v2255
        %v2390 = vpop.f32.mrb[0].mxu0
        %v2391 = vadd.f32 %v1270, %v2390
        %v2392 = vpop.f32.mrb[0].mxu0
        %2393 = vmatprep.mubr.f32.mxu0 0.0
        %2394 = vmatmul.mubr.f32.gmra.mrb[0].mxu0 %v2258
        %v2395 = vpop.f32.mrb[0].mxu0
        %v2396 = vadd.f32 %v1270, %v2395
        %v2397 = vpop.f32.mrb[0].mxu0
        %2398 = vmatprep.mubr.f32.mxu0 0.0
        %2399 = vmatmul.mubr.f32.gmra.mrb[0].mxu0 %v2261
        %v2400 = vpop.f32.mrb[0].mxu0
        %v2401 = vadd.f32 %v1270, %v2400
        %v2402 = vpop.f32.mrb[0].mxu0
        %2403 = vmatprep.mubr.f32.mxu0 0.0
        %2404 = vmatmul.mubr.f32.gmra.mrb[0].mxu0 %v2264
        %v2405 = vpop.f32.mrb[0].mxu0
        %v2406 = vadd.f32 %v1270, %v2405
        %v2407 = vpop.f32.mrb[0].mxu0
        %2408 = vmatprep.mubr.f32.mxu0 0.0
        %2409 = vmatmul.mubr.f32.gmra.mrb[0].mxu0 %v2267
        %v2410 = vpop.f32.mrb[0].mxu0
        %v2411 = vadd.f32 %v1270, %v2410
        %v2412 = vpop.f32.mrb[0].mxu0
        %2413 = vdwg.mxu0
        %v2414 = vmax.f32 %v2336, 0.0
        %v2415 = vmax.f32 %v2341, 0.0
        %v2416 = vmax.f32 %v2346, 0.0
        %v2417 = vmax.f32 %v2351, 0.0
        %v2418 = vmax.f32 %v2356, 0.0
        %v2419 = vmax.f32 %v2361, 0.0
        %v2420 = vmax.f32 %v2366, 0.0
        %v2421 = vmax.f32 %v2371, 0.0
        %v2422 = vmax.f32 %v2376, 0.0
        %v2423 = vmax.f32 %v2381, 0.0
        %v2424 = vmax.f32 %v2386, 0.0
        %v2425 = vmax.f32 %v2391, 0.0
        %v2426 = vmax.f32 %v2396, 0.0
        %v2427 = vmax.f32 %v2401, 0.0
        %v2428 = vmax.f32 %v2406, 0.0
        %v2429 = vmax.f32 %v2411, 0.0
        %v2430 = vxor.u32 %v2336, 2147483648
        %v2431 = vxor.u32 %v2341, 2147483648
        %v2432 = vxor.u32 %v2346, 2147483648
        %v2433 = vxor.u32 %v2351, 2147483648
        %v2434 = vxor.u32 %v2356, 2147483648
        %v2435 = vxor.u32 %v2361, 2147483648
        %v2436 = vxor.u32 %v2366, 2147483648
        %v2437 = vxor.u32 %v2371, 2147483648
        %v2438 = vxor.u32 %v2376, 2147483648
        %v2439 = vxor.u32 %v2381, 2147483648
        %v2440 = vxor.u32 %v2386, 2147483648
        %v2441 = vxor.u32 %v2391, 2147483648
        %v2442 = vxor.u32 %v2396, 2147483648
        %v2443 = vxor.u32 %v2401, 2147483648
        %v2444 = vxor.u32 %v2406, 2147483648
        %v2445 = vxor.u32 %v2411, 2147483648
        %v2446 = vmul.f32 %v2430, 1.442695
        %v2447 = vpow.pop %v2446
        %v2448 = vmul.f32 %v2431, 1.442695
        %v2449 = vpow.pop %v2448
        %v2450 = vmul.f32 %v2432, 1.442695
        %v2451 = vpow.pop %v2450
        %v2452 = vmul.f32 %v2433, 1.442695
        %v2453 = vpow.pop %v2452
        %v2454 = vmul.f32 %v2434, 1.442695
        %v2455 = vpow.pop %v2454
        %v2456 = vmul.f32 %v2435, 1.442695
        %v2457 = vpow.pop %v2456
        %v2458 = vmul.f32 %v2436, 1.442695
        %v2459 = vpow.pop %v2458
        %v2460 = vmul.f32 %v2437, 1.442695
        %v2461 = vpow.pop %v2460
        %v2462 = vmul.f32 %v2438, 1.442695
        %v2463 = vpow.pop %v2462
        %v2464 = vmul.f32 %v2439, 1.442695
        %v2465 = vpow.pop %v2464
        %v2466 = vmul.f32 %v2440, 1.442695
        %v2467 = vpow.pop %v2466
        %v2468 = vmul.f32 %v2441, 1.442695
        %v2469 = vpow.pop %v2468
        %v2470 = vmul.f32 %v2442, 1.442695
        %v2471 = vpow.pop %v2470
        %v2472 = vmul.f32 %v2443, 1.442695
        %v2473 = vpow.pop %v2472
        %v2474 = vmul.f32 %v2444, 1.442695
        %v2475 = vpow.pop %v2474
        %v2476 = vmul.f32 %v2445, 1.442695
        %v2477 = vpow.pop %v2476
        %v2478 = vadd.f32 %v2447, 1.0
        %v2479 = vadd.f32 %v2449, 1.0
        %v2480 = vadd.f32 %v2451, 1.0
        %v2481 = vadd.f32 %v2453, 1.0
        %v2482 = vadd.f32 %v2455, 1.0
        %v2483 = vadd.f32 %v2457, 1.0
        %v2484 = vadd.f32 %v2459, 1.0
        %v2485 = vadd.f32 %v2461, 1.0
        %v2486 = vadd.f32 %v2463, 1.0
        %v2487 = vadd.f32 %v2465, 1.0
        %v2488 = vadd.f32 %v2467, 1.0
        %v2489 = vadd.f32 %v2469, 1.0
        %v2490 = vadd.f32 %v2471, 1.0
        %v2491 = vadd.f32 %v2473, 1.0
        %v2492 = vadd.f32 %v2475, 1.0
        %v2493 = vadd.f32 %v2477, 1.0
        %v2494 = vrcp.pop %v2478
        %v2495 = vmul.f32 1.0, %v2494
        %v2496 = vrcp.pop %v2479
        %v2497 = vmul.f32 1.0, %v2496
        %v2498 = vrcp.pop %v2480
        %v2499 = vmul.f32 1.0, %v2498
        %v2500 = vrcp.pop %v2481
        %v2501 = vmul.f32 1.0, %v2500
        %v2502 = vrcp.pop %v2482
        %v2503 = vmul.f32 1.0, %v2502
        %v2504 = vrcp.pop %v2483
        %v2505 = vmul.f32 1.0, %v2504
        %v2506 = vrcp.pop %v2484
        %v2507 = vmul.f32 1.0, %v2506
        %v2508 = vrcp.pop %v2485
        %v2509 = vmul.f32 1.0, %v2508
        %v2510 = vrcp.pop %v2486
        %v2511 = vmul.f32 1.0, %v2510
        %v2512 = vrcp.pop %v2487
        %v2513 = vmul.f32 1.0, %v2512
        %v2514 = vrcp.pop %v2488
        %v2515 = vmul.f32 1.0, %v2514
        %v2516 = vrcp.pop %v2489
        %v2517 = vmul.f32 1.0, %v2516
        %v2518 = vrcp.pop %v2490
        %v2519 = vmul.f32 1.0, %v2518
        %v2520 = vrcp.pop %v2491
        %v2521 = vmul.f32 1.0, %v2520
        %v2522 = vrcp.pop %v2492
        %v2523 = vmul.f32 1.0, %v2522
        %v2524 = vrcp.pop %v2493
        %v2525 = vmul.f32 1.0, %v2524
        %v2526 = vmul.f32 %v1546, %v2495
        %v2527 = vmul.f32 %v1548, %v2497
        %v2528 = vmul.f32 %v1550, %v2499
        %v2529 = vmul.f32 %v1552, %v2501
        %v2530 = vmul.f32 %v1554, %v2503
        %v2531 = vmul.f32 %v1556, %v2505
        %v2532 = vmul.f32 %v1558, %v2507
        %v2533 = vmul.f32 %v1560, %v2509
        %v2534 = vmul.f32 %v1562, %v2511
        %v2535 = vmul.f32 %v1564, %v2513
        %v2536 = vmul.f32 %v1566, %v2515
        %v2537 = vmul.f32 %v1568, %v2517
        %v2538 = vmul.f32 %v1570, %v2519
        %v2539 = vmul.f32 %v1572, %v2521
        %v2540 = vmul.f32 %v1574, %v2523
        %v2541 = vmul.f32 %v1576, %v2525
        %s2542 = scalar_lea.vmem %s585, 256 [#allocation2]
        %v2543 = vld [vmem:[%s2542] sm:$0xff]
        %v2544 = vld [vmem:[%s2542 + $0x8] sm:$0xff]
        %v2545 = vld [vmem:[%s2542 + $0x10] sm:$0xff]
        %v2546 = vld [vmem:[%s2542 + $0x18] sm:$0xff]
        %v2547 = vld [vmem:[%s2542 + $0x20] sm:$0xff]
        %v2548 = vld [vmem:[%s2542 + $0x28] sm:$0xff]
        %v2549 = vld [vmem:[%s2542 + $0x30] sm:$0xff]
        %v2550 = vld [vmem:[%s2542 + $0x38] sm:$0xff]
        %v2551 = vld [vmem:[%s2542 + $0x40] sm:$0xff]
        %v2552 = vld [vmem:[%s2542 + $0x48] sm:$0xff]
        %v2553 = vld [vmem:[%s2542 + $0x50] sm:$0xff]
        %v2554 = vld [vmem:[%s2542 + $0x58] sm:$0xff]
        %v2555 = vld [vmem:[%s2542 + $0x60] sm:$0xff]
        %v2556 = vld [vmem:[%s2542 + $0x68] sm:$0xff]
        %v2557 = vld [vmem:[%s2542 + $0x70] sm:$0xff]
        %v2558 = vld [vmem:[%s2542 + $0x78] sm:$0xff]
        %v2560 = vsel %vm666, %v2543, 0
        %v2563 = vsel %vm666, %v2544, 0
        %v2566 = vsel %vm666, %v2545, 0
        %v2569 = vsel %vm666, %v2546, 0
        %v2572 = vsel %vm666, %v2547, 0
        %v2575 = vsel %vm666, %v2548, 0
        %v2578 = vsel %vm666, %v2549, 0
        %v2581 = vsel %vm666, %v2550, 0
        %v2584 = vsel %vm666, %v2551, 0
        %v2587 = vsel %vm666, %v2552, 0
        %v2590 = vsel %vm666, %v2553, 0
        %v2593 = vsel %vm666, %v2554, 0
        %v2596 = vsel %vm666, %v2555, 0
        %v2599 = vsel %vm666, %v2556, 0
        %v2602 = vsel %vm666, %v2557, 0
        %v2605 = vsel %vm666, %v2558, 0
        %2607 = vmatprep.subr.mxu0 0.0
        %2608 = vmatpush1.msra.mxu0 %v717
        %2609 = vmatprep.subr.mxu0 0.0
        %2610 = vmatpush1.msra.mxu0 0.0
        %2611 = vmatprep.subr.mxu0 0.0
        %2612 = vmatpush1.msra.mxu0 0.0
        %2613 = vmatprep.subr.mxu0 0.0
        %2614 = vmatpush1.msra.mxu0 0.0
        %2615 = vmatprep.subr.mxu0 0.0
        %2616 = vmatpush1.msra.mxu0 0.0
        %2617 = vmatprep.subr.mxu0 0.0
        %2618 = vmatpush1.msra.mxu0 0.0
        %2619 = vmatprep.subr.mxu0 0.0
        %2620 = vmatpush1.msra.mxu0 0.0
        %2621 = vmatprep.subr.mxu0 0.0
        %2622 = vmatpush1.msra.mxu0 0.0
        %2623 = vmatprep.subr.mxu0 0.0
        %2624 = vmatpush1.msra.mxu0 0.0
        %2625 = vmatprep.subr.mxu0 0.0
        %2626 = vmatpush1.msra.mxu0 0.0
        %2627 = vmatprep.subr.mxu0 0.0
        %2628 = vmatpush1.msra.mxu0 0.0
        %2629 = vmatprep.subr.mxu0 0.0
        %2630 = vmatpush1.msra.mxu0 0.0
        %2631 = vmatprep.subr.mxu0 0.0
        %2632 = vmatpush1.msra.mxu0 0.0
        %2633 = vmatprep.subr.mxu0 0.0
        %2634 = vmatpush1.msra.mxu0 0.0
        %2635 = vmatprep.subr.mxu0 0.0
        %2636 = vmatpush1.msra.mxu0 0.0
        %2637 = vmatprep.subr.mxu0 0.0
        %2638 = vmatpush1.msra.mxu0 0.0
        %2639 = vmatprep.subr.mxu0 0.0
        %2640 = vmatpush1.msra.mxu0 0.0
        %2641 = vmatprep.subr.mxu0 0.0
        %2642 = vmatpush1.msra.mxu0 0.0
        %2643 = vmatprep.subr.mxu0 0.0
        %2644 = vmatpush1.msra.mxu0 0.0
        %2645 = vmatprep.subr.mxu0 0.0
        %2646 = vmatpush1.msra.mxu0 0.0
        %2647 = vmatprep.subr.mxu0 0.0
        %2648 = vmatpush1.msra.mxu0 0.0
        %2649 = vmatprep.subr.mxu0 0.0
        %2650 = vmatpush1.msra.mxu0 0.0
        %2651 = vmatprep.subr.mxu0 0.0
        %2652 = vmatpush1.msra.mxu0 0.0
        %2653 = vmatprep.subr.mxu0 0.0
        %2654 = vmatpush1.msra.mxu0 0.0
        %2655 = vmatprep.subr.mxu0 0.0
        %2656 = vmatpush1.msra.mxu0 0.0
        %2657 = vmatprep.subr.mxu0 0.0
        %2658 = vmatpush1.msra.mxu0 0.0
        %2659 = vmatprep.subr.mxu0 0.0
        %2660 = vmatpush1.msra.mxu0 0.0
        %2661 = vmatprep.subr.mxu0 0.0
        %2662 = vmatpush1.msra.mxu0 0.0
        %2663 = vmatprep.subr.mxu0 0.0
        %2664 = vmatpush1.msra.mxu0 0.0
        %2665 = vmatprep.subr.mxu0 0.0
        %2666 = vmatpush1.msra.mxu0 0.0
        %2667 = vmatprep.subr.mxu0 0.0
        %2668 = vmatpush1.msra.mxu0 0.0
        %2669 = vmatprep.subr.mxu0 0.0
        %2670 = vmatpush1.msra.mxu0 0.0
        %2671 = vmatprep.mubr.f32.mxu0 0.0
        %2672 = vmatmul.mubr.f32.gmra.mrb[0].mxu0 %v2560
        %v2673 = vpop.f32.mrb[0].mxu0
        %v2674 = vadd.f32 0.0, %v2673
        %v2675 = vpop.f32.mrb[0].mxu0
        %2676 = vmatprep.mubr.f32.mxu0 0.0
        %2677 = vmatmul.mubr.f32.gmra.mrb[0].mxu0 %v2563
        %v2678 = vpop.f32.mrb[0].mxu0
        %v2679 = vadd.f32 0.0, %v2678
        %v2680 = vpop.f32.mrb[0].mxu0
        %2681 = vmatprep.mubr.f32.mxu0 0.0
        %2682 = vmatmul.mubr.f32.gmra.mrb[0].mxu0 %v2566
        %v2683 = vpop.f32.mrb[0].mxu0
        %v2684 = vadd.f32 0.0, %v2683
        %v2685 = vpop.f32.mrb[0].mxu0
        %2686 = vmatprep.mubr.f32.mxu0 0.0
        %2687 = vmatmul.mubr.f32.gmra.mrb[0].mxu0 %v2569
        %v2688 = vpop.f32.mrb[0].mxu0
        %v2689 = vadd.f32 0.0, %v2688
        %v2690 = vpop.f32.mrb[0].mxu0
        %2691 = vmatprep.mubr.f32.mxu0 0.0
        %2692 = vmatmul.mubr.f32.gmra.mrb[0].mxu0 %v2572
        %v2693 = vpop.f32.mrb[0].mxu0
        %v2694 = vadd.f32 0.0, %v2693
        %v2695 = vpop.f32.mrb[0].mxu0
        %2696 = vmatprep.mubr.f32.mxu0 0.0
        %2697 = vmatmul.mubr.f32.gmra.mrb[0].mxu0 %v2575
        %v2698 = vpop.f32.mrb[0].mxu0
        %v2699 = vadd.f32 0.0, %v2698
        %v2700 = vpop.f32.mrb[0].mxu0
        %2701 = vmatprep.mubr.f32.mxu0 0.0
        %2702 = vmatmul.mubr.f32.gmra.mrb[0].mxu0 %v2578
        %v2703 = vpop.f32.mrb[0].mxu0
        %v2704 = vadd.f32 0.0, %v2703
        %v2705 = vpop.f32.mrb[0].mxu0
        %2706 = vmatprep.mubr.f32.mxu0 0.0
        %2707 = vmatmul.mubr.f32.gmra.mrb[0].mxu0 %v2581
        %v2708 = vpop.f32.mrb[0].mxu0
        %v2709 = vadd.f32 0.0, %v2708
        %v2710 = vpop.f32.mrb[0].mxu0
        %2711 = vmatprep.mubr.f32.mxu0 0.0
        %2712 = vmatmul.mubr.f32.gmra.mrb[0].mxu0 %v2584
        %v2713 = vpop.f32.mrb[0].mxu0
        %v2714 = vadd.f32 0.0, %v2713
        %v2715 = vpop.f32.mrb[0].mxu0
        %2716 = vmatprep.mubr.f32.mxu0 0.0
        %2717 = vmatmul.mubr.f32.gmra.mrb[0].mxu0 %v2587
        %v2718 = vpop.f32.mrb[0].mxu0
        %v2719 = vadd.f32 0.0, %v2718
        %v2720 = vpop.f32.mrb[0].mxu0
        %2721 = vmatprep.mubr.f32.mxu0 0.0
        %2722 = vmatmul.mubr.f32.gmra.mrb[0].mxu0 %v2590
        %v2723 = vpop.f32.mrb[0].mxu0
        %v2724 = vadd.f32 0.0, %v2723
        %v2725 = vpop.f32.mrb[0].mxu0
        %2726 = vmatprep.mubr.f32.mxu0 0.0
        %2727 = vmatmul.mubr.f32.gmra.mrb[0].mxu0 %v2593
        %v2728 = vpop.f32.mrb[0].mxu0
        %v2729 = vadd.f32 0.0, %v2728
        %v2730 = vpop.f32.mrb[0].mxu0
        %2731 = vmatprep.mubr.f32.mxu0 0.0
        %2732 = vmatmul.mubr.f32.gmra.mrb[0].mxu0 %v2596
        %v2733 = vpop.f32.mrb[0].mxu0
        %v2734 = vadd.f32 0.0, %v2733
        %v2735 = vpop.f32.mrb[0].mxu0
        %2736 = vmatprep.mubr.f32.mxu0 0.0
        %2737 = vmatmul.mubr.f32.gmra.mrb[0].mxu0 %v2599
        %v2738 = vpop.f32.mrb[0].mxu0
        %v2739 = vadd.f32 0.0, %v2738
        %v2740 = vpop.f32.mrb[0].mxu0
        %2741 = vmatprep.mubr.f32.mxu0 0.0
        %2742 = vmatmul.mubr.f32.gmra.mrb[0].mxu0 %v2602
        %v2743 = vpop.f32.mrb[0].mxu0
        %v2744 = vadd.f32 0.0, %v2743
        %v2745 = vpop.f32.mrb[0].mxu0
        %2746 = vmatprep.mubr.f32.mxu0 0.0
        %2747 = vmatmul.mubr.f32.gmra.mrb[0].mxu0 %v2605
        %v2748 = vpop.f32.mrb[0].mxu0
        %v2749 = vadd.f32 0.0, %v2748
        %v2750 = vpop.f32.mrb[0].mxu0
        %2751 = vdwg.mxu0
        %v2753 = vsel %vm864, %v2414, 0
        %v2756 = vsel %vm864, %v2415, 0
        %v2759 = vsel %vm864, %v2416, 0
        %v2762 = vsel %vm864, %v2417, 0
        %v2765 = vsel %vm864, %v2418, 0
        %v2768 = vsel %vm864, %v2419, 0
        %v2771 = vsel %vm864, %v2420, 0
        %v2774 = vsel %vm864, %v2421, 0
        %v2777 = vsel %vm864, %v2422, 0
        %v2780 = vsel %vm864, %v2423, 0
        %v2783 = vsel %vm864, %v2424, 0
        %v2786 = vsel %vm864, %v2425, 0
        %v2789 = vsel %vm864, %v2426, 0
        %v2792 = vsel %vm864, %v2427, 0
        %v2795 = vsel %vm864, %v2428, 0
        %v2798 = vsel %vm864, %v2429, 0
        %2800 = vmatprep.subr.mxu0 0.0
        %2801 = vmatpush1.msra.mxu0 %v620
        %2802 = vmatprep.subr.mxu0 0.0
        %2803 = vmatpush1.msra.mxu0 %v621
        %2804 = vmatprep.subr.mxu0 0.0
        %2805 = vmatpush1.msra.mxu0 %v622
        %2806 = vmatprep.subr.mxu0 0.0
        %2807 = vmatpush1.msra.mxu0 %v623
        %2808 = vmatprep.subr.mxu0 0.0
        %2809 = vmatpush1.msra.mxu0 0.0
        %2810 = vmatprep.subr.mxu0 0.0
        %2811 = vmatpush1.msra.mxu0 0.0
        %2812 = vmatprep.subr.mxu0 0.0
        %2813 = vmatpush1.msra.mxu0 0.0
        %2814 = vmatprep.subr.mxu0 0.0
        %2815 = vmatpush1.msra.mxu0 0.0
        %2816 = vmatprep.subr.mxu0 0.0
        %2817 = vmatpush1.msra.mxu0 0.0
        %2818 = vmatprep.subr.mxu0 0.0
        %2819 = vmatpush1.msra.mxu0 0.0
        %2820 = vmatprep.subr.mxu0 0.0
        %2821 = vmatpush1.msra.mxu0 0.0
        %2822 = vmatprep.subr.mxu0 0.0
        %2823 = vmatpush1.msra.mxu0 0.0
        %2824 = vmatprep.subr.mxu0 0.0
        %2825 = vmatpush1.msra.mxu0 0.0
        %2826 = vmatprep.subr.mxu0 0.0
        %2827 = vmatpush1.msra.mxu0 0.0
        %2828 = vmatprep.subr.mxu0 0.0
        %2829 = vmatpush1.msra.mxu0 0.0
        %2830 = vmatprep.subr.mxu0 0.0
        %2831 = vmatpush1.msra.mxu0 0.0
        %2832 = vmatprep.subr.mxu0 0.0
        %2833 = vmatpush1.msra.mxu0 0.0
        %2834 = vmatprep.subr.mxu0 0.0
        %2835 = vmatpush1.msra.mxu0 0.0
        %2836 = vmatprep.subr.mxu0 0.0
        %2837 = vmatpush1.msra.mxu0 0.0
        %2838 = vmatprep.subr.mxu0 0.0
        %2839 = vmatpush1.msra.mxu0 0.0
        %2840 = vmatprep.subr.mxu0 0.0
        %2841 = vmatpush1.msra.mxu0 0.0
        %2842 = vmatprep.subr.mxu0 0.0
        %2843 = vmatpush1.msra.mxu0 0.0
        %2844 = vmatprep.subr.mxu0 0.0
        %2845 = vmatpush1.msra.mxu0 0.0
        %2846 = vmatprep.subr.mxu0 0.0
        %2847 = vmatpush1.msra.mxu0 0.0
        %2848 = vmatprep.subr.mxu0 0.0
        %2849 = vmatpush1.msra.mxu0 0.0
        %2850 = vmatprep.subr.mxu0 0.0
        %2851 = vmatpush1.msra.mxu0 0.0
        %2852 = vmatprep.subr.mxu0 0.0
        %2853 = vmatpush1.msra.mxu0 0.0
        %2854 = vmatprep.subr.mxu0 0.0
        %2855 = vmatpush1.msra.mxu0 0.0
        %2856 = vmatprep.subr.mxu0 0.0
        %2857 = vmatpush1.msra.mxu0 0.0
        %2858 = vmatprep.subr.mxu0 0.0
        %2859 = vmatpush1.msra.mxu0 0.0
        %2860 = vmatprep.subr.mxu0 0.0
        %2861 = vmatpush1.msra.mxu0 0.0
        %2862 = vmatprep.subr.mxu0 0.0
        %2863 = vmatpush1.msra.mxu0 0.0
        %2864 = vmatprep.mubr.f32.mxu0 0.0
        %2865 = vmatmul.mubr.f32.gmra.mrb[0].mxu0 %v2753
        %v2866 = vpop.f32.mrb[0].mxu0
        %v2867 = vadd.f32 %v2674, %v2866
        %v2868 = vpop.f32.mrb[0].mxu0
        %2869 = vmatprep.mubr.f32.mxu0 0.0
        %2870 = vmatmul.mubr.f32.gmra.mrb[0].mxu0 %v2756
        %v2871 = vpop.f32.mrb[0].mxu0
        %v2872 = vadd.f32 %v2679, %v2871
        %v2873 = vpop.f32.mrb[0].mxu0
        %2874 = vmatprep.mubr.f32.mxu0 0.0
        %2875 = vmatmul.mubr.f32.gmra.mrb[0].mxu0 %v2759
        %v2876 = vpop.f32.mrb[0].mxu0
        %v2877 = vadd.f32 %v2684, %v2876
        %v2878 = vpop.f32.mrb[0].mxu0
        %2879 = vmatprep.mubr.f32.mxu0 0.0
        %2880 = vmatmul.mubr.f32.gmra.mrb[0].mxu0 %v2762
        %v2881 = vpop.f32.mrb[0].mxu0
        %v2882 = vadd.f32 %v2689, %v2881
        %v2883 = vpop.f32.mrb[0].mxu0
        %2884 = vmatprep.mubr.f32.mxu0 0.0
        %2885 = vmatmul.mubr.f32.gmra.mrb[0].mxu0 %v2765
        %v2886 = vpop.f32.mrb[0].mxu0
        %v2887 = vadd.f32 %v2694, %v2886
        %v2888 = vpop.f32.mrb[0].mxu0
        %2889 = vmatprep.mubr.f32.mxu0 0.0
        %2890 = vmatmul.mubr.f32.gmra.mrb[0].mxu0 %v2768
        %v2891 = vpop.f32.mrb[0].mxu0
        %v2892 = vadd.f32 %v2699, %v2891
        %v2893 = vpop.f32.mrb[0].mxu0
        %2894 = vmatprep.mubr.f32.mxu0 0.0
        %2895 = vmatmul.mubr.f32.gmra.mrb[0].mxu0 %v2771
        %v2896 = vpop.f32.mrb[0].mxu0
        %v2897 = vadd.f32 %v2704, %v2896
        %v2898 = vpop.f32.mrb[0].mxu0
        %2899 = vmatprep.mubr.f32.mxu0 0.0
        %2900 = vmatmul.mubr.f32.gmra.mrb[0].mxu0 %v2774
        %v2901 = vpop.f32.mrb[0].mxu0
        %v2902 = vadd.f32 %v2709, %v2901
        %v2903 = vpop.f32.mrb[0].mxu0
        %2904 = vmatprep.mubr.f32.mxu0 0.0
        %2905 = vmatmul.mubr.f32.gmra.mrb[0].mxu0 %v2777
        %v2906 = vpop.f32.mrb[0].mxu0
        %v2907 = vadd.f32 %v2714, %v2906
        %v2908 = vpop.f32.mrb[0].mxu0
        %2909 = vmatprep.mubr.f32.mxu0 0.0
        %2910 = vmatmul.mubr.f32.gmra.mrb[0].mxu0 %v2780
        %v2911 = vpop.f32.mrb[0].mxu0
        %v2912 = vadd.f32 %v2719, %v2911
        %v2913 = vpop.f32.mrb[0].mxu0
        %2914 = vmatprep.mubr.f32.mxu0 0.0
        %2915 = vmatmul.mubr.f32.gmra.mrb[0].mxu0 %v2783
        %v2916 = vpop.f32.mrb[0].mxu0
        %v2917 = vadd.f32 %v2724, %v2916
        %v2918 = vpop.f32.mrb[0].mxu0
        %2919 = vmatprep.mubr.f32.mxu0 0.0
        %2920 = vmatmul.mubr.f32.gmra.mrb[0].mxu0 %v2786
        %v2921 = vpop.f32.mrb[0].mxu0
        %v2922 = vadd.f32 %v2729, %v2921
        %v2923 = vpop.f32.mrb[0].mxu0
        %2924 = vmatprep.mubr.f32.mxu0 0.0
        %2925 = vmatmul.mubr.f32.gmra.mrb[0].mxu0 %v2789
        %v2926 = vpop.f32.mrb[0].mxu0
        %v2927 = vadd.f32 %v2734, %v2926
        %v2928 = vpop.f32.mrb[0].mxu0
        %2929 = vmatprep.mubr.f32.mxu0 0.0
        %2930 = vmatmul.mubr.f32.gmra.mrb[0].mxu0 %v2792
        %v2931 = vpop.f32.mrb[0].mxu0
        %v2932 = vadd.f32 %v2739, %v2931
        %v2933 = vpop.f32.mrb[0].mxu0
        %2934 = vmatprep.mubr.f32.mxu0 0.0
        %2935 = vmatmul.mubr.f32.gmra.mrb[0].mxu0 %v2795
        %v2936 = vpop.f32.mrb[0].mxu0
        %v2937 = vadd.f32 %v2744, %v2936
        %v2938 = vpop.f32.mrb[0].mxu0
        %2939 = vmatprep.mubr.f32.mxu0 0.0
        %2940 = vmatmul.mubr.f32.gmra.mrb[0].mxu0 %v2798
        %v2941 = vpop.f32.mrb[0].mxu0
        %v2942 = vadd.f32 %v2749, %v2941
        %v2943 = vpop.f32.mrb[0].mxu0
        %2944 = vdwg.mxu0
        %v2945 = vadd.f32 %v2867, %v1016
        %v2946 = vadd.f32 %v2872, %v1016
        %v2947 = vadd.f32 %v2877, %v1016
        %v2948 = vadd.f32 %v2882, %v1016
        %v2949 = vadd.f32 %v2887, %v1016
        %v2950 = vadd.f32 %v2892, %v1016
        %v2951 = vadd.f32 %v2897, %v1016
        %v2952 = vadd.f32 %v2902, %v1016
        %v2953 = vadd.f32 %v2907, %v1016
        %v2954 = vadd.f32 %v2912, %v1016
        %v2955 = vadd.f32 %v2917, %v1016
        %v2956 = vadd.f32 %v2922, %v1016
        %v2957 = vadd.f32 %v2927, %v1016
        %v2958 = vadd.f32 %v2932, %v1016
        %v2959 = vadd.f32 %v2937, %v1016
        %v2960 = vadd.f32 %v2942, %v1016
        %v2961 = vmax.f32 %v2945, 0.0
        %v2962 = vmax.f32 %v2946, 0.0
        %v2963 = vmax.f32 %v2947, 0.0
        %v2964 = vmax.f32 %v2948, 0.0
        %v2965 = vmax.f32 %v2949, 0.0
        %v2966 = vmax.f32 %v2950, 0.0
        %v2967 = vmax.f32 %v2951, 0.0
        %v2968 = vmax.f32 %v2952, 0.0
        %v2969 = vmax.f32 %v2953, 0.0
        %v2970 = vmax.f32 %v2954, 0.0
        %v2971 = vmax.f32 %v2955, 0.0
        %v2972 = vmax.f32 %v2956, 0.0
        %v2973 = vmax.f32 %v2957, 0.0
        %v2974 = vmax.f32 %v2958, 0.0
        %v2975 = vmax.f32 %v2959, 0.0
        %v2976 = vmax.f32 %v2960, 0.0
        %v2978 = vsel %vm1056, %v2961, 0
        %v2981 = vsel %vm1056, %v2962, 0
        %v2984 = vsel %vm1056, %v2963, 0
        %v2987 = vsel %vm1056, %v2964, 0
        %v2990 = vsel %vm1056, %v2965, 0
        %v2993 = vsel %vm1056, %v2966, 0
        %v2996 = vsel %vm1056, %v2967, 0
        %v2999 = vsel %vm1056, %v2968, 0
        %v3002 = vsel %vm1056, %v2969, 0
        %v3005 = vsel %vm1056, %v2970, 0
        %v3008 = vsel %vm1056, %v2971, 0
        %v3011 = vsel %vm1056, %v2972, 0
        %v3014 = vsel %vm1056, %v2973, 0
        %v3017 = vsel %vm1056, %v2974, 0
        %v3020 = vsel %vm1056, %v2975, 0
        %v3023 = vsel %vm1056, %v2976, 0
        %3025 = vmatprep.subr.mxu0 0.0
        %3026 = vmatpush1.msra.mxu0 %v626
        %3027 = vmatprep.subr.mxu0 0.0
        %3028 = vmatpush1.msra.mxu0 %v627
        %3029 = vmatprep.subr.mxu0 0.0
        %3030 = vmatpush1.msra.mxu0 %v628
        %3031 = vmatprep.subr.mxu0 0.0
        %3032 = vmatpush1.msra.mxu0 %v629
        %3033 = vmatprep.subr.mxu0 0.0
        %3034 = vmatpush1.msra.mxu0 %v630
        %3035 = vmatprep.subr.mxu0 0.0
        %3036 = vmatpush1.msra.mxu0 %v631
        %3037 = vmatprep.subr.mxu0 0.0
        %3038 = vmatpush1.msra.mxu0 %v632
        %3039 = vmatprep.subr.mxu0 0.0
        %3040 = vmatpush1.msra.mxu0 %v633
        %3041 = vmatprep.subr.mxu0 0.0
        %3042 = vmatpush1.msra.mxu0 0.0
        %3043 = vmatprep.subr.mxu0 0.0
        %3044 = vmatpush1.msra.mxu0 0.0
        %3045 = vmatprep.subr.mxu0 0.0
        %3046 = vmatpush1.msra.mxu0 0.0
        %3047 = vmatprep.subr.mxu0 0.0
        %3048 = vmatpush1.msra.mxu0 0.0
        %3049 = vmatprep.subr.mxu0 0.0
        %3050 = vmatpush1.msra.mxu0 0.0
        %3051 = vmatprep.subr.mxu0 0.0
        %3052 = vmatpush1.msra.mxu0 0.0
        %3053 = vmatprep.subr.mxu0 0.0
        %3054 = vmatpush1.msra.mxu0 0.0
        %3055 = vmatprep.subr.mxu0 0.0
        %3056 = vmatpush1.msra.mxu0 0.0
        %3057 = vmatprep.subr.mxu0 0.0
        %3058 = vmatpush1.msra.mxu0 0.0
        %3059 = vmatprep.subr.mxu0 0.0
        %3060 = vmatpush1.msra.mxu0 0.0
        %3061 = vmatprep.subr.mxu0 0.0
        %3062 = vmatpush1.msra.mxu0 0.0
        %3063 = vmatprep.subr.mxu0 0.0
        %3064 = vmatpush1.msra.mxu0 0.0
        %3065 = vmatprep.subr.mxu0 0.0
        %3066 = vmatpush1.msra.mxu0 0.0
        %3067 = vmatprep.subr.mxu0 0.0
        %3068 = vmatpush1.msra.mxu0 0.0
        %3069 = vmatprep.subr.mxu0 0.0
        %3070 = vmatpush1.msra.mxu0 0.0
        %3071 = vmatprep.subr.mxu0 0.0
        %3072 = vmatpush1.msra.mxu0 0.0
        %3073 = vmatprep.subr.mxu0 0.0
        %3074 = vmatpush1.msra.mxu0 0.0
        %3075 = vmatprep.subr.mxu0 0.0
        %3076 = vmatpush1.msra.mxu0 0.0
        %3077 = vmatprep.subr.mxu0 0.0
        %3078 = vmatpush1.msra.mxu0 0.0
        %3079 = vmatprep.subr.mxu0 0.0
        %3080 = vmatpush1.msra.mxu0 0.0
        %3081 = vmatprep.subr.mxu0 0.0
        %3082 = vmatpush1.msra.mxu0 0.0
        %3083 = vmatprep.subr.mxu0 0.0
        %3084 = vmatpush1.msra.mxu0 0.0
        %3085 = vmatprep.subr.mxu0 0.0
        %3086 = vmatpush1.msra.mxu0 0.0
        %3087 = vmatprep.subr.mxu0 0.0
        %3088 = vmatpush1.msra.mxu0 0.0
        %3089 = vmatprep.mubr.f32.mxu0 0.0
        %3090 = vmatmul.mubr.f32.gmra.mrb[0].mxu0 %v2978
        %v3091 = vpop.f32.mrb[0].mxu0
        %v3092 = vadd.f32 %v1054, %v3091
        %v3093 = vpop.f32.mrb[0].mxu0
        %3094 = vmatprep.mubr.f32.mxu0 0.0
        %3095 = vmatmul.mubr.f32.gmra.mrb[0].mxu0 %v2981
        %v3096 = vpop.f32.mrb[0].mxu0
        %v3097 = vadd.f32 %v1054, %v3096
        %v3098 = vpop.f32.mrb[0].mxu0
        %3099 = vmatprep.mubr.f32.mxu0 0.0
        %3100 = vmatmul.mubr.f32.gmra.mrb[0].mxu0 %v2984
        %v3101 = vpop.f32.mrb[0].mxu0
        %v3102 = vadd.f32 %v1054, %v3101
        %v3103 = vpop.f32.mrb[0].mxu0
        %3104 = vmatprep.mubr.f32.mxu0 0.0
        %3105 = vmatmul.mubr.f32.gmra.mrb[0].mxu0 %v2987
        %v3106 = vpop.f32.mrb[0].mxu0
        %v3107 = vadd.f32 %v1054, %v3106
        %v3108 = vpop.f32.mrb[0].mxu0
        %3109 = vmatprep.mubr.f32.mxu0 0.0
        %3110 = vmatmul.mubr.f32.gmra.mrb[0].mxu0 %v2990
        %v3111 = vpop.f32.mrb[0].mxu0
        %v3112 = vadd.f32 %v1054, %v3111
        %v3113 = vpop.f32.mrb[0].mxu0
        %3114 = vmatprep.mubr.f32.mxu0 0.0
        %3115 = vmatmul.mubr.f32.gmra.mrb[0].mxu0 %v2993
        %v3116 = vpop.f32.mrb[0].mxu0
        %v3117 = vadd.f32 %v1054, %v3116
        %v3118 = vpop.f32.mrb[0].mxu0
        %3119 = vmatprep.mubr.f32.mxu0 0.0
        %3120 = vmatmul.mubr.f32.gmra.mrb[0].mxu0 %v2996
        %v3121 = vpop.f32.mrb[0].mxu0
        %v3122 = vadd.f32 %v1054, %v3121
        %v3123 = vpop.f32.mrb[0].mxu0
        %3124 = vmatprep.mubr.f32.mxu0 0.0
        %3125 = vmatmul.mubr.f32.gmra.mrb[0].mxu0 %v2999
        %v3126 = vpop.f32.mrb[0].mxu0
        %v3127 = vadd.f32 %v1054, %v3126
        %v3128 = vpop.f32.mrb[0].mxu0
        %3129 = vmatprep.mubr.f32.mxu0 0.0
        %3130 = vmatmul.mubr.f32.gmra.mrb[0].mxu0 %v3002
        %v3131 = vpop.f32.mrb[0].mxu0
        %v3132 = vadd.f32 %v1054, %v3131
        %v3133 = vpop.f32.mrb[0].mxu0
        %3134 = vmatprep.mubr.f32.mxu0 0.0
        %3135 = vmatmul.mubr.f32.gmra.mrb[0].mxu0 %v3005
        %v3136 = vpop.f32.mrb[0].mxu0
        %v3137 = vadd.f32 %v1054, %v3136
        %v3138 = vpop.f32.mrb[0].mxu0
        %3139 = vmatprep.mubr.f32.mxu0 0.0
        %3140 = vmatmul.mubr.f32.gmra.mrb[0].mxu0 %v3008
        %v3141 = vpop.f32.mrb[0].mxu0
        %v3142 = vadd.f32 %v1054, %v3141
        %v3143 = vpop.f32.mrb[0].mxu0
        %3144 = vmatprep.mubr.f32.mxu0 0.0
        %3145 = vmatmul.mubr.f32.gmra.mrb[0].mxu0 %v3011
        %v3146 = vpop.f32.mrb[0].mxu0
        %v3147 = vadd.f32 %v1054, %v3146
        %v3148 = vpop.f32.mrb[0].mxu0
        %3149 = vmatprep.mubr.f32.mxu0 0.0
        %3150 = vmatmul.mubr.f32.gmra.mrb[0].mxu0 %v3014
        %v3151 = vpop.f32.mrb[0].mxu0
        %v3152 = vadd.f32 %v1054, %v3151
        %v3153 = vpop.f32.mrb[0].mxu0
        %3154 = vmatprep.mubr.f32.mxu0 0.0
        %3155 = vmatmul.mubr.f32.gmra.mrb[0].mxu0 %v3017
        %v3156 = vpop.f32.mrb[0].mxu0
        %v3157 = vadd.f32 %v1054, %v3156
        %v3158 = vpop.f32.mrb[0].mxu0
        %3159 = vmatprep.mubr.f32.mxu0 0.0
        %3160 = vmatmul.mubr.f32.gmra.mrb[0].mxu0 %v3020
        %v3161 = vpop.f32.mrb[0].mxu0
        %v3162 = vadd.f32 %v1054, %v3161
        %v3163 = vpop.f32.mrb[0].mxu0
        %3164 = vmatprep.mubr.f32.mxu0 0.0
        %3165 = vmatmul.mubr.f32.gmra.mrb[0].mxu0 %v3023
        %v3166 = vpop.f32.mrb[0].mxu0
        %v3167 = vadd.f32 %v1054, %v3166
        %v3168 = vpop.f32.mrb[0].mxu0
        %3169 = vdwg.mxu0
        %v3170 = vmax.f32 %v3092, 0.0
        %v3171 = vmax.f32 %v3097, 0.0
        %v3172 = vmax.f32 %v3102, 0.0
        %v3173 = vmax.f32 %v3107, 0.0
        %v3174 = vmax.f32 %v3112, 0.0
        %v3175 = vmax.f32 %v3117, 0.0
        %v3176 = vmax.f32 %v3122, 0.0
        %v3177 = vmax.f32 %v3127, 0.0
        %v3178 = vmax.f32 %v3132, 0.0
        %v3179 = vmax.f32 %v3137, 0.0
        %v3180 = vmax.f32 %v3142, 0.0
        %v3181 = vmax.f32 %v3147, 0.0
        %v3182 = vmax.f32 %v3152, 0.0
        %v3183 = vmax.f32 %v3157, 0.0
        %v3184 = vmax.f32 %v3162, 0.0
        %v3185 = vmax.f32 %v3167, 0.0
        %v3187 = vsel %vm1056, %v3170, 0
        %v3190 = vsel %vm1056, %v3171, 0
        %v3193 = vsel %vm1056, %v3172, 0
        %v3196 = vsel %vm1056, %v3173, 0
        %v3199 = vsel %vm1056, %v3174, 0
        %v3202 = vsel %vm1056, %v3175, 0
        %v3205 = vsel %vm1056, %v3176, 0
        %v3208 = vsel %vm1056, %v3177, 0
        %v3211 = vsel %vm1056, %v3178, 0
        %v3214 = vsel %vm1056, %v3179, 0
        %v3217 = vsel %vm1056, %v3180, 0
        %v3220 = vsel %vm1056, %v3181, 0
        %v3223 = vsel %vm1056, %v3182, 0
        %v3226 = vsel %vm1056, %v3183, 0
        %v3229 = vsel %vm1056, %v3184, 0
        %v3232 = vsel %vm1056, %v3185, 0
        %3234 = vmatprep.subr.mxu0 0.0
        %3235 = vmatpush1.msra.mxu0 %v635
        %3236 = vmatprep.subr.mxu0 0.0
        %3237 = vmatpush1.msra.mxu0 %v636
        %3238 = vmatprep.subr.mxu0 0.0
        %3239 = vmatpush1.msra.mxu0 %v637
        %3240 = vmatprep.subr.mxu0 0.0
        %3241 = vmatpush1.msra.mxu0 %v638
        %3242 = vmatprep.subr.mxu0 0.0
        %3243 = vmatpush1.msra.mxu0 %v639
        %3244 = vmatprep.subr.mxu0 0.0
        %3245 = vmatpush1.msra.mxu0 %v640
        %3246 = vmatprep.subr.mxu0 0.0
        %3247 = vmatpush1.msra.mxu0 %v641
        %3248 = vmatprep.subr.mxu0 0.0
        %3249 = vmatpush1.msra.mxu0 %v642
        %3250 = vmatprep.subr.mxu0 0.0
        %3251 = vmatpush1.msra.mxu0 0.0
        %3252 = vmatprep.subr.mxu0 0.0
        %3253 = vmatpush1.msra.mxu0 0.0
        %3254 = vmatprep.subr.mxu0 0.0
        %3255 = vmatpush1.msra.mxu0 0.0
        %3256 = vmatprep.subr.mxu0 0.0
        %3257 = vmatpush1.msra.mxu0 0.0
        %3258 = vmatprep.subr.mxu0 0.0
        %3259 = vmatpush1.msra.mxu0 0.0
        %3260 = vmatprep.subr.mxu0 0.0
        %3261 = vmatpush1.msra.mxu0 0.0
        %3262 = vmatprep.subr.mxu0 0.0
        %3263 = vmatpush1.msra.mxu0 0.0
        %3264 = vmatprep.subr.mxu0 0.0
        %3265 = vmatpush1.msra.mxu0 0.0
        %3266 = vmatprep.subr.mxu0 0.0
        %3267 = vmatpush1.msra.mxu0 0.0
        %3268 = vmatprep.subr.mxu0 0.0
        %3269 = vmatpush1.msra.mxu0 0.0
        %3270 = vmatprep.subr.mxu0 0.0
        %3271 = vmatpush1.msra.mxu0 0.0
        %3272 = vmatprep.subr.mxu0 0.0
        %3273 = vmatpush1.msra.mxu0 0.0
        %3274 = vmatprep.subr.mxu0 0.0
        %3275 = vmatpush1.msra.mxu0 0.0
        %3276 = vmatprep.subr.mxu0 0.0
        %3277 = vmatpush1.msra.mxu0 0.0
        %3278 = vmatprep.subr.mxu0 0.0
        %3279 = vmatpush1.msra.mxu0 0.0
        %3280 = vmatprep.subr.mxu0 0.0
        %3281 = vmatpush1.msra.mxu0 0.0
        %3282 = vmatprep.subr.mxu0 0.0
        %3283 = vmatpush1.msra.mxu0 0.0
        %3284 = vmatprep.subr.mxu0 0.0
        %3285 = vmatpush1.msra.mxu0 0.0
        %3286 = vmatprep.subr.mxu0 0.0
        %3287 = vmatpush1.msra.mxu0 0.0
        %3288 = vmatprep.subr.mxu0 0.0
        %3289 = vmatpush1.msra.mxu0 0.0
        %3290 = vmatprep.subr.mxu0 0.0
        %3291 = vmatpush1.msra.mxu0 0.0
        %3292 = vmatprep.subr.mxu0 0.0
        %3293 = vmatpush1.msra.mxu0 0.0
        %3294 = vmatprep.subr.mxu0 0.0
        %3295 = vmatpush1.msra.mxu0 0.0
        %3296 = vmatprep.subr.mxu0 0.0
        %3297 = vmatpush1.msra.mxu0 0.0
        %3298 = vmatprep.mubr.f32.mxu0 0.0
        %3299 = vmatmul.mubr.f32.gmra.mrb[0].mxu0 %v3187
        %v3300 = vpop.f32.mrb[0].mxu0
        %v3301 = vadd.f32 %v1270, %v3300
        %v3302 = vpop.f32.mrb[0].mxu0
        %3303 = vmatprep.mubr.f32.mxu0 0.0
        %3304 = vmatmul.mubr.f32.gmra.mrb[0].mxu0 %v3190
        %v3305 = vpop.f32.mrb[0].mxu0
        %v3306 = vadd.f32 %v1270, %v3305
        %v3307 = vpop.f32.mrb[0].mxu0
        %3308 = vmatprep.mubr.f32.mxu0 0.0
        %3309 = vmatmul.mubr.f32.gmra.mrb[0].mxu0 %v3193
        %v3310 = vpop.f32.mrb[0].mxu0
        %v3311 = vadd.f32 %v1270, %v3310
        %v3312 = vpop.f32.mrb[0].mxu0
        %3313 = vmatprep.mubr.f32.mxu0 0.0
        %3314 = vmatmul.mubr.f32.gmra.mrb[0].mxu0 %v3196
        %v3315 = vpop.f32.mrb[0].mxu0
        %v3316 = vadd.f32 %v1270, %v3315
        %v3317 = vpop.f32.mrb[0].mxu0
        %3318 = vmatprep.mubr.f32.mxu0 0.0
        %3319 = vmatmul.mubr.f32.gmra.mrb[0].mxu0 %v3199
        %v3320 = vpop.f32.mrb[0].mxu0
        %v3321 = vadd.f32 %v1270, %v3320
        %v3322 = vpop.f32.mrb[0].mxu0
        %3323 = vmatprep.mubr.f32.mxu0 0.0
        %3324 = vmatmul.mubr.f32.gmra.mrb[0].mxu0 %v3202
        %v3325 = vpop.f32.mrb[0].mxu0
        %v3326 = vadd.f32 %v1270, %v3325
        %v3327 = vpop.f32.mrb[0].mxu0
        %3328 = vmatprep.mubr.f32.mxu0 0.0
        %3329 = vmatmul.mubr.f32.gmra.mrb[0].mxu0 %v3205
        %v3330 = vpop.f32.mrb[0].mxu0
        %v3331 = vadd.f32 %v1270, %v3330
        %v3332 = vpop.f32.mrb[0].mxu0
        %3333 = vmatprep.mubr.f32.mxu0 0.0
        %3334 = vmatmul.mubr.f32.gmra.mrb[0].mxu0 %v3208
        %v3335 = vpop.f32.mrb[0].mxu0
        %v3336 = vadd.f32 %v1270, %v3335
        %v3337 = vpop.f32.mrb[0].mxu0
        %3338 = vmatprep.mubr.f32.mxu0 0.0
        %3339 = vmatmul.mubr.f32.gmra.mrb[0].mxu0 %v3211
        %v3340 = vpop.f32.mrb[0].mxu0
        %v3341 = vadd.f32 %v1270, %v3340
        %v3342 = vpop.f32.mrb[0].mxu0
        %3343 = vmatprep.mubr.f32.mxu0 0.0
        %3344 = vmatmul.mubr.f32.gmra.mrb[0].mxu0 %v3214
        %v3345 = vpop.f32.mrb[0].mxu0
        %v3346 = vadd.f32 %v1270, %v3345
        %v3347 = vpop.f32.mrb[0].mxu0
        %3348 = vmatprep.mubr.f32.mxu0 0.0
        %3349 = vmatmul.mubr.f32.gmra.mrb[0].mxu0 %v3217
        %v3350 = vpop.f32.mrb[0].mxu0
        %v3351 = vadd.f32 %v1270, %v3350
        %v3352 = vpop.f32.mrb[0].mxu0
        %3353 = vmatprep.mubr.f32.mxu0 0.0
        %3354 = vmatmul.mubr.f32.gmra.mrb[0].mxu0 %v3220
        %v3355 = vpop.f32.mrb[0].mxu0
        %v3356 = vadd.f32 %v1270, %v3355
        %v3357 = vpop.f32.mrb[0].mxu0
        %3358 = vmatprep.mubr.f32.mxu0 0.0
        %3359 = vmatmul.mubr.f32.gmra.mrb[0].mxu0 %v3223
        %v3360 = vpop.f32.mrb[0].mxu0
        %v3361 = vadd.f32 %v1270, %v3360
        %v3362 = vpop.f32.mrb[0].mxu0
        %3363 = vmatprep.mubr.f32.mxu0 0.0
        %3364 = vmatmul.mubr.f32.gmra.mrb[0].mxu0 %v3226
        %v3365 = vpop.f32.mrb[0].mxu0
        %v3366 = vadd.f32 %v1270, %v3365
        %v3367 = vpop.f32.mrb[0].mxu0
        %3368 = vmatprep.mubr.f32.mxu0 0.0
        %3369 = vmatmul.mubr.f32.gmra.mrb[0].mxu0 %v3229
        %v3370 = vpop.f32.mrb[0].mxu0
        %v3371 = vadd.f32 %v1270, %v3370
        %v3372 = vpop.f32.mrb[0].mxu0
        %3373 = vmatprep.mubr.f32.mxu0 0.0
        %3374 = vmatmul.mubr.f32.gmra.mrb[0].mxu0 %v3232
        %v3375 = vpop.f32.mrb[0].mxu0
        %v3376 = vadd.f32 %v1270, %v3375
        %v3377 = vpop.f32.mrb[0].mxu0
        %3378 = vdwg.mxu0
        %v3379 = vmax.f32 %v3301, 0.0
        %v3380 = vmax.f32 %v3306, 0.0
        %v3381 = vmax.f32 %v3311, 0.0
        %v3382 = vmax.f32 %v3316, 0.0
        %v3383 = vmax.f32 %v3321, 0.0
        %v3384 = vmax.f32 %v3326, 0.0
        %v3385 = vmax.f32 %v3331, 0.0
        %v3386 = vmax.f32 %v3336, 0.0
        %v3387 = vmax.f32 %v3341, 0.0
        %v3388 = vmax.f32 %v3346, 0.0
        %v3389 = vmax.f32 %v3351, 0.0
        %v3390 = vmax.f32 %v3356, 0.0
        %v3391 = vmax.f32 %v3361, 0.0
        %v3392 = vmax.f32 %v3366, 0.0
        %v3393 = vmax.f32 %v3371, 0.0
        %v3394 = vmax.f32 %v3376, 0.0
        %v3395 = vxor.u32 %v3301, 2147483648
        %v3396 = vxor.u32 %v3306, 2147483648
        %v3397 = vxor.u32 %v3311, 2147483648
        %v3398 = vxor.u32 %v3316, 2147483648
        %v3399 = vxor.u32 %v3321, 2147483648
        %v3400 = vxor.u32 %v3326, 2147483648
        %v3401 = vxor.u32 %v3331, 2147483648
        %v3402 = vxor.u32 %v3336, 2147483648
        %v3403 = vxor.u32 %v3341, 2147483648
        %v3404 = vxor.u32 %v3346, 2147483648
        %v3405 = vxor.u32 %v3351, 2147483648
        %v3406 = vxor.u32 %v3356, 2147483648
        %v3407 = vxor.u32 %v3361, 2147483648
        %v3408 = vxor.u32 %v3366, 2147483648
        %v3409 = vxor.u32 %v3371, 2147483648
        %v3410 = vxor.u32 %v3376, 2147483648
        %v3411 = vmul.f32 %v3395, 1.442695
        %v3412 = vpow.pop %v3411
        %v3413 = vmul.f32 %v3396, 1.442695
        %v3414 = vpow.pop %v3413
        %v3415 = vmul.f32 %v3397, 1.442695
        %v3416 = vpow.pop %v3415
        %v3417 = vmul.f32 %v3398, 1.442695
        %v3418 = vpow.pop %v3417
        %v3419 = vmul.f32 %v3399, 1.442695
        %v3420 = vpow.pop %v3419
        %v3421 = vmul.f32 %v3400, 1.442695
        %v3422 = vpow.pop %v3421
        %v3423 = vmul.f32 %v3401, 1.442695
        %v3424 = vpow.pop %v3423
        %v3425 = vmul.f32 %v3402, 1.442695
        %v3426 = vpow.pop %v3425
        %v3427 = vmul.f32 %v3403, 1.442695
        %v3428 = vpow.pop %v3427
        %v3429 = vmul.f32 %v3404, 1.442695
        %v3430 = vpow.pop %v3429
        %v3431 = vmul.f32 %v3405, 1.442695
        %v3432 = vpow.pop %v3431
        %v3433 = vmul.f32 %v3406, 1.442695
        %v3434 = vpow.pop %v3433
        %v3435 = vmul.f32 %v3407, 1.442695
        %v3436 = vpow.pop %v3435
        %v3437 = vmul.f32 %v3408, 1.442695
        %v3438 = vpow.pop %v3437
        %v3439 = vmul.f32 %v3409, 1.442695
        %v3440 = vpow.pop %v3439
        %v3441 = vmul.f32 %v3410, 1.442695
        %v3442 = vpow.pop %v3441
        %v3443 = vadd.f32 %v3412, 1.0
        %v3444 = vadd.f32 %v3414, 1.0
        %v3445 = vadd.f32 %v3416, 1.0
        %v3446 = vadd.f32 %v3418, 1.0
        %v3447 = vadd.f32 %v3420, 1.0
        %v3448 = vadd.f32 %v3422, 1.0
        %v3449 = vadd.f32 %v3424, 1.0
        %v3450 = vadd.f32 %v3426, 1.0
        %v3451 = vadd.f32 %v3428, 1.0
        %v3452 = vadd.f32 %v3430, 1.0
        %v3453 = vadd.f32 %v3432, 1.0
        %v3454 = vadd.f32 %v3434, 1.0
        %v3455 = vadd.f32 %v3436, 1.0
        %v3456 = vadd.f32 %v3438, 1.0
        %v3457 = vadd.f32 %v3440, 1.0
        %v3458 = vadd.f32 %v3442, 1.0
        %v3459 = vrcp.pop %v3443
        %v3460 = vmul.f32 1.0, %v3459
        %v3461 = vrcp.pop %v3444
        %v3462 = vmul.f32 1.0, %v3461
        %v3463 = vrcp.pop %v3445
        %v3464 = vmul.f32 1.0, %v3463
        %v3465 = vrcp.pop %v3446
        %v3466 = vmul.f32 1.0, %v3465
        %v3467 = vrcp.pop %v3447
        %v3468 = vmul.f32 1.0, %v3467
        %v3469 = vrcp.pop %v3448
        %v3470 = vmul.f32 1.0, %v3469
        %v3471 = vrcp.pop %v3449
        %v3472 = vmul.f32 1.0, %v3471
        %v3473 = vrcp.pop %v3450
        %v3474 = vmul.f32 1.0, %v3473
        %v3475 = vrcp.pop %v3451
        %v3476 = vmul.f32 1.0, %v3475
        %v3477 = vrcp.pop %v3452
        %v3478 = vmul.f32 1.0, %v3477
        %v3479 = vrcp.pop %v3453
        %v3480 = vmul.f32 1.0, %v3479
        %v3481 = vrcp.pop %v3454
        %v3482 = vmul.f32 1.0, %v3481
        %v3483 = vrcp.pop %v3455
        %v3484 = vmul.f32 1.0, %v3483
        %v3485 = vrcp.pop %v3456
        %v3486 = vmul.f32 1.0, %v3485
        %v3487 = vrcp.pop %v3457
        %v3488 = vmul.f32 1.0, %v3487
        %v3489 = vrcp.pop %v3458
        %v3490 = vmul.f32 1.0, %v3489
        %v3491 = vmul.f32 %v2526, %v3460
        %v3492 = vmul.f32 %v2527, %v3462
        %v3493 = vmul.f32 %v2528, %v3464
        %v3494 = vmul.f32 %v2529, %v3466
        %v3495 = vmul.f32 %v2530, %v3468
        %v3496 = vmul.f32 %v2531, %v3470
        %v3497 = vmul.f32 %v2532, %v3472
        %v3498 = vmul.f32 %v2533, %v3474
        %v3499 = vmul.f32 %v2534, %v3476
        %v3500 = vmul.f32 %v2535, %v3478
        %v3501 = vmul.f32 %v2536, %v3480
        %v3502 = vmul.f32 %v2537, %v3482
        %v3503 = vmul.f32 %v2538, %v3484
        %v3504 = vmul.f32 %v2539, %v3486
        %v3505 = vmul.f32 %v2540, %v3488
        %v3506 = vmul.f32 %v2541, %v3490
        %s3507 = scalar_lea.vmem %s585, 384 [#allocation2]
        %v3508 = vld [vmem:[%s3507] sm:$0xff]
        %v3509 = vld [vmem:[%s3507 + $0x8] sm:$0xff]
        %v3510 = vld [vmem:[%s3507 + $0x10] sm:$0xff]
        %v3511 = vld [vmem:[%s3507 + $0x18] sm:$0xff]
        %v3512 = vld [vmem:[%s3507 + $0x20] sm:$0xff]
        %v3513 = vld [vmem:[%s3507 + $0x28] sm:$0xff]
        %v3514 = vld [vmem:[%s3507 + $0x30] sm:$0xff]
        %v3515 = vld [vmem:[%s3507 + $0x38] sm:$0xff]
        %v3516 = vld [vmem:[%s3507 + $0x40] sm:$0xff]
        %v3517 = vld [vmem:[%s3507 + $0x48] sm:$0xff]
        %v3518 = vld [vmem:[%s3507 + $0x50] sm:$0xff]
        %v3519 = vld [vmem:[%s3507 + $0x58] sm:$0xff]
        %v3520 = vld [vmem:[%s3507 + $0x60] sm:$0xff]
        %v3521 = vld [vmem:[%s3507 + $0x68] sm:$0xff]
        %v3522 = vld [vmem:[%s3507 + $0x70] sm:$0xff]
        %v3523 = vld [vmem:[%s3507 + $0x78] sm:$0xff]
        %v3525 = vsel %vm666, %v3508, 0
        %v3528 = vsel %vm666, %v3509, 0
        %v3531 = vsel %vm666, %v3510, 0
        %v3534 = vsel %vm666, %v3511, 0
        %v3537 = vsel %vm666, %v3512, 0
        %v3540 = vsel %vm666, %v3513, 0
        %v3543 = vsel %vm666, %v3514, 0
        %v3546 = vsel %vm666, %v3515, 0
        %v3549 = vsel %vm666, %v3516, 0
        %v3552 = vsel %vm666, %v3517, 0
        %v3555 = vsel %vm666, %v3518, 0
        %v3558 = vsel %vm666, %v3519, 0
        %v3561 = vsel %vm666, %v3520, 0
        %v3564 = vsel %vm666, %v3521, 0
        %v3567 = vsel %vm666, %v3522, 0
        %v3570 = vsel %vm666, %v3523, 0
        %3572 = vmatprep.subr.mxu0 0.0
        %3573 = vmatpush1.msra.mxu0 %v717
        %3574 = vmatprep.subr.mxu0 0.0
        %3575 = vmatpush1.msra.mxu0 0.0
        %3576 = vmatprep.subr.mxu0 0.0
        %3577 = vmatpush1.msra.mxu0 0.0
        %3578 = vmatprep.subr.mxu0 0.0
        %3579 = vmatpush1.msra.mxu0 0.0
        %3580 = vmatprep.subr.mxu0 0.0
        %3581 = vmatpush1.msra.mxu0 0.0
        %3582 = vmatprep.subr.mxu0 0.0
        %3583 = vmatpush1.msra.mxu0 0.0
        %3584 = vmatprep.subr.mxu0 0.0
        %3585 = vmatpush1.msra.mxu0 0.0
        %3586 = vmatprep.subr.mxu0 0.0
        %3587 = vmatpush1.msra.mxu0 0.0
        %3588 = vmatprep.subr.mxu0 0.0
        %3589 = vmatpush1.msra.mxu0 0.0
        %3590 = vmatprep.subr.mxu0 0.0
        %3591 = vmatpush1.msra.mxu0 0.0
        %3592 = vmatprep.subr.mxu0 0.0
        %3593 = vmatpush1.msra.mxu0 0.0
        %3594 = vmatprep.subr.mxu0 0.0
        %3595 = vmatpush1.msra.mxu0 0.0
        %3596 = vmatprep.subr.mxu0 0.0
        %3597 = vmatpush1.msra.mxu0 0.0
        %3598 = vmatprep.subr.mxu0 0.0
        %3599 = vmatpush1.msra.mxu0 0.0
        %3600 = vmatprep.subr.mxu0 0.0
        %3601 = vmatpush1.msra.mxu0 0.0
        %3602 = vmatprep.subr.mxu0 0.0
        %3603 = vmatpush1.msra.mxu0 0.0
        %3604 = vmatprep.subr.mxu0 0.0
        %3605 = vmatpush1.msra.mxu0 0.0
        %3606 = vmatprep.subr.mxu0 0.0
        %3607 = vmatpush1.msra.mxu0 0.0
        %3608 = vmatprep.subr.mxu0 0.0
        %3609 = vmatpush1.msra.mxu0 0.0
        %3610 = vmatprep.subr.mxu0 0.0
        %3611 = vmatpush1.msra.mxu0 0.0
        %3612 = vmatprep.subr.mxu0 0.0
        %3613 = vmatpush1.msra.mxu0 0.0
        %3614 = vmatprep.subr.mxu0 0.0
        %3615 = vmatpush1.msra.mxu0 0.0
        %3616 = vmatprep.subr.mxu0 0.0
        %3617 = vmatpush1.msra.mxu0 0.0
        %3618 = vmatprep.subr.mxu0 0.0
        %3619 = vmatpush1.msra.mxu0 0.0
        %3620 = vmatprep.subr.mxu0 0.0
        %3621 = vmatpush1.msra.mxu0 0.0
        %3622 = vmatprep.subr.mxu0 0.0
        %3623 = vmatpush1.msra.mxu0 0.0
        %3624 = vmatprep.subr.mxu0 0.0
        %3625 = vmatpush1.msra.mxu0 0.0
        %3626 = vmatprep.subr.mxu0 0.0
        %3627 = vmatpush1.msra.mxu0 0.0
        %3628 = vmatprep.subr.mxu0 0.0
        %3629 = vmatpush1.msra.mxu0 0.0
        %3630 = vmatprep.subr.mxu0 0.0
        %3631 = vmatpush1.msra.mxu0 0.0
        %3632 = vmatprep.subr.mxu0 0.0
        %3633 = vmatpush1.msra.mxu0 0.0
        %3634 = vmatprep.subr.mxu0 0.0
        %3635 = vmatpush1.msra.mxu0 0.0
        %3636 = vmatprep.mubr.f32.mxu0 0.0
        %3637 = vmatmul.mubr.f32.gmra.mrb[0].mxu0 %v3525
        %v3638 = vpop.f32.mrb[0].mxu0
        %v3639 = vadd.f32 0.0, %v3638
        %v3640 = vpop.f32.mrb[0].mxu0
        %3641 = vmatprep.mubr.f32.mxu0 0.0
        %3642 = vmatmul.mubr.f32.gmra.mrb[0].mxu0 %v3528
        %v3643 = vpop.f32.mrb[0].mxu0
        %v3644 = vadd.f32 0.0, %v3643
        %v3645 = vpop.f32.mrb[0].mxu0
        %3646 = vmatprep.mubr.f32.mxu0 0.0
        %3647 = vmatmul.mubr.f32.gmra.mrb[0].mxu0 %v3531
        %v3648 = vpop.f32.mrb[0].mxu0
        %v3649 = vadd.f32 0.0, %v3648
        %v3650 = vpop.f32.mrb[0].mxu0
        %3651 = vmatprep.mubr.f32.mxu0 0.0
        %3652 = vmatmul.mubr.f32.gmra.mrb[0].mxu0 %v3534
        %v3653 = vpop.f32.mrb[0].mxu0
        %v3654 = vadd.f32 0.0, %v3653
        %v3655 = vpop.f32.mrb[0].mxu0
        %3656 = vmatprep.mubr.f32.mxu0 0.0
        %3657 = vmatmul.mubr.f32.gmra.mrb[0].mxu0 %v3537
        %v3658 = vpop.f32.mrb[0].mxu0
        %v3659 = vadd.f32 0.0, %v3658
        %v3660 = vpop.f32.mrb[0].mxu0
        %3661 = vmatprep.mubr.f32.mxu0 0.0
        %3662 = vmatmul.mubr.f32.gmra.mrb[0].mxu0 %v3540
        %v3663 = vpop.f32.mrb[0].mxu0
        %v3664 = vadd.f32 0.0, %v3663
        %v3665 = vpop.f32.mrb[0].mxu0
        %3666 = vmatprep.mubr.f32.mxu0 0.0
        %3667 = vmatmul.mubr.f32.gmra.mrb[0].mxu0 %v3543
        %v3668 = vpop.f32.mrb[0].mxu0
        %v3669 = vadd.f32 0.0, %v3668
        %v3670 = vpop.f32.mrb[0].mxu0
        %3671 = vmatprep.mubr.f32.mxu0 0.0
        %3672 = vmatmul.mubr.f32.gmra.mrb[0].mxu0 %v3546
        %v3673 = vpop.f32.mrb[0].mxu0
        %v3674 = vadd.f32 0.0, %v3673
        %v3675 = vpop.f32.mrb[0].mxu0
        %3676 = vmatprep.mubr.f32.mxu0 0.0
        %3677 = vmatmul.mubr.f32.gmra.mrb[0].mxu0 %v3549
        %v3678 = vpop.f32.mrb[0].mxu0
        %v3679 = vadd.f32 0.0, %v3678
        %v3680 = vpop.f32.mrb[0].mxu0
        %3681 = vmatprep.mubr.f32.mxu0 0.0
        %3682 = vmatmul.mubr.f32.gmra.mrb[0].mxu0 %v3552
        %v3683 = vpop.f32.mrb[0].mxu0
        %v3684 = vadd.f32 0.0, %v3683
        %v3685 = vpop.f32.mrb[0].mxu0
        %3686 = vmatprep.mubr.f32.mxu0 0.0
        %3687 = vmatmul.mubr.f32.gmra.mrb[0].mxu0 %v3555
        %v3688 = vpop.f32.mrb[0].mxu0
        %v3689 = vadd.f32 0.0, %v3688
        %v3690 = vpop.f32.mrb[0].mxu0
        %3691 = vmatprep.mubr.f32.mxu0 0.0
        %3692 = vmatmul.mubr.f32.gmra.mrb[0].mxu0 %v3558
        %v3693 = vpop.f32.mrb[0].mxu0
        %v3694 = vadd.f32 0.0, %v3693
        %v3695 = vpop.f32.mrb[0].mxu0
        %3696 = vmatprep.mubr.f32.mxu0 0.0
        %3697 = vmatmul.mubr.f32.gmra.mrb[0].mxu0 %v3561
        %v3698 = vpop.f32.mrb[0].mxu0
        %v3699 = vadd.f32 0.0, %v3698
        %v3700 = vpop.f32.mrb[0].mxu0
        %3701 = vmatprep.mubr.f32.mxu0 0.0
        %3702 = vmatmul.mubr.f32.gmra.mrb[0].mxu0 %v3564
        %v3703 = vpop.f32.mrb[0].mxu0
        %v3704 = vadd.f32 0.0, %v3703
        %v3705 = vpop.f32.mrb[0].mxu0
        %3706 = vmatprep.mubr.f32.mxu0 0.0
        %3707 = vmatmul.mubr.f32.gmra.mrb[0].mxu0 %v3567
        %v3708 = vpop.f32.mrb[0].mxu0
        %v3709 = vadd.f32 0.0, %v3708
        %v3710 = vpop.f32.mrb[0].mxu0
        %3711 = vmatprep.mubr.f32.mxu0 0.0
        %3712 = vmatmul.mubr.f32.gmra.mrb[0].mxu0 %v3570
        %v3713 = vpop.f32.mrb[0].mxu0
        %v3714 = vadd.f32 0.0, %v3713
        %v3715 = vpop.f32.mrb[0].mxu0
        %3716 = vdwg.mxu0
        %v3718 = vsel %vm864, %v3379, 0
        %v3721 = vsel %vm864, %v3380, 0
        %v3724 = vsel %vm864, %v3381, 0
        %v3727 = vsel %vm864, %v3382, 0
        %v3730 = vsel %vm864, %v3383, 0
        %v3733 = vsel %vm864, %v3384, 0
        %v3736 = vsel %vm864, %v3385, 0
        %v3739 = vsel %vm864, %v3386, 0
        %v3742 = vsel %vm864, %v3387, 0
        %v3745 = vsel %vm864, %v3388, 0
        %v3748 = vsel %vm864, %v3389, 0
        %v3751 = vsel %vm864, %v3390, 0
        %v3754 = vsel %vm864, %v3391, 0
        %v3757 = vsel %vm864, %v3392, 0
        %v3760 = vsel %vm864, %v3393, 0
        %v3763 = vsel %vm864, %v3394, 0
        %3765 = vmatprep.subr.mxu0 0.0
        %3766 = vmatpush1.msra.mxu0 %v620
        %3767 = vmatprep.subr.mxu0 0.0
        %3768 = vmatpush1.msra.mxu0 %v621
        %3769 = vmatprep.subr.mxu0 0.0
        %3770 = vmatpush1.msra.mxu0 %v622
        %3771 = vmatprep.subr.mxu0 0.0
        %3772 = vmatpush1.msra.mxu0 %v623
        %3773 = vmatprep.subr.mxu0 0.0
        %3774 = vmatpush1.msra.mxu0 0.0
        %3775 = vmatprep.subr.mxu0 0.0
        %3776 = vmatpush1.msra.mxu0 0.0
        %3777 = vmatprep.subr.mxu0 0.0
        %3778 = vmatpush1.msra.mxu0 0.0
        %3779 = vmatprep.subr.mxu0 0.0
        %3780 = vmatpush1.msra.mxu0 0.0
        %3781 = vmatprep.subr.mxu0 0.0
        %3782 = vmatpush1.msra.mxu0 0.0
        %3783 = vmatprep.subr.mxu0 0.0
        %3784 = vmatpush1.msra.mxu0 0.0
        %3785 = vmatprep.subr.mxu0 0.0
        %3786 = vmatpush1.msra.mxu0 0.0
        %3787 = vmatprep.subr.mxu0 0.0
        %3788 = vmatpush1.msra.mxu0 0.0
        %3789 = vmatprep.subr.mxu0 0.0
        %3790 = vmatpush1.msra.mxu0 0.0
        %3791 = vmatprep.subr.mxu0 0.0
        %3792 = vmatpush1.msra.mxu0 0.0
        %3793 = vmatprep.subr.mxu0 0.0
        %3794 = vmatpush1.msra.mxu0 0.0
        %3795 = vmatprep.subr.mxu0 0.0
        %3796 = vmatpush1.msra.mxu0 0.0
        %3797 = vmatprep.subr.mxu0 0.0
        %3798 = vmatpush1.msra.mxu0 0.0
        %3799 = vmatprep.subr.mxu0 0.0
        %3800 = vmatpush1.msra.mxu0 0.0
        %3801 = vmatprep.subr.mxu0 0.0
        %3802 = vmatpush1.msra.mxu0 0.0
        %3803 = vmatprep.subr.mxu0 0.0
        %3804 = vmatpush1.msra.mxu0 0.0
        %3805 = vmatprep.subr.mxu0 0.0
        %3806 = vmatpush1.msra.mxu0 0.0
        %3807 = vmatprep.subr.mxu0 0.0
        %3808 = vmatpush1.msra.mxu0 0.0
        %3809 = vmatprep.subr.mxu0 0.0
        %3810 = vmatpush1.msra.mxu0 0.0
        %3811 = vmatprep.subr.mxu0 0.0
        %3812 = vmatpush1.msra.mxu0 0.0
        %3813 = vmatprep.subr.mxu0 0.0
        %3814 = vmatpush1.msra.mxu0 0.0
        %3815 = vmatprep.subr.mxu0 0.0
        %3816 = vmatpush1.msra.mxu0 0.0
        %3817 = vmatprep.subr.mxu0 0.0
        %3818 = vmatpush1.msra.mxu0 0.0
        %3819 = vmatprep.subr.mxu0 0.0
        %3820 = vmatpush1.msra.mxu0 0.0
        %3821 = vmatprep.subr.mxu0 0.0
        %3822 = vmatpush1.msra.mxu0 0.0
        %3823 = vmatprep.subr.mxu0 0.0
        %3824 = vmatpush1.msra.mxu0 0.0
        %3825 = vmatprep.subr.mxu0 0.0
        %3826 = vmatpush1.msra.mxu0 0.0
        %3827 = vmatprep.subr.mxu0 0.0
        %3828 = vmatpush1.msra.mxu0 0.0
        %3829 = vmatprep.mubr.f32.mxu0 0.0
        %3830 = vmatmul.mubr.f32.gmra.mrb[0].mxu0 %v3718
        %v3831 = vpop.f32.mrb[0].mxu0
        %v3832 = vadd.f32 %v3639, %v3831
        %v3833 = vpop.f32.mrb[0].mxu0
        %3834 = vmatprep.mubr.f32.mxu0 0.0
        %3835 = vmatmul.mubr.f32.gmra.mrb[0].mxu0 %v3721
        %v3836 = vpop.f32.mrb[0].mxu0
        %v3837 = vadd.f32 %v3644, %v3836
        %v3838 = vpop.f32.mrb[0].mxu0
        %3839 = vmatprep.mubr.f32.mxu0 0.0
        %3840 = vmatmul.mubr.f32.gmra.mrb[0].mxu0 %v3724
        %v3841 = vpop.f32.mrb[0].mxu0
        %v3842 = vadd.f32 %v3649, %v3841
        %v3843 = vpop.f32.mrb[0].mxu0
        %3844 = vmatprep.mubr.f32.mxu0 0.0
        %3845 = vmatmul.mubr.f32.gmra.mrb[0].mxu0 %v3727
        %v3846 = vpop.f32.mrb[0].mxu0
        %v3847 = vadd.f32 %v3654, %v3846
        %v3848 = vpop.f32.mrb[0].mxu0
        %3849 = vmatprep.mubr.f32.mxu0 0.0
        %3850 = vmatmul.mubr.f32.gmra.mrb[0].mxu0 %v3730
        %v3851 = vpop.f32.mrb[0].mxu0
        %v3852 = vadd.f32 %v3659, %v3851
        %v3853 = vpop.f32.mrb[0].mxu0
        %3854 = vmatprep.mubr.f32.mxu0 0.0
        %3855 = vmatmul.mubr.f32.gmra.mrb[0].mxu0 %v3733
        %v3856 = vpop.f32.mrb[0].mxu0
        %v3857 = vadd.f32 %v3664, %v3856
        %v3858 = vpop.f32.mrb[0].mxu0
        %3859 = vmatprep.mubr.f32.mxu0 0.0
        %3860 = vmatmul.mubr.f32.gmra.mrb[0].mxu0 %v3736
        %v3861 = vpop.f32.mrb[0].mxu0
        %v3862 = vadd.f32 %v3669, %v3861
        %v3863 = vpop.f32.mrb[0].mxu0
        %3864 = vmatprep.mubr.f32.mxu0 0.0
        %3865 = vmatmul.mubr.f32.gmra.mrb[0].mxu0 %v3739
        %v3866 = vpop.f32.mrb[0].mxu0
        %v3867 = vadd.f32 %v3674, %v3866
        %v3868 = vpop.f32.mrb[0].mxu0
        %3869 = vmatprep.mubr.f32.mxu0 0.0
        %3870 = vmatmul.mubr.f32.gmra.mrb[0].mxu0 %v3742
        %v3871 = vpop.f32.mrb[0].mxu0
        %v3872 = vadd.f32 %v3679, %v3871
        %v3873 = vpop.f32.mrb[0].mxu0
        %3874 = vmatprep.mubr.f32.mxu0 0.0
        %3875 = vmatmul.mubr.f32.gmra.mrb[0].mxu0 %v3745
        %v3876 = vpop.f32.mrb[0].mxu0
        %v3877 = vadd.f32 %v3684, %v3876
        %v3878 = vpop.f32.mrb[0].mxu0
        %3879 = vmatprep.mubr.f32.mxu0 0.0
        %3880 = vmatmul.mubr.f32.gmra.mrb[0].mxu0 %v3748
        %v3881 = vpop.f32.mrb[0].mxu0
        %v3882 = vadd.f32 %v3689, %v3881
        %v3883 = vpop.f32.mrb[0].mxu0
        %3884 = vmatprep.mubr.f32.mxu0 0.0
        %3885 = vmatmul.mubr.f32.gmra.mrb[0].mxu0 %v3751
        %v3886 = vpop.f32.mrb[0].mxu0
        %v3887 = vadd.f32 %v3694, %v3886
        %v3888 = vpop.f32.mrb[0].mxu0
        %3889 = vmatprep.mubr.f32.mxu0 0.0
        %3890 = vmatmul.mubr.f32.gmra.mrb[0].mxu0 %v3754
        %v3891 = vpop.f32.mrb[0].mxu0
        %v3892 = vadd.f32 %v3699, %v3891
        %v3893 = vpop.f32.mrb[0].mxu0
        %3894 = vmatprep.mubr.f32.mxu0 0.0
        %3895 = vmatmul.mubr.f32.gmra.mrb[0].mxu0 %v3757
        %v3896 = vpop.f32.mrb[0].mxu0
        %v3897 = vadd.f32 %v3704, %v3896
        %v3898 = vpop.f32.mrb[0].mxu0
        %3899 = vmatprep.mubr.f32.mxu0 0.0
        %3900 = vmatmul.mubr.f32.gmra.mrb[0].mxu0 %v3760
        %v3901 = vpop.f32.mrb[0].mxu0
        %v3902 = vadd.f32 %v3709, %v3901
        %v3903 = vpop.f32.mrb[0].mxu0
        %3904 = vmatprep.mubr.f32.mxu0 0.0
        %3905 = vmatmul.mubr.f32.gmra.mrb[0].mxu0 %v3763
        %v3906 = vpop.f32.mrb[0].mxu0
        %v3907 = vadd.f32 %v3714, %v3906
        %v3908 = vpop.f32.mrb[0].mxu0
        %3909 = vdwg.mxu0
        %v3910 = vadd.f32 %v3832, %v1016
        %v3911 = vadd.f32 %v3837, %v1016
        %v3912 = vadd.f32 %v3842, %v1016
        %v3913 = vadd.f32 %v3847, %v1016
        %v3914 = vadd.f32 %v3852, %v1016
        %v3915 = vadd.f32 %v3857, %v1016
        %v3916 = vadd.f32 %v3862, %v1016
        %v3917 = vadd.f32 %v3867, %v1016
        %v3918 = vadd.f32 %v3872, %v1016
        %v3919 = vadd.f32 %v3877, %v1016
        %v3920 = vadd.f32 %v3882, %v1016
        %v3921 = vadd.f32 %v3887, %v1016
        %v3922 = vadd.f32 %v3892, %v1016
        %v3923 = vadd.f32 %v3897, %v1016
        %v3924 = vadd.f32 %v3902, %v1016
        %v3925 = vadd.f32 %v3907, %v1016
        %v3926 = vmax.f32 %v3910, 0.0
        %v3927 = vmax.f32 %v3911, 0.0
        %v3928 = vmax.f32 %v3912, 0.0
        %v3929 = vmax.f32 %v3913, 0.0
        %v3930 = vmax.f32 %v3914, 0.0
        %v3931 = vmax.f32 %v3915, 0.0
        %v3932 = vmax.f32 %v3916, 0.0
        %v3933 = vmax.f32 %v3917, 0.0
        %v3934 = vmax.f32 %v3918, 0.0
        %v3935 = vmax.f32 %v3919, 0.0
        %v3936 = vmax.f32 %v3920, 0.0
        %v3937 = vmax.f32 %v3921, 0.0
        %v3938 = vmax.f32 %v3922, 0.0
        %v3939 = vmax.f32 %v3923, 0.0
        %v3940 = vmax.f32 %v3924, 0.0
        %v3941 = vmax.f32 %v3925, 0.0
        %v3943 = vsel %vm1056, %v3926, 0
        %v3946 = vsel %vm1056, %v3927, 0
        %v3949 = vsel %vm1056, %v3928, 0
        %v3952 = vsel %vm1056, %v3929, 0
        %v3955 = vsel %vm1056, %v3930, 0
        %v3958 = vsel %vm1056, %v3931, 0
        %v3961 = vsel %vm1056, %v3932, 0
        %v3964 = vsel %vm1056, %v3933, 0
        %v3967 = vsel %vm1056, %v3934, 0
        %v3970 = vsel %vm1056, %v3935, 0
        %v3973 = vsel %vm1056, %v3936, 0
        %v3976 = vsel %vm1056, %v3937, 0
        %v3979 = vsel %vm1056, %v3938, 0
        %v3982 = vsel %vm1056, %v3939, 0
        %v3985 = vsel %vm1056, %v3940, 0
        %v3988 = vsel %vm1056, %v3941, 0
        %3990 = vmatprep.subr.mxu0 0.0
        %3991 = vmatpush1.msra.mxu0 %v626
        %3992 = vmatprep.subr.mxu0 0.0
        %3993 = vmatpush1.msra.mxu0 %v627
        %3994 = vmatprep.subr.mxu0 0.0
        %3995 = vmatpush1.msra.mxu0 %v628
        %3996 = vmatprep.subr.mxu0 0.0
        %3997 = vmatpush1.msra.mxu0 %v629
        %3998 = vmatprep.subr.mxu0 0.0
        %3999 = vmatpush1.msra.mxu0 %v630
        %4000 = vmatprep.subr.mxu0 0.0
        %4001 = vmatpush1.msra.mxu0 %v631
        %4002 = vmatprep.subr.mxu0 0.0
        %4003 = vmatpush1.msra.mxu0 %v632
        %4004 = vmatprep.subr.mxu0 0.0
        %4005 = vmatpush1.msra.mxu0 %v633
        %4006 = vmatprep.subr.mxu0 0.0
        %4007 = vmatpush1.msra.mxu0 0.0
        %4008 = vmatprep.subr.mxu0 0.0
        %4009 = vmatpush1.msra.mxu0 0.0
        %4010 = vmatprep.subr.mxu0 0.0
        %4011 = vmatpush1.msra.mxu0 0.0
        %4012 = vmatprep.subr.mxu0 0.0
        %4013 = vmatpush1.msra.mxu0 0.0
        %4014 = vmatprep.subr.mxu0 0.0
        %4015 = vmatpush1.msra.mxu0 0.0
        %4016 = vmatprep.subr.mxu0 0.0
        %4017 = vmatpush1.msra.mxu0 0.0
        %4018 = vmatprep.subr.mxu0 0.0
        %4019 = vmatpush1.msra.mxu0 0.0
        %4020 = vmatprep.subr.mxu0 0.0
        %4021 = vmatpush1.msra.mxu0 0.0
        %4022 = vmatprep.subr.mxu0 0.0
        %4023 = vmatpush1.msra.mxu0 0.0
        %4024 = vmatprep.subr.mxu0 0.0
        %4025 = vmatpush1.msra.mxu0 0.0
        %4026 = vmatprep.subr.mxu0 0.0
        %4027 = vmatpush1.msra.mxu0 0.0
        %4028 = vmatprep.subr.mxu0 0.0
        %4029 = vmatpush1.msra.mxu0 0.0
        %4030 = vmatprep.subr.mxu0 0.0
        %4031 = vmatpush1.msra.mxu0 0.0
        %4032 = vmatprep.subr.mxu0 0.0
        %4033 = vmatpush1.msra.mxu0 0.0
        %4034 = vmatprep.subr.mxu0 0.0
        %4035 = vmatpush1.msra.mxu0 0.0
        %4036 = vmatprep.subr.mxu0 0.0
        %4037 = vmatpush1.msra.mxu0 0.0
        %4038 = vmatprep.subr.mxu0 0.0
        %4039 = vmatpush1.msra.mxu0 0.0
        %4040 = vmatprep.subr.mxu0 0.0
        %4041 = vmatpush1.msra.mxu0 0.0
        %4042 = vmatprep.subr.mxu0 0.0
        %4043 = vmatpush1.msra.mxu0 0.0
        %4044 = vmatprep.subr.mxu0 0.0
        %4045 = vmatpush1.msra.mxu0 0.0
        %4046 = vmatprep.subr.mxu0 0.0
        %4047 = vmatpush1.msra.mxu0 0.0
        %4048 = vmatprep.subr.mxu0 0.0
        %4049 = vmatpush1.msra.mxu0 0.0
        %4050 = vmatprep.subr.mxu0 0.0
        %4051 = vmatpush1.msra.mxu0 0.0
        %4052 = vmatprep.subr.mxu0 0.0
        %4053 = vmatpush1.msra.mxu0 0.0
        %4054 = vmatprep.mubr.f32.mxu0 0.0
        %4055 = vmatmul.mubr.f32.gmra.mrb[0].mxu0 %v3943
        %v4056 = vpop.f32.mrb[0].mxu0
        %v4057 = vadd.f32 %v1054, %v4056
        %v4058 = vpop.f32.mrb[0].mxu0
        %4059 = vmatprep.mubr.f32.mxu0 0.0
        %4060 = vmatmul.mubr.f32.gmra.mrb[0].mxu0 %v3946
        %v4061 = vpop.f32.mrb[0].mxu0
        %v4062 = vadd.f32 %v1054, %v4061
        %v4063 = vpop.f32.mrb[0].mxu0
        %4064 = vmatprep.mubr.f32.mxu0 0.0
        %4065 = vmatmul.mubr.f32.gmra.mrb[0].mxu0 %v3949
        %v4066 = vpop.f32.mrb[0].mxu0
        %v4067 = vadd.f32 %v1054, %v4066
        %v4068 = vpop.f32.mrb[0].mxu0
        %4069 = vmatprep.mubr.f32.mxu0 0.0
        %4070 = vmatmul.mubr.f32.gmra.mrb[0].mxu0 %v3952
        %v4071 = vpop.f32.mrb[0].mxu0
        %v4072 = vadd.f32 %v1054, %v4071
        %v4073 = vpop.f32.mrb[0].mxu0
        %4074 = vmatprep.mubr.f32.mxu0 0.0
        %4075 = vmatmul.mubr.f32.gmra.mrb[0].mxu0 %v3955
        %v4076 = vpop.f32.mrb[0].mxu0
        %v4077 = vadd.f32 %v1054, %v4076
        %v4078 = vpop.f32.mrb[0].mxu0
        %4079 = vmatprep.mubr.f32.mxu0 0.0
        %4080 = vmatmul.mubr.f32.gmra.mrb[0].mxu0 %v3958
        %v4081 = vpop.f32.mrb[0].mxu0
        %v4082 = vadd.f32 %v1054, %v4081
        %v4083 = vpop.f32.mrb[0].mxu0
        %4084 = vmatprep.mubr.f32.mxu0 0.0
        %4085 = vmatmul.mubr.f32.gmra.mrb[0].mxu0 %v3961
        %v4086 = vpop.f32.mrb[0].mxu0
        %v4087 = vadd.f32 %v1054, %v4086
        %v4088 = vpop.f32.mrb[0].mxu0
        %4089 = vmatprep.mubr.f32.mxu0 0.0
        %4090 = vmatmul.mubr.f32.gmra.mrb[0].mxu0 %v3964
        %v4091 = vpop.f32.mrb[0].mxu0
        %v4092 = vadd.f32 %v1054, %v4091
        %v4093 = vpop.f32.mrb[0].mxu0
        %4094 = vmatprep.mubr.f32.mxu0 0.0
        %4095 = vmatmul.mubr.f32.gmra.mrb[0].mxu0 %v3967
        %v4096 = vpop.f32.mrb[0].mxu0
        %v4097 = vadd.f32 %v1054, %v4096
        %v4098 = vpop.f32.mrb[0].mxu0
        %4099 = vmatprep.mubr.f32.mxu0 0.0
        %4100 = vmatmul.mubr.f32.gmra.mrb[0].mxu0 %v3970
        %v4101 = vpop.f32.mrb[0].mxu0
        %v4102 = vadd.f32 %v1054, %v4101
        %v4103 = vpop.f32.mrb[0].mxu0
        %4104 = vmatprep.mubr.f32.mxu0 0.0
        %4105 = vmatmul.mubr.f32.gmra.mrb[0].mxu0 %v3973
        %v4106 = vpop.f32.mrb[0].mxu0
        %v4107 = vadd.f32 %v1054, %v4106
        %v4108 = vpop.f32.mrb[0].mxu0
        %4109 = vmatprep.mubr.f32.mxu0 0.0
        %4110 = vmatmul.mubr.f32.gmra.mrb[0].mxu0 %v3976
        %v4111 = vpop.f32.mrb[0].mxu0
        %v4112 = vadd.f32 %v1054, %v4111
        %v4113 = vpop.f32.mrb[0].mxu0
        %4114 = vmatprep.mubr.f32.mxu0 0.0
        %4115 = vmatmul.mubr.f32.gmra.mrb[0].mxu0 %v3979
        %v4116 = vpop.f32.mrb[0].mxu0
        %v4117 = vadd.f32 %v1054, %v4116
        %v4118 = vpop.f32.mrb[0].mxu0
        %4119 = vmatprep.mubr.f32.mxu0 0.0
        %4120 = vmatmul.mubr.f32.gmra.mrb[0].mxu0 %v3982
        %v4121 = vpop.f32.mrb[0].mxu0
        %v4122 = vadd.f32 %v1054, %v4121
        %v4123 = vpop.f32.mrb[0].mxu0
        %4124 = vmatprep.mubr.f32.mxu0 0.0
        %4125 = vmatmul.mubr.f32.gmra.mrb[0].mxu0 %v3985
        %v4126 = vpop.f32.mrb[0].mxu0
        %v4127 = vadd.f32 %v1054, %v4126
        %v4128 = vpop.f32.mrb[0].mxu0
        %4129 = vmatprep.mubr.f32.mxu0 0.0
        %4130 = vmatmul.mubr.f32.gmra.mrb[0].mxu0 %v3988
        %v4131 = vpop.f32.mrb[0].mxu0
        %v4132 = vadd.f32 %v1054, %v4131
        %v4133 = vpop.f32.mrb[0].mxu0
        %4134 = vdwg.mxu0
        %v4135 = vmax.f32 %v4057, 0.0
        %v4136 = vmax.f32 %v4062, 0.0
        %v4137 = vmax.f32 %v4067, 0.0
        %v4138 = vmax.f32 %v4072, 0.0
        %v4139 = vmax.f32 %v4077, 0.0
        %v4140 = vmax.f32 %v4082, 0.0
        %v4141 = vmax.f32 %v4087, 0.0
        %v4142 = vmax.f32 %v4092, 0.0
        %v4143 = vmax.f32 %v4097, 0.0
        %v4144 = vmax.f32 %v4102, 0.0
        %v4145 = vmax.f32 %v4107, 0.0
        %v4146 = vmax.f32 %v4112, 0.0
        %v4147 = vmax.f32 %v4117, 0.0
        %v4148 = vmax.f32 %v4122, 0.0
        %v4149 = vmax.f32 %v4127, 0.0
        %v4150 = vmax.f32 %v4132, 0.0
        %v4152 = vsel %vm1056, %v4135, 0
        %v4155 = vsel %vm1056, %v4136, 0
        %v4158 = vsel %vm1056, %v4137, 0
        %v4161 = vsel %vm1056, %v4138, 0
        %v4164 = vsel %vm1056, %v4139, 0
        %v4167 = vsel %vm1056, %v4140, 0
        %v4170 = vsel %vm1056, %v4141, 0
        %v4173 = vsel %vm1056, %v4142, 0
        %v4176 = vsel %vm1056, %v4143, 0
        %v4179 = vsel %vm1056, %v4144, 0
        %v4182 = vsel %vm1056, %v4145, 0
        %v4185 = vsel %vm1056, %v4146, 0
        %v4188 = vsel %vm1056, %v4147, 0
        %v4191 = vsel %vm1056, %v4148, 0
        %v4194 = vsel %vm1056, %v4149, 0
        %v4197 = vsel %vm1056, %v4150, 0
        %4199 = vmatprep.subr.mxu0 0.0
        %4200 = vmatpush1.msra.mxu0 %v635
        %4201 = vmatprep.subr.mxu0 0.0
        %4202 = vmatpush1.msra.mxu0 %v636
        %4203 = vmatprep.subr.mxu0 0.0
        %4204 = vmatpush1.msra.mxu0 %v637
        %4205 = vmatprep.subr.mxu0 0.0
        %4206 = vmatpush1.msra.mxu0 %v638
        %4207 = vmatprep.subr.mxu0 0.0
        %4208 = vmatpush1.msra.mxu0 %v639
        %4209 = vmatprep.subr.mxu0 0.0
        %4210 = vmatpush1.msra.mxu0 %v640
        %4211 = vmatprep.subr.mxu0 0.0
        %4212 = vmatpush1.msra.mxu0 %v641
        %4213 = vmatprep.subr.mxu0 0.0
        %4214 = vmatpush1.msra.mxu0 %v642
        %4215 = vmatprep.subr.mxu0 0.0
        %4216 = vmatpush1.msra.mxu0 0.0
        %4217 = vmatprep.subr.mxu0 0.0
        %4218 = vmatpush1.msra.mxu0 0.0
        %4219 = vmatprep.subr.mxu0 0.0
        %4220 = vmatpush1.msra.mxu0 0.0
        %4221 = vmatprep.subr.mxu0 0.0
        %4222 = vmatpush1.msra.mxu0 0.0
        %4223 = vmatprep.subr.mxu0 0.0
        %4224 = vmatpush1.msra.mxu0 0.0
        %4225 = vmatprep.subr.mxu0 0.0
        %4226 = vmatpush1.msra.mxu0 0.0
        %4227 = vmatprep.subr.mxu0 0.0
        %4228 = vmatpush1.msra.mxu0 0.0
        %4229 = vmatprep.subr.mxu0 0.0
        %4230 = vmatpush1.msra.mxu0 0.0
        %4231 = vmatprep.subr.mxu0 0.0
        %4232 = vmatpush1.msra.mxu0 0.0
        %4233 = vmatprep.subr.mxu0 0.0
        %4234 = vmatpush1.msra.mxu0 0.0
        %4235 = vmatprep.subr.mxu0 0.0
        %4236 = vmatpush1.msra.mxu0 0.0
        %4237 = vmatprep.subr.mxu0 0.0
        %4238 = vmatpush1.msra.mxu0 0.0
        %4239 = vmatprep.subr.mxu0 0.0
        %4240 = vmatpush1.msra.mxu0 0.0
        %4241 = vmatprep.subr.mxu0 0.0
        %4242 = vmatpush1.msra.mxu0 0.0
        %4243 = vmatprep.subr.mxu0 0.0
        %4244 = vmatpush1.msra.mxu0 0.0
        %4245 = vmatprep.subr.mxu0 0.0
        %4246 = vmatpush1.msra.mxu0 0.0
        %4247 = vmatprep.subr.mxu0 0.0
        %4248 = vmatpush1.msra.mxu0 0.0
        %4249 = vmatprep.subr.mxu0 0.0
        %4250 = vmatpush1.msra.mxu0 0.0
        %4251 = vmatprep.subr.mxu0 0.0
        %4252 = vmatpush1.msra.mxu0 0.0
        %4253 = vmatprep.subr.mxu0 0.0
        %4254 = vmatpush1.msra.mxu0 0.0
        %4255 = vmatprep.subr.mxu0 0.0
        %4256 = vmatpush1.msra.mxu0 0.0
        %4257 = vmatprep.subr.mxu0 0.0
        %4258 = vmatpush1.msra.mxu0 0.0
        %4259 = vmatprep.subr.mxu0 0.0
        %4260 = vmatpush1.msra.mxu0 0.0
        %4261 = vmatprep.subr.mxu0 0.0
        %4262 = vmatpush1.msra.mxu0 0.0
        %4263 = vmatprep.mubr.f32.mxu0 0.0
        %4264 = vmatmul.mubr.f32.gmra.mrb[0].mxu0 %v4152
        %v4265 = vpop.f32.mrb[0].mxu0
        %v4266 = vadd.f32 %v1270, %v4265
        %v4267 = vpop.f32.mrb[0].mxu0
        %4268 = vmatprep.mubr.f32.mxu0 0.0
        %4269 = vmatmul.mubr.f32.gmra.mrb[0].mxu0 %v4155
        %v4270 = vpop.f32.mrb[0].mxu0
        %v4271 = vadd.f32 %v1270, %v4270
        %v4272 = vpop.f32.mrb[0].mxu0
        %4273 = vmatprep.mubr.f32.mxu0 0.0
        %4274 = vmatmul.mubr.f32.gmra.mrb[0].mxu0 %v4158
        %v4275 = vpop.f32.mrb[0].mxu0
        %v4276 = vadd.f32 %v1270, %v4275
        %v4277 = vpop.f32.mrb[0].mxu0
        %4278 = vmatprep.mubr.f32.mxu0 0.0
        %4279 = vmatmul.mubr.f32.gmra.mrb[0].mxu0 %v4161
        %v4280 = vpop.f32.mrb[0].mxu0
        %v4281 = vadd.f32 %v1270, %v4280
        %v4282 = vpop.f32.mrb[0].mxu0
        %4283 = vmatprep.mubr.f32.mxu0 0.0
        %4284 = vmatmul.mubr.f32.gmra.mrb[0].mxu0 %v4164
        %v4285 = vpop.f32.mrb[0].mxu0
        %v4286 = vadd.f32 %v1270, %v4285
        %v4287 = vpop.f32.mrb[0].mxu0
        %4288 = vmatprep.mubr.f32.mxu0 0.0
        %4289 = vmatmul.mubr.f32.gmra.mrb[0].mxu0 %v4167
        %v4290 = vpop.f32.mrb[0].mxu0
        %v4291 = vadd.f32 %v1270, %v4290
        %v4292 = vpop.f32.mrb[0].mxu0
        %4293 = vmatprep.mubr.f32.mxu0 0.0
        %4294 = vmatmul.mubr.f32.gmra.mrb[0].mxu0 %v4170
        %v4295 = vpop.f32.mrb[0].mxu0
        %v4296 = vadd.f32 %v1270, %v4295
        %v4297 = vpop.f32.mrb[0].mxu0
        %4298 = vmatprep.mubr.f32.mxu0 0.0
        %4299 = vmatmul.mubr.f32.gmra.mrb[0].mxu0 %v4173
        %v4300 = vpop.f32.mrb[0].mxu0
        %v4301 = vadd.f32 %v1270, %v4300
        %v4302 = vpop.f32.mrb[0].mxu0
        %4303 = vmatprep.mubr.f32.mxu0 0.0
        %4304 = vmatmul.mubr.f32.gmra.mrb[0].mxu0 %v4176
        %v4305 = vpop.f32.mrb[0].mxu0
        %v4306 = vadd.f32 %v1270, %v4305
        %v4307 = vpop.f32.mrb[0].mxu0
        %4308 = vmatprep.mubr.f32.mxu0 0.0
        %4309 = vmatmul.mubr.f32.gmra.mrb[0].mxu0 %v4179
        %v4310 = vpop.f32.mrb[0].mxu0
        %v4311 = vadd.f32 %v1270, %v4310
        %v4312 = vpop.f32.mrb[0].mxu0
        %4313 = vmatprep.mubr.f32.mxu0 0.0
        %4314 = vmatmul.mubr.f32.gmra.mrb[0].mxu0 %v4182
        %v4315 = vpop.f32.mrb[0].mxu0
        %v4316 = vadd.f32 %v1270, %v4315
        %v4317 = vpop.f32.mrb[0].mxu0
        %4318 = vmatprep.mubr.f32.mxu0 0.0
        %4319 = vmatmul.mubr.f32.gmra.mrb[0].mxu0 %v4185
        %v4320 = vpop.f32.mrb[0].mxu0
        %v4321 = vadd.f32 %v1270, %v4320
        %v4322 = vpop.f32.mrb[0].mxu0
        %4323 = vmatprep.mubr.f32.mxu0 0.0
        %4324 = vmatmul.mubr.f32.gmra.mrb[0].mxu0 %v4188
        %v4325 = vpop.f32.mrb[0].mxu0
        %v4326 = vadd.f32 %v1270, %v4325
        %v4327 = vpop.f32.mrb[0].mxu0
        %4328 = vmatprep.mubr.f32.mxu0 0.0
        %4329 = vmatmul.mubr.f32.gmra.mrb[0].mxu0 %v4191
        %v4330 = vpop.f32.mrb[0].mxu0
        %v4331 = vadd.f32 %v1270, %v4330
        %v4332 = vpop.f32.mrb[0].mxu0
        %4333 = vmatprep.mubr.f32.mxu0 0.0
        %4334 = vmatmul.mubr.f32.gmra.mrb[0].mxu0 %v4194
        %v4335 = vpop.f32.mrb[0].mxu0
        %v4336 = vadd.f32 %v1270, %v4335
        %v4337 = vpop.f32.mrb[0].mxu0
        %4338 = vmatprep.mubr.f32.mxu0 0.0
        %4339 = vmatmul.mubr.f32.gmra.mrb[0].mxu0 %v4197
        %v4340 = vpop.f32.mrb[0].mxu0
        %v4341 = vadd.f32 %v1270, %v4340
        %v4342 = vpop.f32.mrb[0].mxu0
        %4343 = vdwg.mxu0
        %v4344 = vxor.u32 %v4266, 2147483648
        %v4345 = vxor.u32 %v4271, 2147483648
        %v4346 = vxor.u32 %v4276, 2147483648
        %v4347 = vxor.u32 %v4281, 2147483648
        %v4348 = vxor.u32 %v4286, 2147483648
        %v4349 = vxor.u32 %v4291, 2147483648
        %v4350 = vxor.u32 %v4296, 2147483648
        %v4351 = vxor.u32 %v4301, 2147483648
        %v4352 = vxor.u32 %v4306, 2147483648
        %v4353 = vxor.u32 %v4311, 2147483648
        %v4354 = vxor.u32 %v4316, 2147483648
        %v4355 = vxor.u32 %v4321, 2147483648
        %v4356 = vxor.u32 %v4326, 2147483648
        %v4357 = vxor.u32 %v4331, 2147483648
        %v4358 = vxor.u32 %v4336, 2147483648
        %v4359 = vxor.u32 %v4341, 2147483648
        %v4360 = vmul.f32 %v4344, 1.442695
        %v4361 = vpow.pop %v4360
        %v4362 = vmul.f32 %v4345, 1.442695
        %v4363 = vpow.pop %v4362
        %v4364 = vmul.f32 %v4346, 1.442695
        %v4365 = vpow.pop %v4364
        %v4366 = vmul.f32 %v4347, 1.442695
        %v4367 = vpow.pop %v4366
        %v4368 = vmul.f32 %v4348, 1.442695
        %v4369 = vpow.pop %v4368
        %v4370 = vmul.f32 %v4349, 1.442695
        %v4371 = vpow.pop %v4370
        %v4372 = vmul.f32 %v4350, 1.442695
        %v4373 = vpow.pop %v4372
        %v4374 = vmul.f32 %v4351, 1.442695
        %v4375 = vpow.pop %v4374
        %v4376 = vmul.f32 %v4352, 1.442695
        %v4377 = vpow.pop %v4376
        %v4378 = vmul.f32 %v4353, 1.442695
        %v4379 = vpow.pop %v4378
        %v4380 = vmul.f32 %v4354, 1.442695
        %v4381 = vpow.pop %v4380
        %v4382 = vmul.f32 %v4355, 1.442695
        %v4383 = vpow.pop %v4382
        %v4384 = vmul.f32 %v4356, 1.442695
        %v4385 = vpow.pop %v4384
        %v4386 = vmul.f32 %v4357, 1.442695
        %v4387 = vpow.pop %v4386
        %v4388 = vmul.f32 %v4358, 1.442695
        %v4389 = vpow.pop %v4388
        %v4390 = vmul.f32 %v4359, 1.442695
        %v4391 = vpow.pop %v4390
        %v4392 = vadd.f32 %v4361, 1.0
        %v4393 = vadd.f32 %v4363, 1.0
        %v4394 = vadd.f32 %v4365, 1.0
        %v4395 = vadd.f32 %v4367, 1.0
        %v4396 = vadd.f32 %v4369, 1.0
        %v4397 = vadd.f32 %v4371, 1.0
        %v4398 = vadd.f32 %v4373, 1.0
        %v4399 = vadd.f32 %v4375, 1.0
        %v4400 = vadd.f32 %v4377, 1.0
        %v4401 = vadd.f32 %v4379, 1.0
        %v4402 = vadd.f32 %v4381, 1.0
        %v4403 = vadd.f32 %v4383, 1.0
        %v4404 = vadd.f32 %v4385, 1.0
        %v4405 = vadd.f32 %v4387, 1.0
        %v4406 = vadd.f32 %v4389, 1.0
        %v4407 = vadd.f32 %v4391, 1.0
        %v4408 = vrcp.pop %v4392
        %v4409 = vmul.f32 1.0, %v4408
        %v4410 = vrcp.pop %v4393
        %v4411 = vmul.f32 1.0, %v4410
        %v4412 = vrcp.pop %v4394
        %v4413 = vmul.f32 1.0, %v4412
        %v4414 = vrcp.pop %v4395
        %v4415 = vmul.f32 1.0, %v4414
        %v4416 = vrcp.pop %v4396
        %v4417 = vmul.f32 1.0, %v4416
        %v4418 = vrcp.pop %v4397
        %v4419 = vmul.f32 1.0, %v4418
        %v4420 = vrcp.pop %v4398
        %v4421 = vmul.f32 1.0, %v4420
        %v4422 = vrcp.pop %v4399
        %v4423 = vmul.f32 1.0, %v4422
        %v4424 = vrcp.pop %v4400
        %v4425 = vmul.f32 1.0, %v4424
        %v4426 = vrcp.pop %v4401
        %v4427 = vmul.f32 1.0, %v4426
        %v4428 = vrcp.pop %v4402
        %v4429 = vmul.f32 1.0, %v4428
        %v4430 = vrcp.pop %v4403
        %v4431 = vmul.f32 1.0, %v4430
        %v4432 = vrcp.pop %v4404
        %v4433 = vmul.f32 1.0, %v4432
        %v4434 = vrcp.pop %v4405
        %v4435 = vmul.f32 1.0, %v4434
        %v4436 = vrcp.pop %v4406
        %v4437 = vmul.f32 1.0, %v4436
        %v4438 = vrcp.pop %v4407
        %v4439 = vmul.f32 1.0, %v4438
        %v4440 = vmul.f32 %v3491, %v4409
        %v4441 = vmul.f32 %v3492, %v4411
        %v4442 = vmul.f32 %v3493, %v4413
        %v4443 = vmul.f32 %v3494, %v4415
        %v4444 = vmul.f32 %v3495, %v4417
        %v4445 = vmul.f32 %v3496, %v4419
        %v4446 = vmul.f32 %v3497, %v4421
        %v4447 = vmul.f32 %v3498, %v4423
        %v4448 = vmul.f32 %v3499, %v4425
        %v4449 = vmul.f32 %v3500, %v4427
        %v4450 = vmul.f32 %v3501, %v4429
        %v4451 = vmul.f32 %v3502, %v4431
        %v4452 = vmul.f32 %v3503, %v4433
        %v4453 = vmul.f32 %v3504, %v4435
        %v4454 = vmul.f32 %v3505, %v4437
        %v4455 = vmul.f32 %v3506, %v4439
        %4457 = vset.pattern.permute.xlu0 32
        %4458 = vperm.xlu0 %4457, %v4440
        %v4459 = vpop.permute.xlu0 %4458
        %4462 = vset.pattern.permute.xlu0 32
        %4463 = vperm.xlu0 %4462, %v4441
        %v4464 = vpop.permute.xlu0 %4463
        %4467 = vset.pattern.permute.xlu0 32
        %4468 = vperm.xlu0 %4467, %v4442
        %v4469 = vpop.permute.xlu0 %4468
        %4472 = vset.pattern.permute.xlu0 32
        %4473 = vperm.xlu0 %4472, %v4443
        %v4474 = vpop.permute.xlu0 %4473
        %4477 = vset.pattern.permute.xlu0 32
        %4478 = vperm.xlu0 %4477, %v4444
        %v4479 = vpop.permute.xlu0 %4478
        %4482 = vset.pattern.permute.xlu0 32
        %4483 = vperm.xlu0 %4482, %v4445
        %v4484 = vpop.permute.xlu0 %4483
        %4487 = vset.pattern.permute.xlu0 32
        %4488 = vperm.xlu0 %4487, %v4446
        %v4489 = vpop.permute.xlu0 %4488
        %4492 = vset.pattern.permute.xlu0 32
        %4493 = vperm.xlu0 %4492, %v4447
        %v4494 = vpop.permute.xlu0 %4493
        %4497 = vset.pattern.permute.xlu0 32
        %4498 = vperm.xlu0 %4497, %v4448
        %v4499 = vpop.permute.xlu0 %4498
        %4502 = vset.pattern.permute.xlu0 32
        %4503 = vperm.xlu0 %4502, %v4449
        %v4504 = vpop.permute.xlu0 %4503
        %4507 = vset.pattern.permute.xlu0 32
        %4508 = vperm.xlu0 %4507, %v4450
        %v4509 = vpop.permute.xlu0 %4508
        %4512 = vset.pattern.permute.xlu0 32
        %4513 = vperm.xlu0 %4512, %v4451
        %v4514 = vpop.permute.xlu0 %4513
        %4517 = vset.pattern.permute.xlu0 32
        %4518 = vperm.xlu0 %4517, %v4452
        %v4519 = vpop.permute.xlu0 %4518
        %4522 = vset.pattern.permute.xlu0 32
        %4523 = vperm.xlu0 %4522, %v4453
        %v4524 = vpop.permute.xlu0 %4523
        %4527 = vset.pattern.permute.xlu0 32
        %4528 = vperm.xlu0 %4527, %v4454
        %v4529 = vpop.permute.xlu0 %4528
        %4532 = vset.pattern.permute.xlu0 32
        %4533 = vperm.xlu0 %4532, %v4455
        %v4534 = vpop.permute.xlu0 %4533
        %4536 = vst [vmem:[%s617] sm:$0xff] %v4459
        %4537 = vst [vmem:[%s617 + $0x8] sm:$0xff] %v4464
        %4538 = vst [vmem:[%s617 + $0x10] sm:$0xff] %v4469
        %4539 = vst [vmem:[%s617 + $0x18] sm:$0xff] %v4474
        %4540 = vst [vmem:[%s617 + $0x20] sm:$0xff] %v4479
        %4541 = vst [vmem:[%s617 + $0x28] sm:$0xff] %v4484
        %4542 = vst [vmem:[%s617 + $0x30] sm:$0xff] %v4489
        %4543 = vst [vmem:[%s617 + $0x38] sm:$0xff] %v4494
        %4544 = vst [vmem:[%s617 + $0x40] sm:$0xff] %v4499
        %4545 = vst [vmem:[%s617 + $0x48] sm:$0xff] %v4504
        %4546 = vst [vmem:[%s617 + $0x50] sm:$0xff] %v4509
        %4547 = vst [vmem:[%s617 + $0x58] sm:$0xff] %v4514
        %4548 = vst [vmem:[%s617 + $0x60] sm:$0xff] %v4519
        %4549 = vst [vmem:[%s617 + $0x68] sm:$0xff] %v4524
        %4550 = vst [vmem:[%s617 + $0x70] sm:$0xff] %v4529
        %4551 = vst [vmem:[%s617 + $0x78] sm:$0xff] %v4534
        %s4552 = sand.u32 %s225, 1
        %s4553 = scalar_lea.sflag [#allocation4], %s4552
        %s4554 = sand.u32 %s225, 1
        %s4555 = smul.addr %s4554, 128
        %s4556 = scalar_lea.vmem [#allocation3], %s4555
        // Predicated region
        $region95: #{tpu_custom_call.1} parent=89 // pred_check
          %p4557 = pneg %p235
        $region96: #{tpu_custom_call.1} parent=89 // pred_check_branch
          %4559 = sbr.rel (%p4557) target = $region98
        $region97: #{tpu_custom_call.1} parent=89 // pred_region
          %s4560 = smul.u32 16, %s23
          %s4562 = ssub.s32 2048, 2048
          %4563 = vsyncadd %s4553, %s4562
          %s4564 = smul.addr %s4560, 128
          %s4565 = scalar_lea.hbm %s9, %s4564
          %s4566 = sshll.u32 %s4556, 4
          %s4567 = int_to_ptr.vmem [resolvable:$true] %s4566
          %4572 = dma.vmem_to_hbm [thread:$0]  %s4567, 2048, %s4565, %s4553, 128, 128, 8
        $region98: #{tpu_custom_call.1} parent=89 // pred_fallthru
          _
      $region90: #{tpu_custom_call.1} parent=5 // pred_fallthru
        _
      %p4573 = scmp.le.s32.totalorder 2, %s18
      // Predicated region
      $region99: #{tpu_custom_call.1} parent=5 // pred_check
        %p4574 = pneg %p4573
      $region100: #{tpu_custom_call.1} parent=5 // pred_check_branch
        %4576 = sbr.rel (%p4574) target = $region102
      $region101: #{tpu_custom_call.1} parent=5 // pred_region
        %s4577 = ssub.s32 %s18, 2
        // Predicated region
        $region103: #{tpu_custom_call.1} parent=101 // pred_check
          %p4578 = pneg %p241
        $region104: #{tpu_custom_call.1} parent=101 // pred_check_branch
          %4580 = sbr.rel (%p4578) target = $region106
        $region105: #{tpu_custom_call.1} parent=101 // pred_region
          %s4581 = sand.u32 %s226, 1
          %s4582 = scalar_lea.sflag [#allocation4], %s4581
          %s4583 = sand.u32 %s226, 1
          %s4584 = smul.addr %s4583, 128
          %s4585 = scalar_lea.vmem [#allocation3], %s4584
          %4586 = dma.done %s4582, 2048
        $region106: #{tpu_custom_call.1} parent=101 // pred_fallthru
          _
      $region102: #{tpu_custom_call.1} parent=5 // pred_fallthru
        _
    $region6: #{tpu_custom_call.1} parent=1 // loop_footer
      %s22 = sadd.s32 1, %s18
    $region7: #{tpu_custom_call.1} parent=1 // loop_footer_branch
      %17 = sbr.rel target = $region3
    $region8: #{tpu_custom_call.1} parent=1 // loop_exit
      _
    %4587 = vsyncpa [#allocation4], 1
    %s4588 = scalar_lea.sflag [#allocation4], 1
    %4589 = vsyncpa %s4588, 1

</llo_original>
